<compile_context>
chip_gen: v7x
topology: tpu7x:2x2x1
jax: 0.10.0
libtpu: 0.0.40
codegen_flags: <defaults>
</compile_context>

<pallas_src>
import jax
import jax.numpy as jnp
from jax.experimental import pallas as pl
from jax.experimental.pallas import tpu as pltpu

# ------------------------- model config (small, synthetic) -------------------
B, S, H = 2, 8, 32          # batch, seq-len, hidden
NUM_HEADS = 2
DH = H // NUM_HEADS
FFN = 64
VOCAB = 128
NUM_LAYERS = 2
LN_EPS = 1e-12
BS = B * S


# ------------------------------ pallas helpers -------------------------------
def _full_spec(shape):
    nd = len(shape)
    return pl.BlockSpec(shape, lambda i, _nd=nd: (0,) * _nd)


def _layernorm(x, g, b):
    mu = jnp.mean(x, axis=-1, keepdims=True)
    var = jnp.mean((x - mu) ** 2, axis=-1, keepdims=True)
    return (x - mu) * jax.lax.rsqrt(var + LN_EPS) * g + b


# ------------------------------ fused kernel ----------------------------------
def gan_fused_kernel(ids_ref, labels_ref, emb_ref,
                     wqkv_ref, bqkv_ref, wo_ref, bhx_ref,
                     w1_ref, b1_ref, w2_ref,
                     misc_ref, wp_ref, wc_ref, bc_ref,
                     logits_ref, scalars_ref):
    # Small packed bias/LN tables: load once, slice values statically.
    misc = misc_ref[...]        # (3, H)      : emb_ln_g, emb_ln_b, pooler bias
    bqkv = bqkv_ref[...]        # (L*3*NH,DH) : per-head q/k/v biases
    bhx = bhx_ref[...]          # (L*6, H)    : bo, ln1g, ln1b, b2, ln2g, ln2b
    b1a = b1_ref[...]           # (L, FFN)    : FFN-in bias

    # Embedding LayerNorm on flattened (B*S, H) activations.
    x = _layernorm(emb_ref[...], misc[0:1, :], misc[1:2, :])        # (BS, H)
    scale = 1.0 / jnp.sqrt(jnp.float32(DH))

    for l in range(NUM_LAYERS):                                     # static loop
        attn = jnp.zeros((BS, H), jnp.float32)
        for h in range(NUM_HEADS):                                  # static loop
            def proj(p):                                            # p: 0=q 1=k 2=v
                r = (l * 3 + p) * NUM_HEADS + h
                return (jnp.dot(x, wqkv_ref[r],
                                preferred_element_type=jnp.float32)
                        + bqkv[r:r + 1, :])                         # (BS, DH)
            q = proj(0).reshape(B, S, DH)
            k = proj(1).reshape(B, S, DH)
            v = proj(2).reshape(B, S, DH)

            sc = jnp.einsum('bqd,bkd->bqk', q, k,
                            preferred_element_type=jnp.float32) * scale
            sc = sc - jnp.max(sc, axis=-1, keepdims=True)
            p_ = jnp.exp(sc)
            p_ = p_ * pl.reciprocal(jnp.sum(p_, axis=-1, keepdims=True),
                                    approx=True)
            ctx = jnp.einsum('bqk,bkd->bqd', p_, v,
                             preferred_element_type=jnp.float32)    # (B, S, DH)
            # per-head output projection, accumulated (== concat + single matmul)
            attn = attn + jnp.dot(ctx.reshape(BS, DH),
                                  wo_ref[l * NUM_HEADS + h],
                                  preferred_element_type=jnp.float32)

        r6 = l * 6
        attn = attn + bhx[r6 + 0:r6 + 1, :]
        x1 = _layernorm(x + attn, bhx[r6 + 1:r6 + 2, :], bhx[r6 + 2:r6 + 3, :])

        h1 = jnp.dot(x1, w1_ref[l],
                     preferred_element_type=jnp.float32) + b1a[l:l + 1, :]
        h1 = jax.nn.gelu(h1, approximate=True)      # tanh-GELU (EUP path)
        h2 = jnp.dot(h1, w2_ref[l],
                     preferred_element_type=jnp.float32) + bhx[r6 + 3:r6 + 4, :]
        x = _layernorm(x1 + h2, bhx[r6 + 4:r6 + 5, :], bhx[r6 + 5:r6 + 6, :])

    # Pooler ([CLS] token) + 1-logit classifier.
    cls = x.reshape(B, S, H)[:, 0, :]                               # (B, H)
    pooled = jnp.tanh(jnp.dot(cls, wp_ref[...],
                              preferred_element_type=jnp.float32) + misc[2:3, :])
    logits = jnp.dot(pooled, wc_ref[...],
                     preferred_element_type=jnp.float32) + bc_ref[...]   # (B, 1)
    logits_ref[...] = logits

    labels = labels_ref[...]                                        # (B, 1)

    def bce_mean(z, y):
        # numerically-stable BCEWithLogitsLoss, reduction='mean'
        per = jnp.maximum(z, 0.0) - z * y + jnp.log1p(jnp.exp(-jnp.abs(z)))
        return jnp.mean(per, axis=(0, 1), keepdims=True)            # (1, 1)

    # Discriminator loss: BCE(logits, labels)
    disc_loss = bce_mean(logits, labels)

    # Generator loss: BCE((logits - ids.sum(-1,keepdim)).detach() + ids.sum(...),
    #                     labels)  -- computed as written (forward value).
    s = jnp.sum(ids_ref[...].astype(jnp.float32), axis=-1, keepdims=True)  # (B,1)
    gen_loss = bce_mean((logits - s) + s, labels)

    lmean = jnp.mean(logits, axis=(0, 1), keepdims=True)            # (1, 1)

    # Pack the three scalar results into one (1, 3) output row.
    col = jax.lax.broadcasted_iota(jnp.int32, (1, 3), 1)
    scalars_ref[...] = jnp.where(col == 0, disc_loss,
                                 jnp.where(col == 1, gen_loss, lmean))


# ------------------------------ parameter init --------------------------------
def init_params(key):
    keys = jax.random.split(key, 4 + NUM_LAYERS * 8 + 8)
    it = iter(keys)

    def nrm(shape):
        return (0.02 * jax.random.normal(next(it), shape)).astype(jnp.float32)

    params = {
        'word_emb': nrm((VOCAB, H)),
        'pos_emb': nrm((S, H)),
        'emb_ln_g': jnp.ones((1, H), jnp.float32),
        'emb_ln_b': jnp.zeros((1, H), jnp.float32),
        'layers': [],
        'wp': nrm((H, H)), 'bp': jnp.zeros((1, H), jnp.float32),
        'wc': nrm((H, 1)), 'bc': jnp.zeros((1, 1), jnp.float32),
    }
    for _ in range(NUM_LAYERS):
        params['layers'].append({
            'wq': nrm((H, H)), 'bq': jnp.zeros((1, H), jnp.float32),
            'wk': nrm((H, H)), 'bk': jnp.zeros((1, H), jnp.float32),
            'wv': nrm((H, H)), 'bv': jnp.zeros((1, H), jnp.float32),
            'wo': nrm((H, H)), 'bo': jnp.zeros((1, H), jnp.float32),
            'ln1g': jnp.ones((1, H), jnp.float32),
            'ln1b': jnp.zeros((1, H), jnp.float32),
            'w1': nrm((H, FFN)), 'b1': jnp.zeros((1, FFN), jnp.float32),
            'w2': nrm((FFN, H)), 'b2': jnp.zeros((1, H), jnp.float32),
            'ln2g': jnp.ones((1, H), jnp.float32),
            'ln2b': jnp.zeros((1, H), jnp.float32),
        })
    return params


def pack_params(p):
    """Pack per-layer / per-head weights into a few stacked, kernel-friendly arrays."""
    wqkv_rows, bqkv_rows, wo_rows, bhx_rows = [], [], [], []
    w1_l, b1_l, w2_l = [], [], []
    for L in p['layers']:
        for name_w, name_b in (('wq', 'bq'), ('wk', 'bk'), ('wv', 'bv')):
            # (H, H) -> per-head (NH, H, DH); head h == output cols h*DH:(h+1)*DH
            w = L[name_w].reshape(H, NUM_HEADS, DH).transpose(1, 0, 2)
            b = L[name_b].reshape(NUM_HEADS, DH)
            for h in range(NUM_HEADS):
                wqkv_rows.append(w[h])
                bqkv_rows.append(b[h])
        wo = L['wo'].reshape(NUM_HEADS, DH, H)       # head h == input rows h*DH:
        for h in range(NUM_HEADS):
            wo_rows.append(wo[h])
        bhx_rows += [L['bo'][0], L['ln1g'][0], L['ln1b'][0],
                     L['b2'][0], L['ln2g'][0], L['ln2b'][0]]
        w1_l.append(L['w1'])
        b1_l.append(L['b1'][0])
        w2_l.append(L['w2'])
    return {
        'word_emb': p['word_emb'], 'pos_emb': p['pos_emb'],
        'wqkv': jnp.stack(wqkv_rows),   # (L*3*NH, H, DH)
        'bqkv': jnp.stack(bqkv_rows),   # (L*3*NH, DH)
        'wo':   jnp.stack(wo_rows),     # (L*NH, DH, H)
        'bhx':  jnp.stack(bhx_rows),    # (L*6, H)
        'w1':   jnp.stack(w1_l),        # (L, H, FFN)
        'b1':   jnp.stack(b1_l),        # (L, FFN)
        'w2':   jnp.stack(w2_l),        # (L, FFN, H)
        'misc': jnp.stack([p['emb_ln_g'][0], p['emb_ln_b'][0], p['bp'][0]]),  # (3,H)
        'wp': p['wp'], 'wc': p['wc'], 'bc': p['bc'],
    }


# --------------------------------- forward ------------------------------------
def gan_forward(ids, labels, pk):
    """Returns (disc_logits (B,1), disc_loss (1,1), gen_loss (1,1), logits_mean (1,1))."""
    # glue: embedding gather (word + position) stays in plain JAX
    emb = (pk['word_emb'][ids] + pk['pos_emb'][None, :, :]).astype(jnp.float32)
    emb2d = emb.reshape(BS, H)

    inputs = [ids, labels, emb2d,
              pk['wqkv'], pk['bqkv'], pk['wo'], pk['bhx'],
              pk['w1'], pk['b1'], pk['w2'],
              pk['misc'], pk['wp'], pk['wc'], pk['bc']]

    logits, scalars = pl.pallas_call(
        gan_fused_kernel,
        grid=(1,),
        in_specs=[_full_spec(x.shape) for x in inputs],
        out_specs=(_full_spec((B, 1)), _full_spec((1, 3))),
        out_shape=(jax.ShapeDtypeStruct((B, 1), jnp.float32),
                   jax.ShapeDtypeStruct((1, 3), jnp.float32)),
        compiler_params=pltpu.CompilerParams(
            dimension_semantics=("arbitrary",)),
    )(*inputs)

    disc_loss = scalars[:, 0:1]
    gen_loss = scalars[:, 1:2]
    logits_mean = scalars[:, 2:3]
    return logits, disc_loss, gen_loss, logits_mean


# TODO(synk): iterative Gibbs-style sentence generation (__training_generation /
# __evaluation_generation), tokenizer utilities, optimizers and .backward()
# training steps have no forward-pass Pallas equivalent and are not implemented.

if __name__ == "__main__":
    key = jax.random.PRNGKey(0)
    pkey, ikey, lkey = jax.random.split(key, 3)
    params = init_params(pkey)
    packed = pack_params(params)

    b_input_ids = jax.random.randint(ikey, (B, S), 0, VOCAB, dtype=jnp.int32)
    b_labels = jax.random.bernoulli(lkey, 0.5, (B, 1)).astype(jnp.float32)

    fwd = jax.jit(lambda i, l: gan_forward(i, l, packed))
    outs = fwd(b_input_ids, b_labels)
    jax.block_until_ready(outs)
    print("KERNEL_OK")
</pallas_src>

<mosaic_0001>
module attributes {stable_mosaic.version = 11 : i64} {
  func.func @gan_fused_kernel(%arg0: i32, %arg1: memref<2x8xi32, #tpu.memory_space<vmem>>, %arg2: memref<2x1xf32, #tpu.memory_space<vmem>>, %arg3: memref<16x32xf32, #tpu.memory_space<vmem>>, %arg4: memref<12x32x16xf32, #tpu.memory_space<vmem>>, %arg5: memref<12x16xf32, #tpu.memory_space<vmem>>, %arg6: memref<4x16x32xf32, #tpu.memory_space<vmem>>, %arg7: memref<12x32xf32, #tpu.memory_space<vmem>>, %arg8: memref<2x32x64xf32, #tpu.memory_space<vmem>>, %arg9: memref<2x64xf32, #tpu.memory_space<vmem>>, %arg10: memref<2x64x32xf32, #tpu.memory_space<vmem>>, %arg11: memref<3x32xf32, #tpu.memory_space<vmem>>, %arg12: memref<32x32xf32, #tpu.memory_space<vmem>>, %arg13: memref<32x1xf32, #tpu.memory_space<vmem>>, %arg14: memref<1x1xf32, #tpu.memory_space<vmem>>, %arg15: memref<2x1xf32, #tpu.memory_space<vmem>>, %arg16: memref<1x3xf32, #tpu.memory_space<vmem>>) attributes {dimension_semantics = [#tpu.dimension_semantics<arbitrary>], iteration_bounds = array<i64: 1>, scalar_prefetch = 0 : i64, scratch_operands = 0 : i64, tpu.core_type = #tpu.core_type<tc>, window_params = [{pipeline_mode = #tpu.pipeline_mode<synchronous>, transform_indices = @transform_0, window_bounds = array<i64: 2, 8>}, {pipeline_mode = #tpu.pipeline_mode<synchronous>, transform_indices = @transform_1, window_bounds = array<i64: 2, 1>}, {pipeline_mode = #tpu.pipeline_mode<synchronous>, transform_indices = @transform_2, window_bounds = array<i64: 16, 32>}, {pipeline_mode = #tpu.pipeline_mode<synchronous>, transform_indices = @transform_3, window_bounds = array<i64: 12, 32, 16>}, {pipeline_mode = #tpu.pipeline_mode<synchronous>, transform_indices = @transform_4, window_bounds = array<i64: 12, 16>}, {pipeline_mode = #tpu.pipeline_mode<synchronous>, transform_indices = @transform_5, window_bounds = array<i64: 4, 16, 32>}, {pipeline_mode = #tpu.pipeline_mode<synchronous>, transform_indices = @transform_6, window_bounds = array<i64: 12, 32>}, {pipeline_mode = #tpu.pipeline_mode<synchronous>, transform_indices = @transform_7, window_bounds = array<i64: 2, 32, 64>}, {pipeline_mode = #tpu.pipeline_mode<synchronous>, transform_indices = @transform_8, window_bounds = array<i64: 2, 64>}, {pipeline_mode = #tpu.pipeline_mode<synchronous>, transform_indices = @transform_9, window_bounds = array<i64: 2, 64, 32>}, {pipeline_mode = #tpu.pipeline_mode<synchronous>, transform_indices = @transform_10, window_bounds = array<i64: 3, 32>}, {pipeline_mode = #tpu.pipeline_mode<synchronous>, transform_indices = @transform_11, window_bounds = array<i64: 32, 32>}, {pipeline_mode = #tpu.pipeline_mode<synchronous>, transform_indices = @transform_12, window_bounds = array<i64: 32, 1>}, {pipeline_mode = #tpu.pipeline_mode<synchronous>, transform_indices = @transform_13, window_bounds = array<i64: 1, 1>}, {pipeline_mode = #tpu.pipeline_mode<synchronous>, transform_indices = @transform_14, window_bounds = array<i64: 2, 1>}, {pipeline_mode = #tpu.pipeline_mode<synchronous>, transform_indices = @transform_15, window_bounds = array<i64: 1, 3>}]} {
    %c0 = arith.constant 0 : index
    %c0_0 = arith.constant 0 : index
    %0 = vector.load %arg11[%c0, %c0_0] : memref<3x32xf32, #tpu.memory_space<vmem>>, vector<3x32xf32>
    %c0_1 = arith.constant 0 : index
    %c0_2 = arith.constant 0 : index
    %1 = vector.load %arg5[%c0_1, %c0_2] : memref<12x16xf32, #tpu.memory_space<vmem>>, vector<12x16xf32>
    %c0_3 = arith.constant 0 : index
    %c0_4 = arith.constant 0 : index
    %2 = vector.load %arg7[%c0_3, %c0_4] : memref<12x32xf32, #tpu.memory_space<vmem>>, vector<12x32xf32>
    %c0_5 = arith.constant 0 : index
    %c0_6 = arith.constant 0 : index
    %3 = vector.load %arg9[%c0_5, %c0_6] : memref<2x64xf32, #tpu.memory_space<vmem>>, vector<2x64xf32>
    %c0_7 = arith.constant 0 : index
    %c0_8 = arith.constant 0 : index
    %4 = vector.load %arg3[%c0_7, %c0_8] : memref<16x32xf32, #tpu.memory_space<vmem>>, vector<16x32xf32>
    %5 = vector.extract_strided_slice %0 {offsets = [0, 0], sizes = [1, 32], strides = [1, 1]} : vector<3x32xf32> to vector<1x32xf32>
    %6 = vector.extract_strided_slice %0 {offsets = [1, 0], sizes = [1, 32], strides = [1, 1]} : vector<3x32xf32> to vector<1x32xf32>
    %cst = arith.constant dense<0.000000e+00> : vector<16xf32>
    %7 = vector.multi_reduction <add>, %4, %cst [1] : vector<16x32xf32> to vector<16xf32>
    %8 = vector.shape_cast %7 : vector<16xf32> to vector<16x1xf32>
    %cst_9 = arith.constant 3.200000e+01 : f32
    %9 = vector.broadcast %cst_9 : f32 to vector<16x1xf32>
    %10 = arith.divf %8, %9 : vector<16x1xf32>
    %11 = vector.broadcast %10 : vector<16x1xf32> to vector<16x32xf32>
    %12 = arith.subf %4, %11 : vector<16x32xf32>
    %13 = arith.mulf %12, %12 : vector<16x32xf32>
    %cst_10 = arith.constant dense<0.000000e+00> : vector<16xf32>
    %14 = vector.multi_reduction <add>, %13, %cst_10 [1] : vector<16x32xf32> to vector<16xf32>
    %15 = vector.shape_cast %14 : vector<16xf32> to vector<16x1xf32>
    %cst_11 = arith.constant 3.200000e+01 : f32
    %16 = vector.broadcast %cst_11 : f32 to vector<16x1xf32>
    %17 = arith.divf %15, %16 : vector<16x1xf32>
    %18 = vector.broadcast %10 : vector<16x1xf32> to vector<16x32xf32>
    %19 = arith.subf %4, %18 : vector<16x32xf32>
    %cst_12 = arith.constant 9.99999996E-13 : f32
    %20 = vector.broadcast %cst_12 : f32 to vector<16x1xf32>
    %21 = arith.addf %17, %20 : vector<16x1xf32>
    %22 = math.rsqrt %21 : vector<16x1xf32>
    %23 = vector.broadcast %22 : vector<16x1xf32> to vector<16x32xf32>
    %24 = arith.mulf %19, %23 : vector<16x32xf32>
    %25 = vector.broadcast %5 : vector<1x32xf32> to vector<16x32xf32>
    %26 = arith.mulf %24, %25 : vector<16x32xf32>
    %27 = vector.broadcast %6 : vector<1x32xf32> to vector<16x32xf32>
    %28 = arith.addf %26, %27 : vector<16x32xf32>
    %cst_13 = arith.constant 1.600000e+01 : f32
    %29 = math.sqrt %cst_13 : f32
    %cst_14 = arith.constant 1.000000e+00 : f32
    %30 = arith.divf %cst_14, %29 : f32
    %cst_15 = arith.constant 0.000000e+00 : f32
    %31 = vector.broadcast %cst_15 : f32 to vector<16x32xf32>
    %c0_16 = arith.constant 0 : index
    %c0_17 = arith.constant 0 : index
    %c0_18 = arith.constant 0 : index
    %32 = vector.load %arg4[%c0_16, %c0_17, %c0_18] : memref<12x32x16xf32, #tpu.memory_space<vmem>>, vector<1x32x16xf32>
    %33 = vector.shape_cast %32 : vector<1x32x16xf32> to vector<32x16xf32>
    %cst_19 = arith.constant dense<0.000000e+00> : vector<16x16xf32>
    %34 = tpu.matmul %28, %33, %cst_19 {dimension_numbers = #tpu.dot_dimension_numbers<[1], [0], [0], [1], [0, 0, 1, 1], [], []>} : vector<16x32xf32>, vector<32x16xf32>, vector<16x16xf32> -> vector<16x16xf32>
    %35 = vector.extract_strided_slice %1 {offsets = [0, 0], sizes = [1, 16], strides = [1, 1]} : vector<12x16xf32> to vector<1x16xf32>
    %36 = vector.broadcast %35 : vector<1x16xf32> to vector<16x16xf32>
    %37 = arith.addf %34, %36 : vector<16x16xf32>
    %38 = vector.shape_cast %37 : vector<16x16xf32> to vector<2x8x16xf32>
    %c2 = arith.constant 2 : index
    %c0_20 = arith.constant 0 : index
    %c0_21 = arith.constant 0 : index
    %39 = vector.load %arg4[%c2, %c0_20, %c0_21] : memref<12x32x16xf32, #tpu.memory_space<vmem>>, vector<1x32x16xf32>
    %40 = vector.shape_cast %39 : vector<1x32x16xf32> to vector<32x16xf32>
    %cst_22 = arith.constant dense<0.000000e+00> : vector<16x16xf32>
    %41 = tpu.matmul %28, %40, %cst_22 {dimension_numbers = #tpu.dot_dimension_numbers<[1], [0], [0], [1], [0, 0, 1, 1], [], []>} : vector<16x32xf32>, vector<32x16xf32>, vector<16x16xf32> -> vector<16x16xf32>
    %42 = vector.extract_strided_slice %1 {offsets = [2, 0], sizes = [1, 16], strides = [1, 1]} : vector<12x16xf32> to vector<1x16xf32>
    %43 = vector.broadcast %42 : vector<1x16xf32> to vector<16x16xf32>
    %44 = arith.addf %41, %43 : vector<16x16xf32>
    %45 = vector.shape_cast %44 : vector<16x16xf32> to vector<2x8x16xf32>
    %c4 = arith.constant 4 : index
    %c0_23 = arith.constant 0 : index
    %c0_24 = arith.constant 0 : index
    %46 = vector.load %arg4[%c4, %c0_23, %c0_24] : memref<12x32x16xf32, #tpu.memory_space<vmem>>, vector<1x32x16xf32>
    %47 = vector.shape_cast %46 : vector<1x32x16xf32> to vector<32x16xf32>
    %cst_25 = arith.constant dense<0.000000e+00> : vector<16x16xf32>
    %48 = tpu.matmul %28, %47, %cst_25 {dimension_numbers = #tpu.dot_dimension_numbers<[1], [0], [0], [1], [0, 0, 1, 1], [], []>} : vector<16x32xf32>, vector<32x16xf32>, vector<16x16xf32> -> vector<16x16xf32>
    %49 = vector.extract_strided_slice %1 {offsets = [4, 0], sizes = [1, 16], strides = [1, 1]} : vector<12x16xf32> to vector<1x16xf32>
    %50 = vector.broadcast %49 : vector<1x16xf32> to vector<16x16xf32>
    %51 = arith.addf %48, %50 : vector<16x16xf32>
    %52 = vector.shape_cast %51 : vector<16x16xf32> to vector<2x8x16xf32>
    "tpu.trace_start"() <{level = 10 : i32, message = "bqd,bkd->bqk"}> : () -> ()
    %cst_26 = arith.constant dense<0.000000e+00> : vector<2x8x8xf32>
    %53 = tpu.matmul %38, %45, %cst_26 {dimension_numbers = #tpu.dot_dimension_numbers<[2], [2], [1], [1], [0, 0, 0, 1, 1, 1], [0], [0]>} : vector<2x8x16xf32>, vector<2x8x16xf32>, vector<2x8x8xf32> -> vector<2x8x8xf32>
    "tpu.trace_stop"() : () -> ()
    %54 = vector.broadcast %30 : f32 to vector<2x8x8xf32>
    %55 = arith.mulf %53, %54 : vector<2x8x8xf32>
    %cst_27 = arith.constant dense<0xFF800000> : vector<2x8xf32>
    %56 = vector.multi_reduction <maximumf>, %55, %cst_27 [2] : vector<2x8x8xf32> to vector<2x8xf32>
    %57 = vector.shape_cast %56 : vector<2x8xf32> to vector<2x8x1xf32>
    %58 = vector.broadcast %57 : vector<2x8x1xf32> to vector<2x8x8xf32>
    %59 = arith.subf %55, %58 : vector<2x8x8xf32>
    %60 = math.exp %59 : vector<2x8x8xf32>
    %cst_28 = arith.constant dense<0.000000e+00> : vector<2x8xf32>
    %61 = vector.multi_reduction <add>, %60, %cst_28 [2] : vector<2x8x8xf32> to vector<2x8xf32>
    %62 = vector.shape_cast %61 : vector<2x8xf32> to vector<2x8x1xf32>
    %63 = tpu.reciprocal %62 {approx = true} : vector<2x8x1xf32> -> vector<2x8x1xf32>
    %64 = vector.broadcast %63 : vector<2x8x1xf32> to vector<2x8x8xf32>
    %65 = arith.mulf %60, %64 : vector<2x8x8xf32>
    "tpu.trace_start"() <{level = 10 : i32, message = "bqk,bkd->bqd"}> : () -> ()
    %cst_29 = arith.constant dense<0.000000e+00> : vector<2x8x16xf32>
    %66 = tpu.matmul %65, %52, %cst_29 {dimension_numbers = #tpu.dot_dimension_numbers<[2], [1], [1], [2], [0, 0, 0, 1, 1, 2], [0], [0]>} : vector<2x8x8xf32>, vector<2x8x16xf32>, vector<2x8x16xf32> -> vector<2x8x16xf32>
    "tpu.trace_stop"() : () -> ()
    %67 = vector.shape_cast %66 : vector<2x8x16xf32> to vector<16x16xf32>
    %c0_30 = arith.constant 0 : index
    %c0_31 = arith.constant 0 : index
    %c0_32 = arith.constant 0 : index
    %68 = vector.load %arg6[%c0_30, %c0_31, %c0_32] : memref<4x16x32xf32, #tpu.memory_space<vmem>>, vector<1x16x32xf32>
    %69 = vector.shape_cast %68 : vector<1x16x32xf32> to vector<16x32xf32>
    %cst_33 = arith.constant dense<0.000000e+00> : vector<16x32xf32>
    %70 = tpu.matmul %67, %69, %cst_33 {dimension_numbers = #tpu.dot_dimension_numbers<[1], [0], [0], [1], [0, 0, 1, 1], [], []>} : vector<16x16xf32>, vector<16x32xf32>, vector<16x32xf32> -> vector<16x32xf32>
    %71 = arith.addf %31, %70 : vector<16x32xf32>
    %c1 = arith.constant 1 : index
    %c0_34 = arith.constant 0 : index
    %c0_35 = arith.constant 0 : index
    %72 = vector.load %arg4[%c1, %c0_34, %c0_35] : memref<12x32x16xf32, #tpu.memory_space<vmem>>, vector<1x32x16xf32>
    %73 = vector.shape_cast %72 : vector<1x32x16xf32> to vector<32x16xf32>
    %cst_36 = arith.constant dense<0.000000e+00> : vector<16x16xf32>
    %74 = tpu.matmul %28, %73, %cst_36 {dimension_numbers = #tpu.dot_dimension_numbers<[1], [0], [0], [1], [0, 0, 1, 1], [], []>} : vector<16x32xf32>, vector<32x16xf32>, vector<16x16xf32> -> vector<16x16xf32>
    %75 = vector.extract_strided_slice %1 {offsets = [1, 0], sizes = [1, 16], strides = [1, 1]} : vector<12x16xf32> to vector<1x16xf32>
    %76 = vector.broadcast %75 : vector<1x16xf32> to vector<16x16xf32>
    %77 = arith.addf %74, %76 : vector<16x16xf32>
    %78 = vector.shape_cast %77 : vector<16x16xf32> to vector<2x8x16xf32>
    %c3 = arith.constant 3 : index
    %c0_37 = arith.constant 0 : index
    %c0_38 = arith.constant 0 : index
    %79 = vector.load %arg4[%c3, %c0_37, %c0_38] : memref<12x32x16xf32, #tpu.memory_space<vmem>>, vector<1x32x16xf32>
    %80 = vector.shape_cast %79 : vector<1x32x16xf32> to vector<32x16xf32>
    %cst_39 = arith.constant dense<0.000000e+00> : vector<16x16xf32>
    %81 = tpu.matmul %28, %80, %cst_39 {dimension_numbers = #tpu.dot_dimension_numbers<[1], [0], [0], [1], [0, 0, 1, 1], [], []>} : vector<16x32xf32>, vector<32x16xf32>, vector<16x16xf32> -> vector<16x16xf32>
    %82 = vector.extract_strided_slice %1 {offsets = [3, 0], sizes = [1, 16], strides = [1, 1]} : vector<12x16xf32> to vector<1x16xf32>
    %83 = vector.broadcast %82 : vector<1x16xf32> to vector<16x16xf32>
    %84 = arith.addf %81, %83 : vector<16x16xf32>
    %85 = vector.shape_cast %84 : vector<16x16xf32> to vector<2x8x16xf32>
    %c5 = arith.constant 5 : index
    %c0_40 = arith.constant 0 : index
    %c0_41 = arith.constant 0 : index
    %86 = vector.load %arg4[%c5, %c0_40, %c0_41] : memref<12x32x16xf32, #tpu.memory_space<vmem>>, vector<1x32x16xf32>
    %87 = vector.shape_cast %86 : vector<1x32x16xf32> to vector<32x16xf32>
    %cst_42 = arith.constant dense<0.000000e+00> : vector<16x16xf32>
    %88 = tpu.matmul %28, %87, %cst_42 {dimension_numbers = #tpu.dot_dimension_numbers<[1], [0], [0], [1], [0, 0, 1, 1], [], []>} : vector<16x32xf32>, vector<32x16xf32>, vector<16x16xf32> -> vector<16x16xf32>
    %89 = vector.extract_strided_slice %1 {offsets = [5, 0], sizes = [1, 16], strides = [1, 1]} : vector<12x16xf32> to vector<1x16xf32>
    %90 = vector.broadcast %89 : vector<1x16xf32> to vector<16x16xf32>
    %91 = arith.addf %88, %90 : vector<16x16xf32>
    %92 = vector.shape_cast %91 : vector<16x16xf32> to vector<2x8x16xf32>
    "tpu.trace_start"() <{level = 10 : i32, message = "bqd,bkd->bqk"}> : () -> ()
    %cst_43 = arith.constant dense<0.000000e+00> : vector<2x8x8xf32>
    %93 = tpu.matmul %78, %85, %cst_43 {dimension_numbers = #tpu.dot_dimension_numbers<[2], [2], [1], [1], [0, 0, 0, 1, 1, 1], [0], [0]>} : vector<2x8x16xf32>, vector<2x8x16xf32>, vector<2x8x8xf32> -> vector<2x8x8xf32>
    "tpu.trace_stop"() : () -> ()
    %94 = vector.broadcast %30 : f32 to vector<2x8x8xf32>
    %95 = arith.mulf %93, %94 : vector<2x8x8xf32>
    %cst_44 = arith.constant dense<0xFF800000> : vector<2x8xf32>
    %96 = vector.multi_reduction <maximumf>, %95, %cst_44 [2] : vector<2x8x8xf32> to vector<2x8xf32>
    %97 = vector.shape_cast %96 : vector<2x8xf32> to vector<2x8x1xf32>
    %98 = vector.broadcast %97 : vector<2x8x1xf32> to vector<2x8x8xf32>
    %99 = arith.subf %95, %98 : vector<2x8x8xf32>
    %100 = math.exp %99 : vector<2x8x8xf32>
    %cst_45 = arith.constant dense<0.000000e+00> : vector<2x8xf32>
    %101 = vector.multi_reduction <add>, %100, %cst_45 [2] : vector<2x8x8xf32> to vector<2x8xf32>
    %102 = vector.shape_cast %101 : vector<2x8xf32> to vector<2x8x1xf32>
    %103 = tpu.reciprocal %102 {approx = true} : vector<2x8x1xf32> -> vector<2x8x1xf32>
    %104 = vector.broadcast %103 : vector<2x8x1xf32> to vector<2x8x8xf32>
    %105 = arith.mulf %100, %104 : vector<2x8x8xf32>
    "tpu.trace_start"() <{level = 10 : i32, message = "bqk,bkd->bqd"}> : () -> ()
    %cst_46 = arith.constant dense<0.000000e+00> : vector<2x8x16xf32>
    %106 = tpu.matmul %105, %92, %cst_46 {dimension_numbers = #tpu.dot_dimension_numbers<[2], [1], [1], [2], [0, 0, 0, 1, 1, 2], [0], [0]>} : vector<2x8x8xf32>, vector<2x8x16xf32>, vector<2x8x16xf32> -> vector<2x8x16xf32>
    "tpu.trace_stop"() : () -> ()
    %107 = vector.shape_cast %106 : vector<2x8x16xf32> to vector<16x16xf32>
    %c1_47 = arith.constant 1 : index
    %c0_48 = arith.constant 0 : index
    %c0_49 = arith.constant 0 : index
    %108 = vector.load %arg6[%c1_47, %c0_48, %c0_49] : memref<4x16x32xf32, #tpu.memory_space<vmem>>, vector<1x16x32xf32>
    %109 = vector.shape_cast %108 : vector<1x16x32xf32> to vector<16x32xf32>
    %cst_50 = arith.constant dense<0.000000e+00> : vector<16x32xf32>
    %110 = tpu.matmul %107, %109, %cst_50 {dimension_numbers = #tpu.dot_dimension_numbers<[1], [0], [0], [1], [0, 0, 1, 1], [], []>} : vector<16x16xf32>, vector<16x32xf32>, vector<16x32xf32> -> vector<16x32xf32>
    %111 = arith.addf %71, %110 : vector<16x32xf32>
    %112 = vector.extract_strided_slice %2 {offsets = [0, 0], sizes = [1, 32], strides = [1, 1]} : vector<12x32xf32> to vector<1x32xf32>
    %113 = vector.broadcast %112 : vector<1x32xf32> to vector<16x32xf32>
    %114 = arith.addf %111, %113 : vector<16x32xf32>
    %115 = arith.addf %28, %114 : vector<16x32xf32>
    %116 = vector.extract_strided_slice %2 {offsets = [1, 0], sizes = [1, 32], strides = [1, 1]} : vector<12x32xf32> to vector<1x32xf32>
    %117 = vector.extract_strided_slice %2 {offsets = [2, 0], sizes = [1, 32], strides = [1, 1]} : vector<12x32xf32> to vector<1x32xf32>
    %cst_51 = arith.constant dense<0.000000e+00> : vector<16xf32>
    %118 = vector.multi_reduction <add>, %115, %cst_51 [1] : vector<16x32xf32> to vector<16xf32>
    %119 = vector.shape_cast %118 : vector<16xf32> to vector<16x1xf32>
    %cst_52 = arith.constant 3.200000e+01 : f32
    %120 = vector.broadcast %cst_52 : f32 to vector<16x1xf32>
    %121 = arith.divf %119, %120 : vector<16x1xf32>
    %122 = vector.broadcast %121 : vector<16x1xf32> to vector<16x32xf32>
    %123 = arith.subf %115, %122 : vector<16x32xf32>
    %124 = arith.mulf %123, %123 : vector<16x32xf32>
    %cst_53 = arith.constant dense<0.000000e+00> : vector<16xf32>
    %125 = vector.multi_reduction <add>, %124, %cst_53 [1] : vector<16x32xf32> to vector<16xf32>
    %126 = vector.shape_cast %125 : vector<16xf32> to vector<16x1xf32>
    %cst_54 = arith.constant 3.200000e+01 : f32
    %127 = vector.broadcast %cst_54 : f32 to vector<16x1xf32>
    %128 = arith.divf %126, %127 : vector<16x1xf32>
    %129 = vector.broadcast %121 : vector<16x1xf32> to vector<16x32xf32>
    %130 = arith.subf %115, %129 : vector<16x32xf32>
    %cst_55 = arith.constant 9.99999996E-13 : f32
    %131 = vector.broadcast %cst_55 : f32 to vector<16x1xf32>
    %132 = arith.addf %128, %131 : vector<16x1xf32>
    %133 = math.rsqrt %132 : vector<16x1xf32>
    %134 = vector.broadcast %133 : vector<16x1xf32> to vector<16x32xf32>
    %135 = arith.mulf %130, %134 : vector<16x32xf32>
    %136 = vector.broadcast %116 : vector<1x32xf32> to vector<16x32xf32>
    %137 = arith.mulf %135, %136 : vector<16x32xf32>
    %138 = vector.broadcast %117 : vector<1x32xf32> to vector<16x32xf32>
    %139 = arith.addf %137, %138 : vector<16x32xf32>
    %c0_56 = arith.constant 0 : index
    %c0_57 = arith.constant 0 : index
    %c0_58 = arith.constant 0 : index
    %140 = vector.load %arg8[%c0_56, %c0_57, %c0_58] : memref<2x32x64xf32, #tpu.memory_space<vmem>>, vector<1x32x64xf32>
    %141 = vector.shape_cast %140 : vector<1x32x64xf32> to vector<32x64xf32>
    %cst_59 = arith.constant dense<0.000000e+00> : vector<16x64xf32>
    %142 = tpu.matmul %139, %141, %cst_59 {dimension_numbers = #tpu.dot_dimension_numbers<[1], [0], [0], [1], [0, 0, 1, 1], [], []>} : vector<16x32xf32>, vector<32x64xf32>, vector<16x64xf32> -> vector<16x64xf32>
    %143 = vector.extract_strided_slice %3 {offsets = [0, 0], sizes = [1, 64], strides = [1, 1]} : vector<2x64xf32> to vector<1x64xf32>
    %144 = vector.broadcast %143 : vector<1x64xf32> to vector<16x64xf32>
    %145 = arith.addf %142, %144 : vector<16x64xf32>
    %146 = arith.mulf %145, %145 : vector<16x64xf32>
    %147 = arith.mulf %145, %146 : vector<16x64xf32>
    %cst_60 = arith.constant 4.471500e-02 : f32
    %148 = vector.broadcast %cst_60 : f32 to vector<16x64xf32>
    %149 = arith.mulf %148, %147 : vector<16x64xf32>
    %150 = arith.addf %145, %149 : vector<16x64xf32>
    %cst_61 = arith.constant 0.797884583 : f32
    %151 = vector.broadcast %cst_61 : f32 to vector<16x64xf32>
    %152 = arith.mulf %151, %150 : vector<16x64xf32>
    %153 = math.tanh %152 : vector<16x64xf32>
    %cst_62 = arith.constant 1.000000e+00 : f32
    %154 = vector.broadcast %cst_62 : f32 to vector<16x64xf32>
    %155 = arith.addf %154, %153 : vector<16x64xf32>
    %cst_63 = arith.constant 5.000000e-01 : f32
    %156 = vector.broadcast %cst_63 : f32 to vector<16x64xf32>
    %157 = arith.mulf %156, %155 : vector<16x64xf32>
    %158 = arith.mulf %145, %157 : vector<16x64xf32>
    %c0_64 = arith.constant 0 : index
    %c0_65 = arith.constant 0 : index
    %c0_66 = arith.constant 0 : index
    %159 = vector.load %arg10[%c0_64, %c0_65, %c0_66] : memref<2x64x32xf32, #tpu.memory_space<vmem>>, vector<1x64x32xf32>
    %160 = vector.shape_cast %159 : vector<1x64x32xf32> to vector<64x32xf32>
    %cst_67 = arith.constant dense<0.000000e+00> : vector<16x32xf32>
    %161 = tpu.matmul %158, %160, %cst_67 {dimension_numbers = #tpu.dot_dimension_numbers<[1], [0], [0], [1], [0, 0, 1, 1], [], []>} : vector<16x64xf32>, vector<64x32xf32>, vector<16x32xf32> -> vector<16x32xf32>
    %162 = vector.extract_strided_slice %2 {offsets = [3, 0], sizes = [1, 32], strides = [1, 1]} : vector<12x32xf32> to vector<1x32xf32>
    %163 = vector.broadcast %162 : vector<1x32xf32> to vector<16x32xf32>
    %164 = arith.addf %161, %163 : vector<16x32xf32>
    %165 = arith.addf %139, %164 : vector<16x32xf32>
    %166 = vector.extract_strided_slice %2 {offsets = [4, 0], sizes = [1, 32], strides = [1, 1]} : vector<12x32xf32> to vector<1x32xf32>
    %167 = vector.extract_strided_slice %2 {offsets = [5, 0], sizes = [1, 32], strides = [1, 1]} : vector<12x32xf32> to vector<1x32xf32>
    %cst_68 = arith.constant dense<0.000000e+00> : vector<16xf32>
    %168 = vector.multi_reduction <add>, %165, %cst_68 [1] : vector<16x32xf32> to vector<16xf32>
    %169 = vector.shape_cast %168 : vector<16xf32> to vector<16x1xf32>
    %cst_69 = arith.constant 3.200000e+01 : f32
    %170 = vector.broadcast %cst_69 : f32 to vector<16x1xf32>
    %171 = arith.divf %169, %170 : vector<16x1xf32>
    %172 = vector.broadcast %171 : vector<16x1xf32> to vector<16x32xf32>
    %173 = arith.subf %165, %172 : vector<16x32xf32>
    %174 = arith.mulf %173, %173 : vector<16x32xf32>
    %cst_70 = arith.constant dense<0.000000e+00> : vector<16xf32>
    %175 = vector.multi_reduction <add>, %174, %cst_70 [1] : vector<16x32xf32> to vector<16xf32>
    %176 = vector.shape_cast %175 : vector<16xf32> to vector<16x1xf32>
    %cst_71 = arith.constant 3.200000e+01 : f32
    %177 = vector.broadcast %cst_71 : f32 to vector<16x1xf32>
    %178 = arith.divf %176, %177 : vector<16x1xf32>
    %179 = vector.broadcast %171 : vector<16x1xf32> to vector<16x32xf32>
    %180 = arith.subf %165, %179 : vector<16x32xf32>
    %cst_72 = arith.constant 9.99999996E-13 : f32
    %181 = vector.broadcast %cst_72 : f32 to vector<16x1xf32>
    %182 = arith.addf %178, %181 : vector<16x1xf32>
    %183 = math.rsqrt %182 : vector<16x1xf32>
    %184 = vector.broadcast %183 : vector<16x1xf32> to vector<16x32xf32>
    %185 = arith.mulf %180, %184 : vector<16x32xf32>
    %186 = vector.broadcast %166 : vector<1x32xf32> to vector<16x32xf32>
    %187 = arith.mulf %185, %186 : vector<16x32xf32>
    %188 = vector.broadcast %167 : vector<1x32xf32> to vector<16x32xf32>
    %189 = arith.addf %187, %188 : vector<16x32xf32>
    %cst_73 = arith.constant 0.000000e+00 : f32
    %190 = vector.broadcast %cst_73 : f32 to vector<16x32xf32>
    %c6 = arith.constant 6 : index
    %c0_74 = arith.constant 0 : index
    %c0_75 = arith.constant 0 : index
    %191 = vector.load %arg4[%c6, %c0_74, %c0_75] : memref<12x32x16xf32, #tpu.memory_space<vmem>>, vector<1x32x16xf32>
    %192 = vector.shape_cast %191 : vector<1x32x16xf32> to vector<32x16xf32>
    %cst_76 = arith.constant dense<0.000000e+00> : vector<16x16xf32>
    %193 = tpu.matmul %189, %192, %cst_76 {dimension_numbers = #tpu.dot_dimension_numbers<[1], [0], [0], [1], [0, 0, 1, 1], [], []>} : vector<16x32xf32>, vector<32x16xf32>, vector<16x16xf32> -> vector<16x16xf32>
    %194 = vector.extract_strided_slice %1 {offsets = [6, 0], sizes = [1, 16], strides = [1, 1]} : vector<12x16xf32> to vector<1x16xf32>
    %195 = vector.broadcast %194 : vector<1x16xf32> to vector<16x16xf32>
    %196 = arith.addf %193, %195 : vector<16x16xf32>
    %197 = vector.shape_cast %196 : vector<16x16xf32> to vector<2x8x16xf32>
    %c8 = arith.constant 8 : index
    %c0_77 = arith.constant 0 : index
    %c0_78 = arith.constant 0 : index
    %198 = vector.load %arg4[%c8, %c0_77, %c0_78] : memref<12x32x16xf32, #tpu.memory_space<vmem>>, vector<1x32x16xf32>
    %199 = vector.shape_cast %198 : vector<1x32x16xf32> to vector<32x16xf32>
    %cst_79 = arith.constant dense<0.000000e+00> : vector<16x16xf32>
    %200 = tpu.matmul %189, %199, %cst_79 {dimension_numbers = #tpu.dot_dimension_numbers<[1], [0], [0], [1], [0, 0, 1, 1], [], []>} : vector<16x32xf32>, vector<32x16xf32>, vector<16x16xf32> -> vector<16x16xf32>
    %201 = vector.extract_strided_slice %1 {offsets = [8, 0], sizes = [1, 16], strides = [1, 1]} : vector<12x16xf32> to vector<1x16xf32>
    %202 = vector.broadcast %201 : vector<1x16xf32> to vector<16x16xf32>
    %203 = arith.addf %200, %202 : vector<16x16xf32>
    %204 = vector.shape_cast %203 : vector<16x16xf32> to vector<2x8x16xf32>
    %c10 = arith.constant 10 : index
    %c0_80 = arith.constant 0 : index
    %c0_81 = arith.constant 0 : index
    %205 = vector.load %arg4[%c10, %c0_80, %c0_81] : memref<12x32x16xf32, #tpu.memory_space<vmem>>, vector<1x32x16xf32>
    %206 = vector.shape_cast %205 : vector<1x32x16xf32> to vector<32x16xf32>
    %cst_82 = arith.constant dense<0.000000e+00> : vector<16x16xf32>
    %207 = tpu.matmul %189, %206, %cst_82 {dimension_numbers = #tpu.dot_dimension_numbers<[1], [0], [0], [1], [0, 0, 1, 1], [], []>} : vector<16x32xf32>, vector<32x16xf32>, vector<16x16xf32> -> vector<16x16xf32>
    %208 = vector.extract_strided_slice %1 {offsets = [10, 0], sizes = [1, 16], strides = [1, 1]} : vector<12x16xf32> to vector<1x16xf32>
    %209 = vector.broadcast %208 : vector<1x16xf32> to vector<16x16xf32>
    %210 = arith.addf %207, %209 : vector<16x16xf32>
    %211 = vector.shape_cast %210 : vector<16x16xf32> to vector<2x8x16xf32>
    "tpu.trace_start"() <{level = 10 : i32, message = "bqd,bkd->bqk"}> : () -> ()
    %cst_83 = arith.constant dense<0.000000e+00> : vector<2x8x8xf32>
    %212 = tpu.matmul %197, %204, %cst_83 {dimension_numbers = #tpu.dot_dimension_numbers<[2], [2], [1], [1], [0, 0, 0, 1, 1, 1], [0], [0]>} : vector<2x8x16xf32>, vector<2x8x16xf32>, vector<2x8x8xf32> -> vector<2x8x8xf32>
    "tpu.trace_stop"() : () -> ()
    %213 = vector.broadcast %30 : f32 to vector<2x8x8xf32>
    %214 = arith.mulf %212, %213 : vector<2x8x8xf32>
    %cst_84 = arith.constant dense<0xFF800000> : vector<2x8xf32>
    %215 = vector.multi_reduction <maximumf>, %214, %cst_84 [2] : vector<2x8x8xf32> to vector<2x8xf32>
    %216 = vector.shape_cast %215 : vector<2x8xf32> to vector<2x8x1xf32>
    %217 = vector.broadcast %216 : vector<2x8x1xf32> to vector<2x8x8xf32>
    %218 = arith.subf %214, %217 : vector<2x8x8xf32>
    %219 = math.exp %218 : vector<2x8x8xf32>
    %cst_85 = arith.constant dense<0.000000e+00> : vector<2x8xf32>
    %220 = vector.multi_reduction <add>, %219, %cst_85 [2] : vector<2x8x8xf32> to vector<2x8xf32>
    %221 = vector.shape_cast %220 : vector<2x8xf32> to vector<2x8x1xf32>
    %222 = tpu.reciprocal %221 {approx = true} : vector<2x8x1xf32> -> vector<2x8x1xf32>
    %223 = vector.broadcast %222 : vector<2x8x1xf32> to vector<2x8x8xf32>
    %224 = arith.mulf %219, %223 : vector<2x8x8xf32>
    "tpu.trace_start"() <{level = 10 : i32, message = "bqk,bkd->bqd"}> : () -> ()
    %cst_86 = arith.constant dense<0.000000e+00> : vector<2x8x16xf32>
    %225 = tpu.matmul %224, %211, %cst_86 {dimension_numbers = #tpu.dot_dimension_numbers<[2], [1], [1], [2], [0, 0, 0, 1, 1, 2], [0], [0]>} : vector<2x8x8xf32>, vector<2x8x16xf32>, vector<2x8x16xf32> -> vector<2x8x16xf32>
    "tpu.trace_stop"() : () -> ()
    %226 = vector.shape_cast %225 : vector<2x8x16xf32> to vector<16x16xf32>
    %c2_87 = arith.constant 2 : index
    %c0_88 = arith.constant 0 : index
    %c0_89 = arith.constant 0 : index
    %227 = vector.load %arg6[%c2_87, %c0_88, %c0_89] : memref<4x16x32xf32, #tpu.memory_space<vmem>>, vector<1x16x32xf32>
    %228 = vector.shape_cast %227 : vector<1x16x32xf32> to vector<16x32xf32>
    %cst_90 = arith.constant dense<0.000000e+00> : vector<16x32xf32>
    %229 = tpu.matmul %226, %228, %cst_90 {dimension_numbers = #tpu.dot_dimension_numbers<[1], [0], [0], [1], [0, 0, 1, 1], [], []>} : vector<16x16xf32>, vector<16x32xf32>, vector<16x32xf32> -> vector<16x32xf32>
    %230 = arith.addf %190, %229 : vector<16x32xf32>
    %c7 = arith.constant 7 : index
    %c0_91 = arith.constant 0 : index
    %c0_92 = arith.constant 0 : index
    %231 = vector.load %arg4[%c7, %c0_91, %c0_92] : memref<12x32x16xf32, #tpu.memory_space<vmem>>, vector<1x32x16xf32>
    %232 = vector.shape_cast %231 : vector<1x32x16xf32> to vector<32x16xf32>
    %cst_93 = arith.constant dense<0.000000e+00> : vector<16x16xf32>
    %233 = tpu.matmul %189, %232, %cst_93 {dimension_numbers = #tpu.dot_dimension_numbers<[1], [0], [0], [1], [0, 0, 1, 1], [], []>} : vector<16x32xf32>, vector<32x16xf32>, vector<16x16xf32> -> vector<16x16xf32>
    %234 = vector.extract_strided_slice %1 {offsets = [7, 0], sizes = [1, 16], strides = [1, 1]} : vector<12x16xf32> to vector<1x16xf32>
    %235 = vector.broadcast %234 : vector<1x16xf32> to vector<16x16xf32>
    %236 = arith.addf %233, %235 : vector<16x16xf32>
    %237 = vector.shape_cast %236 : vector<16x16xf32> to vector<2x8x16xf32>
    %c9 = arith.constant 9 : index
    %c0_94 = arith.constant 0 : index
    %c0_95 = arith.constant 0 : index
    %238 = vector.load %arg4[%c9, %c0_94, %c0_95] : memref<12x32x16xf32, #tpu.memory_space<vmem>>, vector<1x32x16xf32>
    %239 = vector.shape_cast %238 : vector<1x32x16xf32> to vector<32x16xf32>
    %cst_96 = arith.constant dense<0.000000e+00> : vector<16x16xf32>
    %240 = tpu.matmul %189, %239, %cst_96 {dimension_numbers = #tpu.dot_dimension_numbers<[1], [0], [0], [1], [0, 0, 1, 1], [], []>} : vector<16x32xf32>, vector<32x16xf32>, vector<16x16xf32> -> vector<16x16xf32>
    %241 = vector.extract_strided_slice %1 {offsets = [9, 0], sizes = [1, 16], strides = [1, 1]} : vector<12x16xf32> to vector<1x16xf32>
    %242 = vector.broadcast %241 : vector<1x16xf32> to vector<16x16xf32>
    %243 = arith.addf %240, %242 : vector<16x16xf32>
    %244 = vector.shape_cast %243 : vector<16x16xf32> to vector<2x8x16xf32>
    %c11 = arith.constant 11 : index
    %c0_97 = arith.constant 0 : index
    %c0_98 = arith.constant 0 : index
    %245 = vector.load %arg4[%c11, %c0_97, %c0_98] : memref<12x32x16xf32, #tpu.memory_space<vmem>>, vector<1x32x16xf32>
    %246 = vector.shape_cast %245 : vector<1x32x16xf32> to vector<32x16xf32>
    %cst_99 = arith.constant dense<0.000000e+00> : vector<16x16xf32>
    %247 = tpu.matmul %189, %246, %cst_99 {dimension_numbers = #tpu.dot_dimension_numbers<[1], [0], [0], [1], [0, 0, 1, 1], [], []>} : vector<16x32xf32>, vector<32x16xf32>, vector<16x16xf32> -> vector<16x16xf32>
    %248 = vector.extract_strided_slice %1 {offsets = [11, 0], sizes = [1, 16], strides = [1, 1]} : vector<12x16xf32> to vector<1x16xf32>
    %249 = vector.broadcast %248 : vector<1x16xf32> to vector<16x16xf32>
    %250 = arith.addf %247, %249 : vector<16x16xf32>
    %251 = vector.shape_cast %250 : vector<16x16xf32> to vector<2x8x16xf32>
    "tpu.trace_start"() <{level = 10 : i32, message = "bqd,bkd->bqk"}> : () -> ()
    %cst_100 = arith.constant dense<0.000000e+00> : vector<2x8x8xf32>
    %252 = tpu.matmul %237, %244, %cst_100 {dimension_numbers = #tpu.dot_dimension_numbers<[2], [2], [1], [1], [0, 0, 0, 1, 1, 1], [0], [0]>} : vector<2x8x16xf32>, vector<2x8x16xf32>, vector<2x8x8xf32> -> vector<2x8x8xf32>
    "tpu.trace_stop"() : () -> ()
    %253 = vector.broadcast %30 : f32 to vector<2x8x8xf32>
    %254 = arith.mulf %252, %253 : vector<2x8x8xf32>
    %cst_101 = arith.constant dense<0xFF800000> : vector<2x8xf32>
    %255 = vector.multi_reduction <maximumf>, %254, %cst_101 [2] : vector<2x8x8xf32> to vector<2x8xf32>
    %256 = vector.shape_cast %255 : vector<2x8xf32> to vector<2x8x1xf32>
    %257 = vector.broadcast %256 : vector<2x8x1xf32> to vector<2x8x8xf32>
    %258 = arith.subf %254, %257 : vector<2x8x8xf32>
    %259 = math.exp %258 : vector<2x8x8xf32>
    %cst_102 = arith.constant dense<0.000000e+00> : vector<2x8xf32>
    %260 = vector.multi_reduction <add>, %259, %cst_102 [2] : vector<2x8x8xf32> to vector<2x8xf32>
    %261 = vector.shape_cast %260 : vector<2x8xf32> to vector<2x8x1xf32>
    %262 = tpu.reciprocal %261 {approx = true} : vector<2x8x1xf32> -> vector<2x8x1xf32>
    %263 = vector.broadcast %262 : vector<2x8x1xf32> to vector<2x8x8xf32>
    %264 = arith.mulf %259, %263 : vector<2x8x8xf32>
    "tpu.trace_start"() <{level = 10 : i32, message = "bqk,bkd->bqd"}> : () -> ()
    %cst_103 = arith.constant dense<0.000000e+00> : vector<2x8x16xf32>
    %265 = tpu.matmul %264, %251, %cst_103 {dimension_numbers = #tpu.dot_dimension_numbers<[2], [1], [1], [2], [0, 0, 0, 1, 1, 2], [0], [0]>} : vector<2x8x8xf32>, vector<2x8x16xf32>, vector<2x8x16xf32> -> vector<2x8x16xf32>
    "tpu.trace_stop"() : () -> ()
    %266 = vector.shape_cast %265 : vector<2x8x16xf32> to vector<16x16xf32>
    %c3_104 = arith.constant 3 : index
    %c0_105 = arith.constant 0 : index
    %c0_106 = arith.constant 0 : index
    %267 = vector.load %arg6[%c3_104, %c0_105, %c0_106] : memref<4x16x32xf32, #tpu.memory_space<vmem>>, vector<1x16x32xf32>
    %268 = vector.shape_cast %267 : vector<1x16x32xf32> to vector<16x32xf32>
    %cst_107 = arith.constant dense<0.000000e+00> : vector<16x32xf32>
    %269 = tpu.matmul %266, %268, %cst_107 {dimension_numbers = #tpu.dot_dimension_numbers<[1], [0], [0], [1], [0, 0, 1, 1], [], []>} : vector<16x16xf32>, vector<16x32xf32>, vector<16x32xf32> -> vector<16x32xf32>
    %270 = arith.addf %230, %269 : vector<16x32xf32>
    %271 = vector.extract_strided_slice %2 {offsets = [6, 0], sizes = [1, 32], strides = [1, 1]} : vector<12x32xf32> to vector<1x32xf32>
    %272 = vector.broadcast %271 : vector<1x32xf32> to vector<16x32xf32>
    %273 = arith.addf %270, %272 : vector<16x32xf32>
    %274 = arith.addf %189, %273 : vector<16x32xf32>
    %275 = vector.extract_strided_slice %2 {offsets = [7, 0], sizes = [1, 32], strides = [1, 1]} : vector<12x32xf32> to vector<1x32xf32>
    %276 = vector.extract_strided_slice %2 {offsets = [8, 0], sizes = [1, 32], strides = [1, 1]} : vector<12x32xf32> to vector<1x32xf32>
    %cst_108 = arith.constant dense<0.000000e+00> : vector<16xf32>
    %277 = vector.multi_reduction <add>, %274, %cst_108 [1] : vector<16x32xf32> to vector<16xf32>
    %278 = vector.shape_cast %277 : vector<16xf32> to vector<16x1xf32>
    %cst_109 = arith.constant 3.200000e+01 : f32
    %279 = vector.broadcast %cst_109 : f32 to vector<16x1xf32>
    %280 = arith.divf %278, %279 : vector<16x1xf32>
    %281 = vector.broadcast %280 : vector<16x1xf32> to vector<16x32xf32>
    %282 = arith.subf %274, %281 : vector<16x32xf32>
    %283 = arith.mulf %282, %282 : vector<16x32xf32>
    %cst_110 = arith.constant dense<0.000000e+00> : vector<16xf32>
    %284 = vector.multi_reduction <add>, %283, %cst_110 [1] : vector<16x32xf32> to vector<16xf32>
    %285 = vector.shape_cast %284 : vector<16xf32> to vector<16x1xf32>
    %cst_111 = arith.constant 3.200000e+01 : f32
    %286 = vector.broadcast %cst_111 : f32 to vector<16x1xf32>
    %287 = arith.divf %285, %286 : vector<16x1xf32>
    %288 = vector.broadcast %280 : vector<16x1xf32> to vector<16x32xf32>
    %289 = arith.subf %274, %288 : vector<16x32xf32>
    %cst_112 = arith.constant 9.99999996E-13 : f32
    %290 = vector.broadcast %cst_112 : f32 to vector<16x1xf32>
    %291 = arith.addf %287, %290 : vector<16x1xf32>
    %292 = math.rsqrt %291 : vector<16x1xf32>
    %293 = vector.broadcast %292 : vector<16x1xf32> to vector<16x32xf32>
    %294 = arith.mulf %289, %293 : vector<16x32xf32>
    %295 = vector.broadcast %275 : vector<1x32xf32> to vector<16x32xf32>
    %296 = arith.mulf %294, %295 : vector<16x32xf32>
    %297 = vector.broadcast %276 : vector<1x32xf32> to vector<16x32xf32>
    %298 = arith.addf %296, %297 : vector<16x32xf32>
    %c1_113 = arith.constant 1 : index
    %c0_114 = arith.constant 0 : index
    %c0_115 = arith.constant 0 : index
    %299 = vector.load %arg8[%c1_113, %c0_114, %c0_115] : memref<2x32x64xf32, #tpu.memory_space<vmem>>, vector<1x32x64xf32>
    %300 = vector.shape_cast %299 : vector<1x32x64xf32> to vector<32x64xf32>
    %cst_116 = arith.constant dense<0.000000e+00> : vector<16x64xf32>
    %301 = tpu.matmul %298, %300, %cst_116 {dimension_numbers = #tpu.dot_dimension_numbers<[1], [0], [0], [1], [0, 0, 1, 1], [], []>} : vector<16x32xf32>, vector<32x64xf32>, vector<16x64xf32> -> vector<16x64xf32>
    %302 = vector.extract_strided_slice %3 {offsets = [1, 0], sizes = [1, 64], strides = [1, 1]} : vector<2x64xf32> to vector<1x64xf32>
    %303 = vector.broadcast %302 : vector<1x64xf32> to vector<16x64xf32>
    %304 = arith.addf %301, %303 : vector<16x64xf32>
    %305 = arith.mulf %304, %304 : vector<16x64xf32>
    %306 = arith.mulf %304, %305 : vector<16x64xf32>
    %cst_117 = arith.constant 4.471500e-02 : f32
    %307 = vector.broadcast %cst_117 : f32 to vector<16x64xf32>
    %308 = arith.mulf %307, %306 : vector<16x64xf32>
    %309 = arith.addf %304, %308 : vector<16x64xf32>
    %cst_118 = arith.constant 0.797884583 : f32
    %310 = vector.broadcast %cst_118 : f32 to vector<16x64xf32>
    %311 = arith.mulf %310, %309 : vector<16x64xf32>
    %312 = math.tanh %311 : vector<16x64xf32>
    %cst_119 = arith.constant 1.000000e+00 : f32
    %313 = vector.broadcast %cst_119 : f32 to vector<16x64xf32>
    %314 = arith.addf %313, %312 : vector<16x64xf32>
    %cst_120 = arith.constant 5.000000e-01 : f32
    %315 = vector.broadcast %cst_120 : f32 to vector<16x64xf32>
    %316 = arith.mulf %315, %314 : vector<16x64xf32>
    %317 = arith.mulf %304, %316 : vector<16x64xf32>
    %c1_121 = arith.constant 1 : index
    %c0_122 = arith.constant 0 : index
    %c0_123 = arith.constant 0 : index
    %318 = vector.load %arg10[%c1_121, %c0_122, %c0_123] : memref<2x64x32xf32, #tpu.memory_space<vmem>>, vector<1x64x32xf32>
    %319 = vector.shape_cast %318 : vector<1x64x32xf32> to vector<64x32xf32>
    %cst_124 = arith.constant dense<0.000000e+00> : vector<16x32xf32>
    %320 = tpu.matmul %317, %319, %cst_124 {dimension_numbers = #tpu.dot_dimension_numbers<[1], [0], [0], [1], [0, 0, 1, 1], [], []>} : vector<16x64xf32>, vector<64x32xf32>, vector<16x32xf32> -> vector<16x32xf32>
    %321 = vector.extract_strided_slice %2 {offsets = [9, 0], sizes = [1, 32], strides = [1, 1]} : vector<12x32xf32> to vector<1x32xf32>
    %322 = vector.broadcast %321 : vector<1x32xf32> to vector<16x32xf32>
    %323 = arith.addf %320, %322 : vector<16x32xf32>
    %324 = arith.addf %298, %323 : vector<16x32xf32>
    %325 = vector.extract_strided_slice %2 {offsets = [10, 0], sizes = [1, 32], strides = [1, 1]} : vector<12x32xf32> to vector<1x32xf32>
    %326 = vector.extract_strided_slice %2 {offsets = [11, 0], sizes = [1, 32], strides = [1, 1]} : vector<12x32xf32> to vector<1x32xf32>
    %cst_125 = arith.constant dense<0.000000e+00> : vector<16xf32>
    %327 = vector.multi_reduction <add>, %324, %cst_125 [1] : vector<16x32xf32> to vector<16xf32>
    %328 = vector.shape_cast %327 : vector<16xf32> to vector<16x1xf32>
    %cst_126 = arith.constant 3.200000e+01 : f32
    %329 = vector.broadcast %cst_126 : f32 to vector<16x1xf32>
    %330 = arith.divf %328, %329 : vector<16x1xf32>
    %331 = vector.broadcast %330 : vector<16x1xf32> to vector<16x32xf32>
    %332 = arith.subf %324, %331 : vector<16x32xf32>
    %333 = arith.mulf %332, %332 : vector<16x32xf32>
    %cst_127 = arith.constant dense<0.000000e+00> : vector<16xf32>
    %334 = vector.multi_reduction <add>, %333, %cst_127 [1] : vector<16x32xf32> to vector<16xf32>
    %335 = vector.shape_cast %334 : vector<16xf32> to vector<16x1xf32>
    %cst_128 = arith.constant 3.200000e+01 : f32
    %336 = vector.broadcast %cst_128 : f32 to vector<16x1xf32>
    %337 = arith.divf %335, %336 : vector<16x1xf32>
    %338 = vector.broadcast %330 : vector<16x1xf32> to vector<16x32xf32>
    %339 = arith.subf %324, %338 : vector<16x32xf32>
    %cst_129 = arith.constant 9.99999996E-13 : f32
    %340 = vector.broadcast %cst_129 : f32 to vector<16x1xf32>
    %341 = arith.addf %337, %340 : vector<16x1xf32>
    %342 = math.rsqrt %341 : vector<16x1xf32>
    %343 = vector.broadcast %342 : vector<16x1xf32> to vector<16x32xf32>
    %344 = arith.mulf %339, %343 : vector<16x32xf32>
    %345 = vector.broadcast %325 : vector<1x32xf32> to vector<16x32xf32>
    %346 = arith.mulf %344, %345 : vector<16x32xf32>
    %347 = vector.broadcast %326 : vector<1x32xf32> to vector<16x32xf32>
    %348 = arith.addf %346, %347 : vector<16x32xf32>
    %349 = vector.shape_cast %348 : vector<16x32xf32> to vector<2x8x32xf32>
    %350 = vector.extract_strided_slice %349 {offsets = [0, 0, 0], sizes = [2, 1, 32], strides = [1, 1, 1]} : vector<2x8x32xf32> to vector<2x1x32xf32>
    %351 = vector.shape_cast %350 : vector<2x1x32xf32> to vector<2x32xf32>
    %c0_130 = arith.constant 0 : index
    %c0_131 = arith.constant 0 : index
    %352 = vector.load %arg12[%c0_130, %c0_131] : memref<32x32xf32, #tpu.memory_space<vmem>>, vector<32x32xf32>
    %cst_132 = arith.constant dense<0.000000e+00> : vector<2x32xf32>
    %353 = tpu.matmul %351, %352, %cst_132 {dimension_numbers = #tpu.dot_dimension_numbers<[1], [0], [0], [1], [0, 0, 1, 1], [], []>} : vector<2x32xf32>, vector<32x32xf32>, vector<2x32xf32> -> vector<2x32xf32>
    %354 = vector.extract_strided_slice %0 {offsets = [2, 0], sizes = [1, 32], strides = [1, 1]} : vector<3x32xf32> to vector<1x32xf32>
    %355 = vector.broadcast %354 : vector<1x32xf32> to vector<2x32xf32>
    %356 = arith.addf %353, %355 : vector<2x32xf32>
    %357 = math.tanh %356 : vector<2x32xf32>
    %c0_133 = arith.constant 0 : index
    %c0_134 = arith.constant 0 : index
    %358 = vector.load %arg13[%c0_133, %c0_134] : memref<32x1xf32, #tpu.memory_space<vmem>>, vector<32x1xf32>
    %cst_135 = arith.constant dense<0.000000e+00> : vector<2x1xf32>
    %359 = tpu.matmul %357, %358, %cst_135 {dimension_numbers = #tpu.dot_dimension_numbers<[1], [0], [0], [1], [0, 0, 1, 1], [], []>} : vector<2x32xf32>, vector<32x1xf32>, vector<2x1xf32> -> vector<2x1xf32>
    %c0_136 = arith.constant 0 : index
    %c0_137 = arith.constant 0 : index
    %360 = vector.load %arg14[%c0_136, %c0_137] : memref<1x1xf32, #tpu.memory_space<vmem>>, vector<1x1xf32>
    %361 = vector.broadcast %360 : vector<1x1xf32> to vector<2x1xf32>
    %362 = arith.addf %359, %361 : vector<2x1xf32>
    %c0_138 = arith.constant 0 : index
    %c0_139 = arith.constant 0 : index
    %363 = vector.load %arg15[%c0_138, %c0_139] : memref<2x1xf32, #tpu.memory_space<vmem>>, vector<2x1xf32>
    tpu.vector_store %arg15[%c0_138, %c0_139], %362 {strides = array<i32>} : memref<2x1xf32, #tpu.memory_space<vmem>>, vector<2x1xf32>,
    %c0_140 = arith.constant 0 : index
    %c0_141 = arith.constant 0 : index
    %364 = vector.load %arg2[%c0_140, %c0_141] : memref<2x1xf32, #tpu.memory_space<vmem>>, vector<2x1xf32>
    %cst_142 = arith.constant 0.000000e+00 : f32
    %365 = vector.broadcast %cst_142 : f32 to vector<2x1xf32>
    %366 = arith.maximumf %362, %365 : vector<2x1xf32>
    %367 = arith.mulf %362, %364 : vector<2x1xf32>
    %368 = arith.subf %366, %367 : vector<2x1xf32>
    %369 = math.absf %362 : vector<2x1xf32>
    %cst_143 = arith.constant 0.000000e+00 : f32
    %370 = vector.broadcast %cst_143 : f32 to vector<2x1xf32>
    %371 = arith.subf %370, %369 : vector<2x1xf32>
    %372 = math.exp %371 : vector<2x1xf32>
    %373 = math.log1p %372 : vector<2x1xf32>
    %374 = arith.addf %368, %373 : vector<2x1xf32>
    %375 = vector.shape_cast %374 : vector<2x1xf32> to vector<1x2x1xf32>
    %cst_144 = arith.constant dense<0.000000e+00> : vector<1xf32>
    %376 = vector.multi_reduction <add>, %375, %cst_144 [1, 2] : vector<1x2x1xf32> to vector<1xf32>
    %377 = vector.shape_cast %376 : vector<1xf32> to vector<1x1x1xf32>
    %378 = vector.extract %377[0, 0, 0] : f32 from vector<1x1x1xf32>
    %379 = vector.broadcast %378 : f32 to vector<1x1xf32>
    %cst_145 = arith.constant 2.000000e+00 : f32
    %380 = vector.broadcast %cst_145 : f32 to vector<1x1xf32>
    %381 = arith.divf %379, %380 : vector<1x1xf32>
    %c0_146 = arith.constant 0 : index
    %c0_147 = arith.constant 0 : index
    %382 = vector.load %arg1[%c0_146, %c0_147] : memref<2x8xi32, #tpu.memory_space<vmem>>, vector<2x8xi32>
    %383 = arith.sitofp %382 : vector<2x8xi32> to vector<2x8xf32>
    %cst_148 = arith.constant dense<0.000000e+00> : vector<2xf32>
    %384 = vector.multi_reduction <add>, %383, %cst_148 [1] : vector<2x8xf32> to vector<2xf32>
    %385 = vector.shape_cast %384 : vector<2xf32> to vector<2x1xf32>
    %386 = arith.subf %362, %385 : vector<2x1xf32>
    %387 = arith.addf %386, %385 : vector<2x1xf32>
    %cst_149 = arith.constant 0.000000e+00 : f32
    %388 = vector.broadcast %cst_149 : f32 to vector<2x1xf32>
    %389 = arith.maximumf %387, %388 : vector<2x1xf32>
    %390 = arith.mulf %387, %364 : vector<2x1xf32>
    %391 = arith.subf %389, %390 : vector<2x1xf32>
    %392 = math.absf %387 : vector<2x1xf32>
    %cst_150 = arith.constant 0.000000e+00 : f32
    %393 = vector.broadcast %cst_150 : f32 to vector<2x1xf32>
    %394 = arith.subf %393, %392 : vector<2x1xf32>
    %395 = math.exp %394 : vector<2x1xf32>
    %396 = math.log1p %395 : vector<2x1xf32>
    %397 = arith.addf %391, %396 : vector<2x1xf32>
    %398 = vector.shape_cast %397 : vector<2x1xf32> to vector<1x2x1xf32>
    %cst_151 = arith.constant dense<0.000000e+00> : vector<1xf32>
    %399 = vector.multi_reduction <add>, %398, %cst_151 [1, 2] : vector<1x2x1xf32> to vector<1xf32>
    %400 = vector.shape_cast %399 : vector<1xf32> to vector<1x1x1xf32>
    %401 = vector.extract %400[0, 0, 0] : f32 from vector<1x1x1xf32>
    %402 = vector.broadcast %401 : f32 to vector<1x1xf32>
    %cst_152 = arith.constant 2.000000e+00 : f32
    %403 = vector.broadcast %cst_152 : f32 to vector<1x1xf32>
    %404 = arith.divf %402, %403 : vector<1x1xf32>
    %405 = vector.shape_cast %362 : vector<2x1xf32> to vector<1x2x1xf32>
    %cst_153 = arith.constant dense<0.000000e+00> : vector<1xf32>
    %406 = vector.multi_reduction <add>, %405, %cst_153 [1, 2] : vector<1x2x1xf32> to vector<1xf32>
    %407 = vector.shape_cast %406 : vector<1xf32> to vector<1x1x1xf32>
    %408 = vector.extract %407[0, 0, 0] : f32 from vector<1x1x1xf32>
    %409 = vector.broadcast %408 : f32 to vector<1x1xf32>
    %cst_154 = arith.constant 2.000000e+00 : f32
    %410 = vector.broadcast %cst_154 : f32 to vector<1x1xf32>
    %411 = arith.divf %409, %410 : vector<1x1xf32>
    %412 = tpu.iota {dimensions = array<i32: 1>} : vector<1x3xi32>
    %c0_i32 = arith.constant 0 : i32
    %413 = vector.broadcast %c0_i32 : i32 to vector<1x3xi32>
    %414 = arith.cmpi eq, %412, %413 : vector<1x3xi32>
    %c1_i32 = arith.constant 1 : i32
    %415 = vector.broadcast %c1_i32 : i32 to vector<1x3xi32>
    %416 = arith.cmpi eq, %412, %415 : vector<1x3xi32>
    %417 = vector.shape_cast %404 : vector<1x1xf32> to vector<1x1xf32>
    %418 = vector.broadcast %417 : vector<1x1xf32> to vector<1x3xf32>
    %419 = vector.shape_cast %411 : vector<1x1xf32> to vector<1x1xf32>
    %420 = vector.broadcast %419 : vector<1x1xf32> to vector<1x3xf32>
    %421 = arith.select %416, %418, %420 : vector<1x3xi1>, vector<1x3xf32>
    %422 = vector.shape_cast %381 : vector<1x1xf32> to vector<1x1xf32>
    %423 = vector.broadcast %422 : vector<1x1xf32> to vector<1x3xf32>
    %424 = arith.select %414, %423, %421 : vector<1x3xi1>, vector<1x3xf32>
    %c0_155 = arith.constant 0 : index
    %c0_156 = arith.constant 0 : index
    %425 = vector.load %arg16[%c0_155, %c0_156] : memref<1x3xf32, #tpu.memory_space<vmem>>, vector<1x3xf32>
    tpu.vector_store %arg16[%c0_155, %c0_156], %424 {strides = array<i32>} : memref<1x3xf32, #tpu.memory_space<vmem>>, vector<1x3xf32>,
    return
  }
  func.func @transform_0(%arg0: i32) -> (i32, i32) {
    %c0_i32 = arith.constant 0 : i32
    %c0_i32_0 = arith.constant 0 : i32
    %c0_i32_1 = arith.constant 0 : i32
    return %c0_i32, %c0_i32_0 : i32, i32
  }
  func.func @transform_1(%arg0: i32) -> (i32, i32) {
    %c0_i32 = arith.constant 0 : i32
    %c0_i32_0 = arith.constant 0 : i32
    %c0_i32_1 = arith.constant 0 : i32
    return %c0_i32, %c0_i32_0 : i32, i32
  }
  func.func @transform_2(%arg0: i32) -> (i32, i32) {
    %c0_i32 = arith.constant 0 : i32
    %c0_i32_0 = arith.constant 0 : i32
    %c0_i32_1 = arith.constant 0 : i32
    return %c0_i32, %c0_i32_0 : i32, i32
  }
  func.func @transform_3(%arg0: i32) -> (i32, i32, i32) {
    %c0_i32 = arith.constant 0 : i32
    %c0_i32_0 = arith.constant 0 : i32
    %c0_i32_1 = arith.constant 0 : i32
    %c0_i32_2 = arith.constant 0 : i32
    return %c0_i32, %c0_i32_0, %c0_i32_1 : i32, i32, i32
  }
  func.func @transform_4(%arg0: i32) -> (i32, i32) {
    %c0_i32 = arith.constant 0 : i32
    %c0_i32_0 = arith.constant 0 : i32
    %c0_i32_1 = arith.constant 0 : i32
    return %c0_i32, %c0_i32_0 : i32, i32
  }
  func.func @transform_5(%arg0: i32) -> (i32, i32, i32) {
    %c0_i32 = arith.constant 0 : i32
    %c0_i32_0 = arith.constant 0 : i32
    %c0_i32_1 = arith.constant 0 : i32
    %c0_i32_2 = arith.constant 0 : i32
    return %c0_i32, %c0_i32_0, %c0_i32_1 : i32, i32, i32
  }
  func.func @transform_6(%arg0: i32) -> (i32, i32) {
    %c0_i32 = arith.constant 0 : i32
    %c0_i32_0 = arith.constant 0 : i32
    %c0_i32_1 = arith.constant 0 : i32
    return %c0_i32, %c0_i32_0 : i32, i32
  }
  func.func @transform_7(%arg0: i32) -> (i32, i32, i32) {
    %c0_i32 = arith.constant 0 : i32
    %c0_i32_0 = arith.constant 0 : i32
    %c0_i32_1 = arith.constant 0 : i32
    %c0_i32_2 = arith.constant 0 : i32
    return %c0_i32, %c0_i32_0, %c0_i32_1 : i32, i32, i32
  }
  func.func @transform_8(%arg0: i32) -> (i32, i32) {
    %c0_i32 = arith.constant 0 : i32
    %c0_i32_0 = arith.constant 0 : i32
    %c0_i32_1 = arith.constant 0 : i32
    return %c0_i32, %c0_i32_0 : i32, i32
  }
  func.func @transform_9(%arg0: i32) -> (i32, i32, i32) {
    %c0_i32 = arith.constant 0 : i32
    %c0_i32_0 = arith.constant 0 : i32
    %c0_i32_1 = arith.constant 0 : i32
    %c0_i32_2 = arith.constant 0 : i32
    return %c0_i32, %c0_i32_0, %c0_i32_1 : i32, i32, i32
  }
  func.func @transform_10(%arg0: i32) -> (i32, i32) {
    %c0_i32 = arith.constant 0 : i32
    %c0_i32_0 = arith.constant 0 : i32
    %c0_i32_1 = arith.constant 0 : i32
    return %c0_i32, %c0_i32_0 : i32, i32
  }
  func.func @transform_11(%arg0: i32) -> (i32, i32) {
    %c0_i32 = arith.constant 0 : i32
    %c0_i32_0 = arith.constant 0 : i32
    %c0_i32_1 = arith.constant 0 : i32
    return %c0_i32, %c0_i32_0 : i32, i32
  }
  func.func @transform_12(%arg0: i32) -> (i32, i32) {
    %c0_i32 = arith.constant 0 : i32
    %c0_i32_0 = arith.constant 0 : i32
    %c0_i32_1 = arith.constant 0 : i32
    return %c0_i32, %c0_i32_0 : i32, i32
  }
  func.func @transform_13(%arg0: i32) -> (i32, i32) {
    %c0_i32 = arith.constant 0 : i32
    %c0_i32_0 = arith.constant 0 : i32
    %c0_i32_1 = arith.constant 0 : i32
    return %c0_i32, %c0_i32_0 : i32, i32
  }
  func.func @transform_14(%arg0: i32) -> (i32, i32) {
    %c0_i32 = arith.constant 0 : i32
    %c0_i32_0 = arith.constant 0 : i32
    %c0_i32_1 = arith.constant 0 : i32
    return %c0_i32, %c0_i32_0 : i32, i32
  }
  func.func @transform_15(%arg0: i32) -> (i32, i32) {
    %c0_i32 = arith.constant 0 : i32
    %c0_i32_0 = arith.constant 0 : i32
    %c0_i32_1 = arith.constant 0 : i32
    return %c0_i32, %c0_i32_0 : i32, i32
  }
}

</mosaic_0001>

<llo_original>
// kernel: _lambda_.1
$region0: #{_lambda_.1}
  #allocation0 [shape = 'u32[]', space=smem, size = 0x4, offset = 0x4, fixed_abs, tag = 'smem constant byte address 0x4 - core index']
  #allocation1 [shape = 'u32[144,128]{1,0:T(1,128)}', space=vmem, size = 0x12000, scoped, tag = 'internal scratch']
  #allocation2 [shape = 'f32[1,1]{1,0:T(1,128)S(1)}', space=vmem, size = 0x200, scoped, tag = 'scoped memory for _lambda_.1']
  %s0 = inlined_call_operand.hbm [shape: s32[2,8], index: 0, kind: input, shape index: {}]
  %s1 = inlined_call_operand.vmem [shape: f32[2,1], index: 1, kind: input, shape index: {}]
  %s2 = inlined_call_operand.vmem [shape: f32[16,32], index: 2, kind: input, shape index: {}]
  %s3 = inlined_call_operand.hbm [shape: f32[12,32,16], index: 3, kind: input, shape index: {}]
  %s4 = inlined_call_operand.vmem [shape: f32[12,16], index: 4, kind: input, shape index: {}]
  %s5 = inlined_call_operand.hbm [shape: f32[4,16,32], index: 5, kind: input, shape index: {}]
  %s6 = inlined_call_operand.hbm [shape: f32[12,32], index: 6, kind: input, shape index: {}]
  %s7 = inlined_call_operand.vmem [shape: f32[2,32,64], index: 7, kind: input, shape index: {}]
  %s8 = inlined_call_operand.vmem [shape: f32[2,64], index: 8, kind: input, shape index: {}]
  %s9 = inlined_call_operand.vmem [shape: f32[2,64,32], index: 9, kind: input, shape index: {}]
  %s10 = inlined_call_operand.hbm [shape: f32[3,32], index: 10, kind: input, shape index: {}]
  %s11 = inlined_call_operand.vmem [shape: f32[32,32], index: 11, kind: input, shape index: {}]
  %s12 = inlined_call_operand.vmem [shape: f32[32,1], index: 12, kind: input, shape index: {}]
  %s13 = inlined_call_operand.<no memory space> [shape: f32[1,1], index: 13, kind: input, shape index: {}]
  %s14 = inlined_call_operand.vmem [shape: f32[2,1], index: 14, kind: output, shape index: {0}]
  %s15 = inlined_call_operand.vmem [shape: f32[1,3], index: 15, kind: output, shape index: {1}]
  %16 = xla_tuple %s14, %s15
  %s17 = sld [smem:[#allocation0]]
  $region94: #{_lambda_.1} parent=0
    _
  %s19 = ssub.s32 1, %s17
  %s20 = scalar_select 0, %s19, %s17
  %v21 = vstv %s13
  %22 = vst [vmem:[#allocation2] sm:$0x1] %v21
  $region1: #{_lambda_.1} parent=0
    #allocation3 [shape = 'u8[1024]{0}', space=vmem, size = 0x400, scoped, tag = 'input window, operand 0, single buffered']
    #allocation4 [shape = 's32[1]{0}', space=sflag, size = 0x4, scoped, tag = 'scoped memory for _lambda_.1']
    #allocation5 [shape = 'u8[196608]{0}', space=vmem, size = 0x30000, scoped, tag = 'input window, operand 3, single buffered']
    #allocation6 [shape = 's32[1]{0}', space=sflag, size = 0x4, scoped, tag = 'scoped memory for _lambda_.1']
    #allocation7 [shape = 'u8[32768]{0}', space=vmem, size = 0x8000, scoped, tag = 'input window, operand 5, single buffered']
    #allocation8 [shape = 'u8[8192]{0}', space=vmem, size = 0x2000, scoped, tag = 'input window, operand 6, single buffered']
    #allocation9 [shape = 's32[1]{0}', space=sflag, size = 0x4, scoped, tag = 'scoped memory for _lambda_.1']
    #allocation10 [shape = 'u8[2048]{0}', space=vmem, size = 0x800, scoped, tag = 'input window, operand 10, single buffered']
    %23 = vsyncpa [#allocation4], 0
    %24 = vsyncpa [#allocation6], 0
    %25 = vsyncpa [#allocation9], 0
    // Predicated region
    $region2: #{_lambda_.1} parent=1 // pred_check
      _
    $region3: #{_lambda_.1} parent=1 // pred_check_branch
      %27 = sbr.rel (0) target = $region5
    $region4: #{_lambda_.1} parent=1 // pred_region
      %s29 = ssub.s32 32, 32
      %30 = vsyncadd [#allocation4], %s29
      %s32 = sshll.u32 [#allocation3], 4
      %s33 = int_to_ptr.vmem [resolvable:$true] %s32
      %35 = dma.hbm_to_vmem [thread:$0]  %s0, 32, %s33, [#allocation4]
    $region5: #{_lambda_.1} parent=1 // pred_fallthru
      _
    // Predicated region
    $region6: #{_lambda_.1} parent=1 // pred_check
      _
    $region7: #{_lambda_.1} parent=1 // pred_check_branch
      %37 = sbr.rel (0) target = $region9
    $region8: #{_lambda_.1} parent=1 // pred_region
      _
    $region9: #{_lambda_.1} parent=1 // pred_fallthru
      _
    // Predicated region
    $region10: #{_lambda_.1} parent=1 // pred_check
      _
    $region11: #{_lambda_.1} parent=1 // pred_check_branch
      %39 = sbr.rel (0) target = $region13
    $region12: #{_lambda_.1} parent=1 // pred_region
      _
    $region13: #{_lambda_.1} parent=1 // pred_fallthru
      _
    // Predicated region
    $region14: #{_lambda_.1} parent=1 // pred_check
      _
    $region15: #{_lambda_.1} parent=1 // pred_check_branch
      %41 = sbr.rel (0) target = $region17
    $region16: #{_lambda_.1} parent=1 // pred_region
      %s43 = ssub.s32 6144, 6144
      %44 = vsyncadd [#allocation6], %s43
      %s45 = sshll.u32 [#allocation5], 4
      %s46 = int_to_ptr.vmem [resolvable:$true] %s45
      %51 = dma.hbm_to_vmem [thread:$0]  %s3, 6144, %s46, [#allocation6], 128, 128, 8
    $region17: #{_lambda_.1} parent=1 // pred_fallthru
      _
    // Predicated region
    $region18: #{_lambda_.1} parent=1 // pred_check
      _
    $region19: #{_lambda_.1} parent=1 // pred_check_branch
      %53 = sbr.rel (0) target = $region21
    $region20: #{_lambda_.1} parent=1 // pred_region
      _
    $region21: #{_lambda_.1} parent=1 // pred_fallthru
      _
    // Predicated region
    $region22: #{_lambda_.1} parent=1 // pred_check
      _
    $region23: #{_lambda_.1} parent=1 // pred_check_branch
      %55 = sbr.rel (0) target = $region25
    $region24: #{_lambda_.1} parent=1 // pred_region
      %s57 = ssub.s32 1024, 1024
      %58 = vsyncadd [#allocation6], %s57
      %s59 = sshll.u32 [#allocation7], 4
      %s60 = int_to_ptr.vmem [resolvable:$true] %s59
      %65 = dma.hbm_to_vmem [thread:$0]  %s5, 1024, %s60, [#allocation6], 128, 128, 8
    $region25: #{_lambda_.1} parent=1 // pred_fallthru
      _
    // Predicated region
    $region26: #{_lambda_.1} parent=1 // pred_check
      _
    $region27: #{_lambda_.1} parent=1 // pred_check_branch
      %67 = sbr.rel (0) target = $region29
    $region28: #{_lambda_.1} parent=1 // pred_region
      %s69 = ssub.s32 256, 256
      %70 = vsyncadd [#allocation9], %s69
      %s71 = sshll.u32 [#allocation8], 4
      %s72 = int_to_ptr.vmem [resolvable:$true] %s71
      %77 = dma.hbm_to_vmem [thread:$0]  %s6, 256, %s72, [#allocation9], 128, 128, 8
    $region29: #{_lambda_.1} parent=1 // pred_fallthru
      _
    // Predicated region
    $region30: #{_lambda_.1} parent=1 // pred_check
      _
    $region31: #{_lambda_.1} parent=1 // pred_check_branch
      %79 = sbr.rel (0) target = $region33
    $region32: #{_lambda_.1} parent=1 // pred_region
      _
    $region33: #{_lambda_.1} parent=1 // pred_fallthru
      _
    // Predicated region
    $region34: #{_lambda_.1} parent=1 // pred_check
      _
    $region35: #{_lambda_.1} parent=1 // pred_check_branch
      %81 = sbr.rel (0) target = $region37
    $region36: #{_lambda_.1} parent=1 // pred_region
      _
    $region37: #{_lambda_.1} parent=1 // pred_fallthru
      _
    // Predicated region
    $region38: #{_lambda_.1} parent=1 // pred_check
      _
    $region39: #{_lambda_.1} parent=1 // pred_check_branch
      %83 = sbr.rel (0) target = $region41
    $region40: #{_lambda_.1} parent=1 // pred_region
      _
    $region41: #{_lambda_.1} parent=1 // pred_fallthru
      _
    // Predicated region
    $region42: #{_lambda_.1} parent=1 // pred_check
      _
    $region43: #{_lambda_.1} parent=1 // pred_check_branch
      %85 = sbr.rel (0) target = $region45
    $region44: #{_lambda_.1} parent=1 // pred_region
      %s87 = ssub.s32 64, 64
      %88 = vsyncadd [#allocation9], %s87
      %s90 = sshll.u32 [#allocation10], 4
      %s91 = int_to_ptr.vmem [resolvable:$true] %s90
      %93 = dma.hbm_to_vmem [thread:$0]  %s10, 64, %s91, [#allocation9]
    $region45: #{_lambda_.1} parent=1 // pred_fallthru
      _
    // Predicated region
    $region46: #{_lambda_.1} parent=1 // pred_check
      _
    $region47: #{_lambda_.1} parent=1 // pred_check_branch
      %95 = sbr.rel (0) target = $region49
    $region48: #{_lambda_.1} parent=1 // pred_region
      _
    $region49: #{_lambda_.1} parent=1 // pred_fallthru
      _
    // Predicated region
    $region50: #{_lambda_.1} parent=1 // pred_check
      _
    $region51: #{_lambda_.1} parent=1 // pred_check_branch
      %97 = sbr.rel (0) target = $region53
    $region52: #{_lambda_.1} parent=1 // pred_region
      _
    $region53: #{_lambda_.1} parent=1 // pred_fallthru
      _
    // Predicated region
    $region54: #{_lambda_.1} parent=1 // pred_check
      _
    $region55: #{_lambda_.1} parent=1 // pred_check_branch
      %99 = sbr.rel (0) target = $region57
    $region56: #{_lambda_.1} parent=1 // pred_region
      _
    $region57: #{_lambda_.1} parent=1 // pred_fallthru
      _
    // Predicated region
    $region58: #{_lambda_.1} parent=1 // pred_check
      _
    $region59: #{_lambda_.1} parent=1 // pred_check_branch
      %101 = sbr.rel (0) target = $region61
    $region60: #{_lambda_.1} parent=1 // pred_region
      %102 = dma.done [#allocation4], 32
    $region61: #{_lambda_.1} parent=1 // pred_fallthru
      _
    // Predicated region
    $region62: #{_lambda_.1} parent=1 // pred_check
      _
    $region63: #{_lambda_.1} parent=1 // pred_check_branch
      %104 = sbr.rel (0) target = $region65
    $region64: #{_lambda_.1} parent=1 // pred_region
      %105 = dma.done [#allocation6], 6144
    $region65: #{_lambda_.1} parent=1 // pred_fallthru
      _
    // Predicated region
    $region66: #{_lambda_.1} parent=1 // pred_check
      _
    $region67: #{_lambda_.1} parent=1 // pred_check_branch
      %107 = sbr.rel (0) target = $region69
    $region68: #{_lambda_.1} parent=1 // pred_region
      %108 = dma.done [#allocation6], 1024
    $region69: #{_lambda_.1} parent=1 // pred_fallthru
      _
    // Predicated region
    $region70: #{_lambda_.1} parent=1 // pred_check
      _
    $region71: #{_lambda_.1} parent=1 // pred_check_branch
      %110 = sbr.rel (0) target = $region73
    $region72: #{_lambda_.1} parent=1 // pred_region
      %111 = dma.done [#allocation9], 256
    $region73: #{_lambda_.1} parent=1 // pred_fallthru
      _
    // Predicated region
    $region74: #{_lambda_.1} parent=1 // pred_check
      _
    $region75: #{_lambda_.1} parent=1 // pred_check_branch
      %113 = sbr.rel (0) target = $region77
    $region76: #{_lambda_.1} parent=1 // pred_region
      %114 = dma.done [#allocation9], 64
    $region77: #{_lambda_.1} parent=1 // pred_fallthru
      _
    %v115 = vld [vmem:[#allocation10] sm:$0x7]
    %v116 = vld [vmem:[%s4] sm:$0xff]
    %v117 = vld [vmem:[%s4 + $0x8] sm:$0xf]
    %v118 = vld [vmem:[#allocation8] sm:$0xff]
    %v119 = vld [vmem:[#allocation8 + $0x8] sm:$0xf]
    %v120 = vld [vmem:[%s8] sm:$0x3]
    %v121 = vld [vmem:[%s2] sm:$0xff]
    %v122 = vld [vmem:[%s2 + $0x8] sm:$0xff]
    %vm123 = vcmask 261120
    %v124 = vsel %vm123, %v121, 0.0
    %125 = vadd.xlane.f32.xlu0 %v124
    %v126 = vpop.xlane.xlu0 %125
    %v127 = vsel %vm123, %v122, 0.0
    %128 = vadd.xlane.f32.xlu0 %v127
    %v129 = vpop.xlane.xlu0 %128
    %v130 = vrcp.pop 32.0
    %v131 = vmul.f32 %v126, %v130
    %v132 = vmul.f32 %v129, %v130
    %v133 = vsub.f32 %v121, %v131
    %v134 = vsub.f32 %v122, %v132
    %v135 = vmul.f32 %v133, %v133
    %v136 = vmul.f32 %v134, %v134
    %v137 = vsel %vm123, %v135, 0.0
    %138 = vadd.xlane.f32.xlu0 %v137
    %v139 = vpop.xlane.xlu0 %138
    %v140 = vsel %vm123, %v136, 0.0
    %141 = vadd.xlane.f32.xlu0 %v140
    %v142 = vpop.xlane.xlu0 %141
    %v143 = vmul.f32 %v139, %v130
    %v144 = vmul.f32 %v142, %v130
    %v145 = vadd.f32 %v143, 1e-12
    %v146 = vadd.f32 %v144, 1e-12
    %v147 = vrsqrt.pop %v145
    %v148 = vrsqrt.pop %v146
    %v149 = vmul.f32 %v133, %v147
    %v150 = vmul.f32 %v134, %v148
    %v151 = vlaneseq
    %v152 = vshrl.u32 %v151, 7
    %v153 = vsub.s32 0, %v152
    %v154 = vrot.slane %v115, %v153
    %v155 = vmul.f32 %v149, %v154
    %v156 = vmul.f32 %v150, %v154
    %v157 = vlaneseq
    %v158 = vshrl.u32 %v157, 7
    %v159 = vsub.s32 1, %v158
    %v160 = vrot.slane %v115, %v159
    %v161 = vadd.f32 %v155, %v160
    %v162 = vadd.f32 %v156, %v160
    %v163 = vld [vmem:[#allocation5] sm:$0xff]
    %v164 = vld [vmem:[#allocation5 + $0x8] sm:$0xff]
    %v165 = vld [vmem:[#allocation5 + $0x10] sm:$0xff]
    %v166 = vld [vmem:[#allocation5 + $0x18] sm:$0xff]
    %v167 = vlaneseq
    %v168 = vshrl.u32 %v167, 7
    %v169 = vsub.s32 0, %v168
    %v170 = vrot.slane %v116, %v169
    %v172 = vsel %vm123, %v161, 0
    %v175 = vsel %vm123, %v162, 0
    %177 = vmatprep.subr.mxu0 0.0
    %178 = vmatpush1.msra.mxu0 %v163
    %179 = vmatprep.subr.mxu0 0.0
    %180 = vmatpush1.msra.mxu0 %v164
    %181 = vmatprep.subr.mxu0 0.0
    %182 = vmatpush1.msra.mxu0 %v165
    %183 = vmatprep.subr.mxu0 0.0
    %184 = vmatpush1.msra.mxu0 %v166
    %185 = vmatprep.subr.mxu0 0.0
    %186 = vmatpush1.msra.mxu0 0.0
    %187 = vmatprep.subr.mxu0 0.0
    %188 = vmatpush1.msra.mxu0 0.0
    %189 = vmatprep.subr.mxu0 0.0
    %190 = vmatpush1.msra.mxu0 0.0
    %191 = vmatprep.subr.mxu0 0.0
    %192 = vmatpush1.msra.mxu0 0.0
    %193 = vmatprep.subr.mxu0 0.0
    %194 = vmatpush1.msra.mxu0 0.0
    %195 = vmatprep.subr.mxu0 0.0
    %196 = vmatpush1.msra.mxu0 0.0
    %197 = vmatprep.subr.mxu0 0.0
    %198 = vmatpush1.msra.mxu0 0.0
    %199 = vmatprep.subr.mxu0 0.0
    %200 = vmatpush1.msra.mxu0 0.0
    %201 = vmatprep.subr.mxu0 0.0
    %202 = vmatpush1.msra.mxu0 0.0
    %203 = vmatprep.subr.mxu0 0.0
    %204 = vmatpush1.msra.mxu0 0.0
    %205 = vmatprep.subr.mxu0 0.0
    %206 = vmatpush1.msra.mxu0 0.0
    %207 = vmatprep.subr.mxu0 0.0
    %208 = vmatpush1.msra.mxu0 0.0
    %209 = vmatprep.subr.mxu0 0.0
    %210 = vmatpush1.msra.mxu0 0.0
    %211 = vmatprep.subr.mxu0 0.0
    %212 = vmatpush1.msra.mxu0 0.0
    %213 = vmatprep.subr.mxu0 0.0
    %214 = vmatpush1.msra.mxu0 0.0
    %215 = vmatprep.subr.mxu0 0.0
    %216 = vmatpush1.msra.mxu0 0.0
    %217 = vmatprep.subr.mxu0 0.0
    %218 = vmatpush1.msra.mxu0 0.0
    %219 = vmatprep.subr.mxu0 0.0
    %220 = vmatpush1.msra.mxu0 0.0
    %221 = vmatprep.subr.mxu0 0.0
    %222 = vmatpush1.msra.mxu0 0.0
    %223 = vmatprep.subr.mxu0 0.0
    %224 = vmatpush1.msra.mxu0 0.0
    %225 = vmatprep.subr.mxu0 0.0
    %226 = vmatpush1.msra.mxu0 0.0
    %227 = vmatprep.subr.mxu0 0.0
    %228 = vmatpush1.msra.mxu0 0.0
    %229 = vmatprep.subr.mxu0 0.0
    %230 = vmatpush1.msra.mxu0 0.0
    %231 = vmatprep.subr.mxu0 0.0
    %232 = vmatpush1.msra.mxu0 0.0
    %233 = vmatprep.subr.mxu0 0.0
    %234 = vmatpush1.msra.mxu0 0.0
    %235 = vmatprep.subr.mxu0 0.0
    %236 = vmatpush1.msra.mxu0 0.0
    %237 = vmatprep.subr.mxu0 0.0
    %238 = vmatpush1.msra.mxu0 0.0
    %239 = vmatprep.subr.mxu0 0.0
    %240 = vmatpush1.msra.mxu0 0.0
    %241 = vmatprep.mubr.f32.mxu0 0.0
    %242 = vmatmul.mubr.f32.gmra.mrb[0].mxu0 %v172
    %v243 = vpop.f32.mrb[0].mxu0
    %v244 = vadd.f32 %v170, %v243
    %v245 = vpop.f32.mrb[0].mxu0
    %246 = vmatprep.mubr.f32.mxu0 0.0
    %247 = vmatmul.mubr.f32.gmra.mrb[0].mxu0 %v175
    %v248 = vpop.f32.mrb[0].mxu0
    %v249 = vadd.f32 %v170, %v248
    %v250 = vpop.f32.mrb[0].mxu0
    %251 = vdwg.mxu0
    %s252 = scalar_lea.vmem [#allocation5], 64
    %v253 = vld [vmem:[%s252] sm:$0xff]
    %v254 = vld [vmem:[%s252 + $0x8] sm:$0xff]
    %v255 = vld [vmem:[%s252 + $0x10] sm:$0xff]
    %v256 = vld [vmem:[%s252 + $0x18] sm:$0xff]
    %v257 = vlaneseq
    %v258 = vshrl.u32 %v257, 7
    %v259 = vsub.s32 2, %v258
    %v260 = vrot.slane %v116, %v259
    %261 = vmatprep.subr.mxu0 0.0
    %262 = vmatpush1.msra.mxu0 %v253
    %263 = vmatprep.subr.mxu0 0.0
    %264 = vmatpush1.msra.mxu0 %v254
    %265 = vmatprep.subr.mxu0 0.0
    %266 = vmatpush1.msra.mxu0 %v255
    %267 = vmatprep.subr.mxu0 0.0
    %268 = vmatpush1.msra.mxu0 %v256
    %269 = vmatprep.subr.mxu0 0.0
    %270 = vmatpush1.msra.mxu0 0.0
    %271 = vmatprep.subr.mxu0 0.0
    %272 = vmatpush1.msra.mxu0 0.0
    %273 = vmatprep.subr.mxu0 0.0
    %274 = vmatpush1.msra.mxu0 0.0
    %275 = vmatprep.subr.mxu0 0.0
    %276 = vmatpush1.msra.mxu0 0.0
    %277 = vmatprep.subr.mxu0 0.0
    %278 = vmatpush1.msra.mxu0 0.0
    %279 = vmatprep.subr.mxu0 0.0
    %280 = vmatpush1.msra.mxu0 0.0
    %281 = vmatprep.subr.mxu0 0.0
    %282 = vmatpush1.msra.mxu0 0.0
    %283 = vmatprep.subr.mxu0 0.0
    %284 = vmatpush1.msra.mxu0 0.0
    %285 = vmatprep.subr.mxu0 0.0
    %286 = vmatpush1.msra.mxu0 0.0
    %287 = vmatprep.subr.mxu0 0.0
    %288 = vmatpush1.msra.mxu0 0.0
    %289 = vmatprep.subr.mxu0 0.0
    %290 = vmatpush1.msra.mxu0 0.0
    %291 = vmatprep.subr.mxu0 0.0
    %292 = vmatpush1.msra.mxu0 0.0
    %293 = vmatprep.subr.mxu0 0.0
    %294 = vmatpush1.msra.mxu0 0.0
    %295 = vmatprep.subr.mxu0 0.0
    %296 = vmatpush1.msra.mxu0 0.0
    %297 = vmatprep.subr.mxu0 0.0
    %298 = vmatpush1.msra.mxu0 0.0
    %299 = vmatprep.subr.mxu0 0.0
    %300 = vmatpush1.msra.mxu0 0.0
    %301 = vmatprep.subr.mxu0 0.0
    %302 = vmatpush1.msra.mxu0 0.0
    %303 = vmatprep.subr.mxu0 0.0
    %304 = vmatpush1.msra.mxu0 0.0
    %305 = vmatprep.subr.mxu0 0.0
    %306 = vmatpush1.msra.mxu0 0.0
    %307 = vmatprep.subr.mxu0 0.0
    %308 = vmatpush1.msra.mxu0 0.0
    %309 = vmatprep.subr.mxu0 0.0
    %310 = vmatpush1.msra.mxu0 0.0
    %311 = vmatprep.subr.mxu0 0.0
    %312 = vmatpush1.msra.mxu0 0.0
    %313 = vmatprep.subr.mxu0 0.0
    %314 = vmatpush1.msra.mxu0 0.0
    %315 = vmatprep.subr.mxu0 0.0
    %316 = vmatpush1.msra.mxu0 0.0
    %317 = vmatprep.subr.mxu0 0.0
    %318 = vmatpush1.msra.mxu0 0.0
    %319 = vmatprep.subr.mxu0 0.0
    %320 = vmatpush1.msra.mxu0 0.0
    %321 = vmatprep.subr.mxu0 0.0
    %322 = vmatpush1.msra.mxu0 0.0
    %323 = vmatprep.subr.mxu0 0.0
    %324 = vmatpush1.msra.mxu0 0.0
    %325 = vmatprep.mubr.f32.mxu0 0.0
    %326 = vmatmul.mubr.f32.gmra.mrb[0].mxu0 %v172
    %v327 = vpop.f32.mrb[0].mxu0
    %v328 = vadd.f32 %v260, %v327
    %v329 = vpop.f32.mrb[0].mxu0
    %330 = vmatprep.mubr.f32.mxu0 0.0
    %331 = vmatmul.mubr.f32.gmra.mrb[0].mxu0 %v175
    %v332 = vpop.f32.mrb[0].mxu0
    %v333 = vadd.f32 %v260, %v332
    %v334 = vpop.f32.mrb[0].mxu0
    %335 = vdwg.mxu0
    %s336 = scalar_lea.vmem [#allocation5], 128
    %v337 = vld [vmem:[%s336] sm:$0xff]
    %v338 = vld [vmem:[%s336 + $0x8] sm:$0xff]
    %v339 = vld [vmem:[%s336 + $0x10] sm:$0xff]
    %v340 = vld [vmem:[%s336 + $0x18] sm:$0xff]
    %v341 = vlaneseq
    %v342 = vshrl.u32 %v341, 7
    %v343 = vsub.s32 4, %v342
    %v344 = vrot.slane %v116, %v343
    %345 = vmatprep.subr.mxu0 0.0
    %346 = vmatpush1.msra.mxu0 %v337
    %347 = vmatprep.subr.mxu0 0.0
    %348 = vmatpush1.msra.mxu0 %v338
    %349 = vmatprep.subr.mxu0 0.0
    %350 = vmatpush1.msra.mxu0 %v339
    %351 = vmatprep.subr.mxu0 0.0
    %352 = vmatpush1.msra.mxu0 %v340
    %353 = vmatprep.subr.mxu0 0.0
    %354 = vmatpush1.msra.mxu0 0.0
    %355 = vmatprep.subr.mxu0 0.0
    %356 = vmatpush1.msra.mxu0 0.0
    %357 = vmatprep.subr.mxu0 0.0
    %358 = vmatpush1.msra.mxu0 0.0
    %359 = vmatprep.subr.mxu0 0.0
    %360 = vmatpush1.msra.mxu0 0.0
    %361 = vmatprep.subr.mxu0 0.0
    %362 = vmatpush1.msra.mxu0 0.0
    %363 = vmatprep.subr.mxu0 0.0
    %364 = vmatpush1.msra.mxu0 0.0
    %365 = vmatprep.subr.mxu0 0.0
    %366 = vmatpush1.msra.mxu0 0.0
    %367 = vmatprep.subr.mxu0 0.0
    %368 = vmatpush1.msra.mxu0 0.0
    %369 = vmatprep.subr.mxu0 0.0
    %370 = vmatpush1.msra.mxu0 0.0
    %371 = vmatprep.subr.mxu0 0.0
    %372 = vmatpush1.msra.mxu0 0.0
    %373 = vmatprep.subr.mxu0 0.0
    %374 = vmatpush1.msra.mxu0 0.0
    %375 = vmatprep.subr.mxu0 0.0
    %376 = vmatpush1.msra.mxu0 0.0
    %377 = vmatprep.subr.mxu0 0.0
    %378 = vmatpush1.msra.mxu0 0.0
    %379 = vmatprep.subr.mxu0 0.0
    %380 = vmatpush1.msra.mxu0 0.0
    %381 = vmatprep.subr.mxu0 0.0
    %382 = vmatpush1.msra.mxu0 0.0
    %383 = vmatprep.subr.mxu0 0.0
    %384 = vmatpush1.msra.mxu0 0.0
    %385 = vmatprep.subr.mxu0 0.0
    %386 = vmatpush1.msra.mxu0 0.0
    %387 = vmatprep.subr.mxu0 0.0
    %388 = vmatpush1.msra.mxu0 0.0
    %389 = vmatprep.subr.mxu0 0.0
    %390 = vmatpush1.msra.mxu0 0.0
    %391 = vmatprep.subr.mxu0 0.0
    %392 = vmatpush1.msra.mxu0 0.0
    %393 = vmatprep.subr.mxu0 0.0
    %394 = vmatpush1.msra.mxu0 0.0
    %395 = vmatprep.subr.mxu0 0.0
    %396 = vmatpush1.msra.mxu0 0.0
    %397 = vmatprep.subr.mxu0 0.0
    %398 = vmatpush1.msra.mxu0 0.0
    %399 = vmatprep.subr.mxu0 0.0
    %400 = vmatpush1.msra.mxu0 0.0
    %401 = vmatprep.subr.mxu0 0.0
    %402 = vmatpush1.msra.mxu0 0.0
    %403 = vmatprep.subr.mxu0 0.0
    %404 = vmatpush1.msra.mxu0 0.0
    %405 = vmatprep.subr.mxu0 0.0
    %406 = vmatpush1.msra.mxu0 0.0
    %407 = vmatprep.subr.mxu0 0.0
    %408 = vmatpush1.msra.mxu0 0.0
    %409 = vmatprep.mubr.f32.mxu0 0.0
    %410 = vmatmul.mubr.f32.gmra.mrb[0].mxu0 %v172
    %v411 = vpop.f32.mrb[0].mxu0
    %v412 = vadd.f32 %v344, %v411
    %v413 = vpop.f32.mrb[0].mxu0
    %414 = vmatprep.mubr.f32.mxu0 0.0
    %415 = vmatmul.mubr.f32.gmra.mrb[0].mxu0 %v175
    %v416 = vpop.f32.mrb[0].mxu0
    %v417 = vadd.f32 %v344, %v416
    %v418 = vpop.f32.mrb[0].mxu0
    %419 = vdwg.mxu0
    %vm420 = vcmask 130048
    %v422 = vsel %vm420, %v244, 0
    %v425 = vsel %vm420, %v328, 0
    %427 = vmatprep.subr.mxu0 0.0
    %428 = vmatpush1.xpose.msra.mxu0 %v425
    %429 = vmatprep.subr.mxu0 0.0
    %430 = vmatpush1.xpose.msra.mxu0 0.0
    %431 = vmatprep.subr.mxu0 0.0
    %432 = vmatpush1.xpose.msra.mxu0 0.0
    %433 = vmatprep.subr.mxu0 0.0
    %434 = vmatpush1.xpose.msra.mxu0 0.0
    %435 = vmatprep.subr.mxu0 0.0
    %436 = vmatpush1.xpose.msra.mxu0 0.0
    %437 = vmatprep.subr.mxu0 0.0
    %438 = vmatpush1.xpose.msra.mxu0 0.0
    %439 = vmatprep.subr.mxu0 0.0
    %440 = vmatpush1.xpose.msra.mxu0 0.0
    %441 = vmatprep.subr.mxu0 0.0
    %442 = vmatpush1.xpose.msra.mxu0 0.0
    %443 = vmatprep.subr.mxu0 0.0
    %444 = vmatpush1.xpose.msra.mxu0 0.0
    %445 = vmatprep.subr.mxu0 0.0
    %446 = vmatpush1.xpose.msra.mxu0 0.0
    %447 = vmatprep.subr.mxu0 0.0
    %448 = vmatpush1.xpose.msra.mxu0 0.0
    %449 = vmatprep.subr.mxu0 0.0
    %450 = vmatpush1.xpose.msra.mxu0 0.0
    %451 = vmatprep.subr.mxu0 0.0
    %452 = vmatpush1.xpose.msra.mxu0 0.0
    %453 = vmatprep.subr.mxu0 0.0
    %454 = vmatpush1.xpose.msra.mxu0 0.0
    %455 = vmatprep.subr.mxu0 0.0
    %456 = vmatpush1.xpose.msra.mxu0 0.0
    %457 = vmatprep.subr.mxu0 0.0
    %458 = vmatpush1.xpose.msra.mxu0 0.0
    %459 = vmatprep.subr.mxu0 0.0
    %460 = vmatpush1.xpose.msra.mxu0 0.0
    %461 = vmatprep.subr.mxu0 0.0
    %462 = vmatpush1.xpose.msra.mxu0 0.0
    %463 = vmatprep.subr.mxu0 0.0
    %464 = vmatpush1.xpose.msra.mxu0 0.0
    %465 = vmatprep.subr.mxu0 0.0
    %466 = vmatpush1.xpose.msra.mxu0 0.0
    %467 = vmatprep.subr.mxu0 0.0
    %468 = vmatpush1.xpose.msra.mxu0 0.0
    %469 = vmatprep.subr.mxu0 0.0
    %470 = vmatpush1.xpose.msra.mxu0 0.0
    %471 = vmatprep.subr.mxu0 0.0
    %472 = vmatpush1.xpose.msra.mxu0 0.0
    %473 = vmatprep.subr.mxu0 0.0
    %474 = vmatpush1.xpose.msra.mxu0 0.0
    %475 = vmatprep.subr.mxu0 0.0
    %476 = vmatpush1.xpose.msra.mxu0 0.0
    %477 = vmatprep.subr.mxu0 0.0
    %478 = vmatpush1.xpose.msra.mxu0 0.0
    %479 = vmatprep.subr.mxu0 0.0
    %480 = vmatpush1.xpose.msra.mxu0 0.0
    %481 = vmatprep.subr.mxu0 0.0
    %482 = vmatpush1.xpose.msra.mxu0 0.0
    %483 = vmatprep.subr.mxu0 0.0
    %484 = vmatpush1.xpose.msra.mxu0 0.0
    %485 = vmatprep.subr.mxu0 0.0
    %486 = vmatpush1.xpose.msra.mxu0 0.0
    %487 = vmatprep.subr.mxu0 0.0
    %488 = vmatpush1.xpose.msra.mxu0 0.0
    %489 = vmatprep.subr.mxu0 0.0
    %490 = vmatpush1.xpose.msra.mxu0 0.0
    %491 = vmatprep.mubr.f32.mxu0 0.0
    %492 = vmatmul.mubr.f32.gmra.mrb[0].mxu0 %v422
    %v493 = vpop.f32.mrb[0].mxu0
    %v494 = vadd.f32 0.0, %v493
    %v495 = vpop.f32.mrb[0].mxu0
    %496 = vdwg.mxu0
    %v498 = vsel %vm420, %v249, 0
    %v501 = vsel %vm420, %v333, 0
    %503 = vmatprep.subr.mxu0 0.0
    %504 = vmatpush1.xpose.msra.mxu0 %v501
    %505 = vmatprep.subr.mxu0 0.0
    %506 = vmatpush1.xpose.msra.mxu0 0.0
    %507 = vmatprep.subr.mxu0 0.0
    %508 = vmatpush1.xpose.msra.mxu0 0.0
    %509 = vmatprep.subr.mxu0 0.0
    %510 = vmatpush1.xpose.msra.mxu0 0.0
    %511 = vmatprep.subr.mxu0 0.0
    %512 = vmatpush1.xpose.msra.mxu0 0.0
    %513 = vmatprep.subr.mxu0 0.0
    %514 = vmatpush1.xpose.msra.mxu0 0.0
    %515 = vmatprep.subr.mxu0 0.0
    %516 = vmatpush1.xpose.msra.mxu0 0.0
    %517 = vmatprep.subr.mxu0 0.0
    %518 = vmatpush1.xpose.msra.mxu0 0.0
    %519 = vmatprep.subr.mxu0 0.0
    %520 = vmatpush1.xpose.msra.mxu0 0.0
    %521 = vmatprep.subr.mxu0 0.0
    %522 = vmatpush1.xpose.msra.mxu0 0.0
    %523 = vmatprep.subr.mxu0 0.0
    %524 = vmatpush1.xpose.msra.mxu0 0.0
    %525 = vmatprep.subr.mxu0 0.0
    %526 = vmatpush1.xpose.msra.mxu0 0.0
    %527 = vmatprep.subr.mxu0 0.0
    %528 = vmatpush1.xpose.msra.mxu0 0.0
    %529 = vmatprep.subr.mxu0 0.0
    %530 = vmatpush1.xpose.msra.mxu0 0.0
    %531 = vmatprep.subr.mxu0 0.0
    %532 = vmatpush1.xpose.msra.mxu0 0.0
    %533 = vmatprep.subr.mxu0 0.0
    %534 = vmatpush1.xpose.msra.mxu0 0.0
    %535 = vmatprep.subr.mxu0 0.0
    %536 = vmatpush1.xpose.msra.mxu0 0.0
    %537 = vmatprep.subr.mxu0 0.0
    %538 = vmatpush1.xpose.msra.mxu0 0.0
    %539 = vmatprep.subr.mxu0 0.0
    %540 = vmatpush1.xpose.msra.mxu0 0.0
    %541 = vmatprep.subr.mxu0 0.0
    %542 = vmatpush1.xpose.msra.mxu0 0.0
    %543 = vmatprep.subr.mxu0 0.0
    %544 = vmatpush1.xpose.msra.mxu0 0.0
    %545 = vmatprep.subr.mxu0 0.0
    %546 = vmatpush1.xpose.msra.mxu0 0.0
    %547 = vmatprep.subr.mxu0 0.0
    %548 = vmatpush1.xpose.msra.mxu0 0.0
    %549 = vmatprep.subr.mxu0 0.0
    %550 = vmatpush1.xpose.msra.mxu0 0.0
    %551 = vmatprep.subr.mxu0 0.0
    %552 = vmatpush1.xpose.msra.mxu0 0.0
    %553 = vmatprep.subr.mxu0 0.0
    %554 = vmatpush1.xpose.msra.mxu0 0.0
    %555 = vmatprep.subr.mxu0 0.0
    %556 = vmatpush1.xpose.msra.mxu0 0.0
    %557 = vmatprep.subr.mxu0 0.0
    %558 = vmatpush1.xpose.msra.mxu0 0.0
    %559 = vmatprep.subr.mxu0 0.0
    %560 = vmatpush1.xpose.msra.mxu0 0.0
    %561 = vmatprep.subr.mxu0 0.0
    %562 = vmatpush1.xpose.msra.mxu0 0.0
    %563 = vmatprep.subr.mxu0 0.0
    %564 = vmatpush1.xpose.msra.mxu0 0.0
    %565 = vmatprep.subr.mxu0 0.0
    %566 = vmatpush1.xpose.msra.mxu0 0.0
    %567 = vmatprep.mubr.f32.mxu0 0.0
    %568 = vmatmul.mubr.f32.gmra.mrb[0].mxu0 %v498
    %v569 = vpop.f32.mrb[0].mxu0
    %v570 = vadd.f32 0.0, %v569
    %v571 = vpop.f32.mrb[0].mxu0
    %572 = vdwg.mxu0
    %v573 = vmul.f32 %v494, 0.25
    %v574 = vmul.f32 %v570, 0.25
    %vm575 = vcmask 64512
    %v576 = vsel %vm575, %v573, -inf
    %577 = vmax.xlane.f32.xlu0 %v576
    %v578 = vpop.xlane.xlu0 %577
    %v579 = vsel %vm575, %v574, -inf
    %580 = vmax.xlane.f32.xlu0 %v579
    %v581 = vpop.xlane.xlu0 %580
    %v582 = vsub.f32 %v573, %v578
    %v583 = vsub.f32 %v574, %v581
    %v584 = vmul.f32 %v582, 1.442695
    %v585 = vpow.pop %v584
    %v586 = vmul.f32 %v583, 1.442695
    %v587 = vpow.pop %v586
    %v588 = vsel %vm575, %v585, 0.0
    %589 = vadd.xlane.f32.xlu0 %v588
    %v590 = vpop.xlane.xlu0 %589
    %v591 = vsel %vm575, %v587, 0.0
    %592 = vadd.xlane.f32.xlu0 %v591
    %v593 = vpop.xlane.xlu0 %592
    %v594 = vrcp.pop %v590
    %v595 = vrcp.pop %v593
    %v596 = vmul.f32 %v585, %v594
    %v597 = vmul.f32 %v587, %v595
    %v599 = vsel %vm575, %v596, 0
    %601 = vmatprep.subr.mxu0 0.0
    %602 = vmatpush1.msra.mxu0 %v412
    %603 = vmatprep.subr.mxu0 0.0
    %604 = vmatpush1.msra.mxu0 0.0
    %605 = vmatprep.subr.mxu0 0.0
    %606 = vmatpush1.msra.mxu0 0.0
    %607 = vmatprep.subr.mxu0 0.0
    %608 = vmatpush1.msra.mxu0 0.0
    %609 = vmatprep.subr.mxu0 0.0
    %610 = vmatpush1.msra.mxu0 0.0
    %611 = vmatprep.subr.mxu0 0.0
    %612 = vmatpush1.msra.mxu0 0.0
    %613 = vmatprep.subr.mxu0 0.0
    %614 = vmatpush1.msra.mxu0 0.0
    %615 = vmatprep.subr.mxu0 0.0
    %616 = vmatpush1.msra.mxu0 0.0
    %617 = vmatprep.subr.mxu0 0.0
    %618 = vmatpush1.msra.mxu0 0.0
    %619 = vmatprep.subr.mxu0 0.0
    %620 = vmatpush1.msra.mxu0 0.0
    %621 = vmatprep.subr.mxu0 0.0
    %622 = vmatpush1.msra.mxu0 0.0
    %623 = vmatprep.subr.mxu0 0.0
    %624 = vmatpush1.msra.mxu0 0.0
    %625 = vmatprep.subr.mxu0 0.0
    %626 = vmatpush1.msra.mxu0 0.0
    %627 = vmatprep.subr.mxu0 0.0
    %628 = vmatpush1.msra.mxu0 0.0
    %629 = vmatprep.subr.mxu0 0.0
    %630 = vmatpush1.msra.mxu0 0.0
    %631 = vmatprep.subr.mxu0 0.0
    %632 = vmatpush1.msra.mxu0 0.0
    %633 = vmatprep.subr.mxu0 0.0
    %634 = vmatpush1.msra.mxu0 0.0
    %635 = vmatprep.subr.mxu0 0.0
    %636 = vmatpush1.msra.mxu0 0.0
    %637 = vmatprep.subr.mxu0 0.0
    %638 = vmatpush1.msra.mxu0 0.0
    %639 = vmatprep.subr.mxu0 0.0
    %640 = vmatpush1.msra.mxu0 0.0
    %641 = vmatprep.subr.mxu0 0.0
    %642 = vmatpush1.msra.mxu0 0.0
    %643 = vmatprep.subr.mxu0 0.0
    %644 = vmatpush1.msra.mxu0 0.0
    %645 = vmatprep.subr.mxu0 0.0
    %646 = vmatpush1.msra.mxu0 0.0
    %647 = vmatprep.subr.mxu0 0.0
    %648 = vmatpush1.msra.mxu0 0.0
    %649 = vmatprep.subr.mxu0 0.0
    %650 = vmatpush1.msra.mxu0 0.0
    %651 = vmatprep.subr.mxu0 0.0
    %652 = vmatpush1.msra.mxu0 0.0
    %653 = vmatprep.subr.mxu0 0.0
    %654 = vmatpush1.msra.mxu0 0.0
    %655 = vmatprep.subr.mxu0 0.0
    %656 = vmatpush1.msra.mxu0 0.0
    %657 = vmatprep.subr.mxu0 0.0
    %658 = vmatpush1.msra.mxu0 0.0
    %659 = vmatprep.subr.mxu0 0.0
    %660 = vmatpush1.msra.mxu0 0.0
    %661 = vmatprep.subr.mxu0 0.0
    %662 = vmatpush1.msra.mxu0 0.0
    %663 = vmatprep.subr.mxu0 0.0
    %664 = vmatpush1.msra.mxu0 0.0
    %665 = vmatprep.mubr.f32.mxu0 0.0
    %666 = vmatmul.mubr.f32.gmra.mrb[0].mxu0 %v599
    %v667 = vpop.f32.mrb[0].mxu0
    %v668 = vadd.f32 0.0, %v667
    %v669 = vpop.f32.mrb[0].mxu0
    %670 = vdwg.mxu0
    %v672 = vsel %vm575, %v597, 0
    %674 = vmatprep.subr.mxu0 0.0
    %675 = vmatpush1.msra.mxu0 %v417
    %676 = vmatprep.subr.mxu0 0.0
    %677 = vmatpush1.msra.mxu0 0.0
    %678 = vmatprep.subr.mxu0 0.0
    %679 = vmatpush1.msra.mxu0 0.0
    %680 = vmatprep.subr.mxu0 0.0
    %681 = vmatpush1.msra.mxu0 0.0
    %682 = vmatprep.subr.mxu0 0.0
    %683 = vmatpush1.msra.mxu0 0.0
    %684 = vmatprep.subr.mxu0 0.0
    %685 = vmatpush1.msra.mxu0 0.0
    %686 = vmatprep.subr.mxu0 0.0
    %687 = vmatpush1.msra.mxu0 0.0
    %688 = vmatprep.subr.mxu0 0.0
    %689 = vmatpush1.msra.mxu0 0.0
    %690 = vmatprep.subr.mxu0 0.0
    %691 = vmatpush1.msra.mxu0 0.0
    %692 = vmatprep.subr.mxu0 0.0
    %693 = vmatpush1.msra.mxu0 0.0
    %694 = vmatprep.subr.mxu0 0.0
    %695 = vmatpush1.msra.mxu0 0.0
    %696 = vmatprep.subr.mxu0 0.0
    %697 = vmatpush1.msra.mxu0 0.0
    %698 = vmatprep.subr.mxu0 0.0
    %699 = vmatpush1.msra.mxu0 0.0
    %700 = vmatprep.subr.mxu0 0.0
    %701 = vmatpush1.msra.mxu0 0.0
    %702 = vmatprep.subr.mxu0 0.0
    %703 = vmatpush1.msra.mxu0 0.0
    %704 = vmatprep.subr.mxu0 0.0
    %705 = vmatpush1.msra.mxu0 0.0
    %706 = vmatprep.subr.mxu0 0.0
    %707 = vmatpush1.msra.mxu0 0.0
    %708 = vmatprep.subr.mxu0 0.0
    %709 = vmatpush1.msra.mxu0 0.0
    %710 = vmatprep.subr.mxu0 0.0
    %711 = vmatpush1.msra.mxu0 0.0
    %712 = vmatprep.subr.mxu0 0.0
    %713 = vmatpush1.msra.mxu0 0.0
    %714 = vmatprep.subr.mxu0 0.0
    %715 = vmatpush1.msra.mxu0 0.0
    %716 = vmatprep.subr.mxu0 0.0
    %717 = vmatpush1.msra.mxu0 0.0
    %718 = vmatprep.subr.mxu0 0.0
    %719 = vmatpush1.msra.mxu0 0.0
    %720 = vmatprep.subr.mxu0 0.0
    %721 = vmatpush1.msra.mxu0 0.0
    %722 = vmatprep.subr.mxu0 0.0
    %723 = vmatpush1.msra.mxu0 0.0
    %724 = vmatprep.subr.mxu0 0.0
    %725 = vmatpush1.msra.mxu0 0.0
    %726 = vmatprep.subr.mxu0 0.0
    %727 = vmatpush1.msra.mxu0 0.0
    %728 = vmatprep.subr.mxu0 0.0
    %729 = vmatpush1.msra.mxu0 0.0
    %730 = vmatprep.subr.mxu0 0.0
    %731 = vmatpush1.msra.mxu0 0.0
    %732 = vmatprep.subr.mxu0 0.0
    %733 = vmatpush1.msra.mxu0 0.0
    %734 = vmatprep.subr.mxu0 0.0
    %735 = vmatpush1.msra.mxu0 0.0
    %736 = vmatprep.subr.mxu0 0.0
    %737 = vmatpush1.msra.mxu0 0.0
    %738 = vmatprep.mubr.f32.mxu0 0.0
    %739 = vmatmul.mubr.f32.gmra.mrb[0].mxu0 %v672
    %v740 = vpop.f32.mrb[0].mxu0
    %v741 = vadd.f32 0.0, %v740
    %v742 = vpop.f32.mrb[0].mxu0
    %743 = vdwg.mxu0
    %v744 = vld [vmem:[#allocation7] sm:$0xff]
    %v745 = vld [vmem:[#allocation7 + $0x8] sm:$0xff]
    %s746 = scalar_lea.vmem [#allocation5], 32
    %v747 = vld [vmem:[%s746] sm:$0xff]
    %v748 = vld [vmem:[%s746 + $0x8] sm:$0xff]
    %v749 = vld [vmem:[%s746 + $0x10] sm:$0xff]
    %v750 = vld [vmem:[%s746 + $0x18] sm:$0xff]
    %v751 = vlaneseq
    %v752 = vshrl.u32 %v751, 7
    %v753 = vsub.s32 1, %v752
    %v754 = vrot.slane %v116, %v753
    %755 = vmatprep.subr.mxu0 0.0
    %756 = vmatpush1.msra.mxu0 %v747
    %757 = vmatprep.subr.mxu0 0.0
    %758 = vmatpush1.msra.mxu0 %v748
    %759 = vmatprep.subr.mxu0 0.0
    %760 = vmatpush1.msra.mxu0 %v749
    %761 = vmatprep.subr.mxu0 0.0
    %762 = vmatpush1.msra.mxu0 %v750
    %763 = vmatprep.subr.mxu0 0.0
    %764 = vmatpush1.msra.mxu0 0.0
    %765 = vmatprep.subr.mxu0 0.0
    %766 = vmatpush1.msra.mxu0 0.0
    %767 = vmatprep.subr.mxu0 0.0
    %768 = vmatpush1.msra.mxu0 0.0
    %769 = vmatprep.subr.mxu0 0.0
    %770 = vmatpush1.msra.mxu0 0.0
    %771 = vmatprep.subr.mxu0 0.0
    %772 = vmatpush1.msra.mxu0 0.0
    %773 = vmatprep.subr.mxu0 0.0
    %774 = vmatpush1.msra.mxu0 0.0
    %775 = vmatprep.subr.mxu0 0.0
    %776 = vmatpush1.msra.mxu0 0.0
    %777 = vmatprep.subr.mxu0 0.0
    %778 = vmatpush1.msra.mxu0 0.0
    %779 = vmatprep.subr.mxu0 0.0
    %780 = vmatpush1.msra.mxu0 0.0
    %781 = vmatprep.subr.mxu0 0.0
    %782 = vmatpush1.msra.mxu0 0.0
    %783 = vmatprep.subr.mxu0 0.0
    %784 = vmatpush1.msra.mxu0 0.0
    %785 = vmatprep.subr.mxu0 0.0
    %786 = vmatpush1.msra.mxu0 0.0
    %787 = vmatprep.subr.mxu0 0.0
    %788 = vmatpush1.msra.mxu0 0.0
    %789 = vmatprep.subr.mxu0 0.0
    %790 = vmatpush1.msra.mxu0 0.0
    %791 = vmatprep.subr.mxu0 0.0
    %792 = vmatpush1.msra.mxu0 0.0
    %793 = vmatprep.subr.mxu0 0.0
    %794 = vmatpush1.msra.mxu0 0.0
    %795 = vmatprep.subr.mxu0 0.0
    %796 = vmatpush1.msra.mxu0 0.0
    %797 = vmatprep.subr.mxu0 0.0
    %798 = vmatpush1.msra.mxu0 0.0
    %799 = vmatprep.subr.mxu0 0.0
    %800 = vmatpush1.msra.mxu0 0.0
    %801 = vmatprep.subr.mxu0 0.0
    %802 = vmatpush1.msra.mxu0 0.0
    %803 = vmatprep.subr.mxu0 0.0
    %804 = vmatpush1.msra.mxu0 0.0
    %805 = vmatprep.subr.mxu0 0.0
    %806 = vmatpush1.msra.mxu0 0.0
    %807 = vmatprep.subr.mxu0 0.0
    %808 = vmatpush1.msra.mxu0 0.0
    %809 = vmatprep.subr.mxu0 0.0
    %810 = vmatpush1.msra.mxu0 0.0
    %811 = vmatprep.subr.mxu0 0.0
    %812 = vmatpush1.msra.mxu0 0.0
    %813 = vmatprep.subr.mxu0 0.0
    %814 = vmatpush1.msra.mxu0 0.0
    %815 = vmatprep.subr.mxu0 0.0
    %816 = vmatpush1.msra.mxu0 0.0
    %817 = vmatprep.subr.mxu0 0.0
    %818 = vmatpush1.msra.mxu0 0.0
    %819 = vmatprep.mubr.f32.mxu0 0.0
    %820 = vmatmul.mubr.f32.gmra.mrb[0].mxu0 %v172
    %v821 = vpop.f32.mrb[0].mxu0
    %v822 = vadd.f32 %v754, %v821
    %v823 = vpop.f32.mrb[0].mxu0
    %824 = vmatprep.mubr.f32.mxu0 0.0
    %825 = vmatmul.mubr.f32.gmra.mrb[0].mxu0 %v175
    %v826 = vpop.f32.mrb[0].mxu0
    %v827 = vadd.f32 %v754, %v826
    %v828 = vpop.f32.mrb[0].mxu0
    %829 = vdwg.mxu0
    %s830 = scalar_lea.vmem [#allocation5], 96
    %v831 = vld [vmem:[%s830] sm:$0xff]
    %v832 = vld [vmem:[%s830 + $0x8] sm:$0xff]
    %v833 = vld [vmem:[%s830 + $0x10] sm:$0xff]
    %v834 = vld [vmem:[%s830 + $0x18] sm:$0xff]
    %v835 = vlaneseq
    %v836 = vshrl.u32 %v835, 7
    %v837 = vsub.s32 3, %v836
    %v838 = vrot.slane %v116, %v837
    %839 = vmatprep.subr.mxu0 0.0
    %840 = vmatpush1.msra.mxu0 %v831
    %841 = vmatprep.subr.mxu0 0.0
    %842 = vmatpush1.msra.mxu0 %v832
    %843 = vmatprep.subr.mxu0 0.0
    %844 = vmatpush1.msra.mxu0 %v833
    %845 = vmatprep.subr.mxu0 0.0
    %846 = vmatpush1.msra.mxu0 %v834
    %847 = vmatprep.subr.mxu0 0.0
    %848 = vmatpush1.msra.mxu0 0.0
    %849 = vmatprep.subr.mxu0 0.0
    %850 = vmatpush1.msra.mxu0 0.0
    %851 = vmatprep.subr.mxu0 0.0
    %852 = vmatpush1.msra.mxu0 0.0
    %853 = vmatprep.subr.mxu0 0.0
    %854 = vmatpush1.msra.mxu0 0.0
    %855 = vmatprep.subr.mxu0 0.0
    %856 = vmatpush1.msra.mxu0 0.0
    %857 = vmatprep.subr.mxu0 0.0
    %858 = vmatpush1.msra.mxu0 0.0
    %859 = vmatprep.subr.mxu0 0.0
    %860 = vmatpush1.msra.mxu0 0.0
    %861 = vmatprep.subr.mxu0 0.0
    %862 = vmatpush1.msra.mxu0 0.0
    %863 = vmatprep.subr.mxu0 0.0
    %864 = vmatpush1.msra.mxu0 0.0
    %865 = vmatprep.subr.mxu0 0.0
    %866 = vmatpush1.msra.mxu0 0.0
    %867 = vmatprep.subr.mxu0 0.0
    %868 = vmatpush1.msra.mxu0 0.0
    %869 = vmatprep.subr.mxu0 0.0
    %870 = vmatpush1.msra.mxu0 0.0
    %871 = vmatprep.subr.mxu0 0.0
    %872 = vmatpush1.msra.mxu0 0.0
    %873 = vmatprep.subr.mxu0 0.0
    %874 = vmatpush1.msra.mxu0 0.0
    %875 = vmatprep.subr.mxu0 0.0
    %876 = vmatpush1.msra.mxu0 0.0
    %877 = vmatprep.subr.mxu0 0.0
    %878 = vmatpush1.msra.mxu0 0.0
    %879 = vmatprep.subr.mxu0 0.0
    %880 = vmatpush1.msra.mxu0 0.0
    %881 = vmatprep.subr.mxu0 0.0
    %882 = vmatpush1.msra.mxu0 0.0
    %883 = vmatprep.subr.mxu0 0.0
    %884 = vmatpush1.msra.mxu0 0.0
    %885 = vmatprep.subr.mxu0 0.0
    %886 = vmatpush1.msra.mxu0 0.0
    %887 = vmatprep.subr.mxu0 0.0
    %888 = vmatpush1.msra.mxu0 0.0
    %889 = vmatprep.subr.mxu0 0.0
    %890 = vmatpush1.msra.mxu0 0.0
    %891 = vmatprep.subr.mxu0 0.0
    %892 = vmatpush1.msra.mxu0 0.0
    %893 = vmatprep.subr.mxu0 0.0
    %894 = vmatpush1.msra.mxu0 0.0
    %895 = vmatprep.subr.mxu0 0.0
    %896 = vmatpush1.msra.mxu0 0.0
    %897 = vmatprep.subr.mxu0 0.0
    %898 = vmatpush1.msra.mxu0 0.0
    %899 = vmatprep.subr.mxu0 0.0
    %900 = vmatpush1.msra.mxu0 0.0
    %901 = vmatprep.subr.mxu0 0.0
    %902 = vmatpush1.msra.mxu0 0.0
    %903 = vmatprep.mubr.f32.mxu0 0.0
    %904 = vmatmul.mubr.f32.gmra.mrb[0].mxu0 %v172
    %v905 = vpop.f32.mrb[0].mxu0
    %v906 = vadd.f32 %v838, %v905
    %v907 = vpop.f32.mrb[0].mxu0
    %908 = vmatprep.mubr.f32.mxu0 0.0
    %909 = vmatmul.mubr.f32.gmra.mrb[0].mxu0 %v175
    %v910 = vpop.f32.mrb[0].mxu0
    %v911 = vadd.f32 %v838, %v910
    %v912 = vpop.f32.mrb[0].mxu0
    %913 = vdwg.mxu0
    %s914 = scalar_lea.vmem [#allocation5], 160
    %v915 = vld [vmem:[%s914] sm:$0xff]
    %v916 = vld [vmem:[%s914 + $0x8] sm:$0xff]
    %v917 = vld [vmem:[%s914 + $0x10] sm:$0xff]
    %v918 = vld [vmem:[%s914 + $0x18] sm:$0xff]
    %v919 = vlaneseq
    %v920 = vshrl.u32 %v919, 7
    %v921 = vsub.s32 5, %v920
    %v922 = vrot.slane %v116, %v921
    %923 = vmatprep.subr.mxu0 0.0
    %924 = vmatpush1.msra.mxu0 %v915
    %925 = vmatprep.subr.mxu0 0.0
    %926 = vmatpush1.msra.mxu0 %v916
    %927 = vmatprep.subr.mxu0 0.0
    %928 = vmatpush1.msra.mxu0 %v917
    %929 = vmatprep.subr.mxu0 0.0
    %930 = vmatpush1.msra.mxu0 %v918
    %931 = vmatprep.subr.mxu0 0.0
    %932 = vmatpush1.msra.mxu0 0.0
    %933 = vmatprep.subr.mxu0 0.0
    %934 = vmatpush1.msra.mxu0 0.0
    %935 = vmatprep.subr.mxu0 0.0
    %936 = vmatpush1.msra.mxu0 0.0
    %937 = vmatprep.subr.mxu0 0.0
    %938 = vmatpush1.msra.mxu0 0.0
    %939 = vmatprep.subr.mxu0 0.0
    %940 = vmatpush1.msra.mxu0 0.0
    %941 = vmatprep.subr.mxu0 0.0
    %942 = vmatpush1.msra.mxu0 0.0
    %943 = vmatprep.subr.mxu0 0.0
    %944 = vmatpush1.msra.mxu0 0.0
    %945 = vmatprep.subr.mxu0 0.0
    %946 = vmatpush1.msra.mxu0 0.0
    %947 = vmatprep.subr.mxu0 0.0
    %948 = vmatpush1.msra.mxu0 0.0
    %949 = vmatprep.subr.mxu0 0.0
    %950 = vmatpush1.msra.mxu0 0.0
    %951 = vmatprep.subr.mxu0 0.0
    %952 = vmatpush1.msra.mxu0 0.0
    %953 = vmatprep.subr.mxu0 0.0
    %954 = vmatpush1.msra.mxu0 0.0
    %955 = vmatprep.subr.mxu0 0.0
    %956 = vmatpush1.msra.mxu0 0.0
    %957 = vmatprep.subr.mxu0 0.0
    %958 = vmatpush1.msra.mxu0 0.0
    %959 = vmatprep.subr.mxu0 0.0
    %960 = vmatpush1.msra.mxu0 0.0
    %961 = vmatprep.subr.mxu0 0.0
    %962 = vmatpush1.msra.mxu0 0.0
    %963 = vmatprep.subr.mxu0 0.0
    %964 = vmatpush1.msra.mxu0 0.0
    %965 = vmatprep.subr.mxu0 0.0
    %966 = vmatpush1.msra.mxu0 0.0
    %967 = vmatprep.subr.mxu0 0.0
    %968 = vmatpush1.msra.mxu0 0.0
    %969 = vmatprep.subr.mxu0 0.0
    %970 = vmatpush1.msra.mxu0 0.0
    %971 = vmatprep.subr.mxu0 0.0
    %972 = vmatpush1.msra.mxu0 0.0
    %973 = vmatprep.subr.mxu0 0.0
    %974 = vmatpush1.msra.mxu0 0.0
    %975 = vmatprep.subr.mxu0 0.0
    %976 = vmatpush1.msra.mxu0 0.0
    %977 = vmatprep.subr.mxu0 0.0
    %978 = vmatpush1.msra.mxu0 0.0
    %979 = vmatprep.subr.mxu0 0.0
    %980 = vmatpush1.msra.mxu0 0.0
    %981 = vmatprep.subr.mxu0 0.0
    %982 = vmatpush1.msra.mxu0 0.0
    %983 = vmatprep.subr.mxu0 0.0
    %984 = vmatpush1.msra.mxu0 0.0
    %985 = vmatprep.subr.mxu0 0.0
    %986 = vmatpush1.msra.mxu0 0.0
    %987 = vmatprep.mubr.f32.mxu0 0.0
    %988 = vmatmul.mubr.f32.gmra.mrb[0].mxu0 %v172
    %v989 = vpop.f32.mrb[0].mxu0
    %v990 = vadd.f32 %v922, %v989
    %v991 = vpop.f32.mrb[0].mxu0
    %992 = vmatprep.mubr.f32.mxu0 0.0
    %993 = vmatmul.mubr.f32.gmra.mrb[0].mxu0 %v175
    %v994 = vpop.f32.mrb[0].mxu0
    %v995 = vadd.f32 %v922, %v994
    %v996 = vpop.f32.mrb[0].mxu0
    %997 = vdwg.mxu0
    %v999 = vsel %vm420, %v822, 0
    %v1002 = vsel %vm420, %v906, 0
    %1004 = vmatprep.subr.mxu0 0.0
    %1005 = vmatpush1.xpose.msra.mxu0 %v1002
    %1006 = vmatprep.subr.mxu0 0.0
    %1007 = vmatpush1.xpose.msra.mxu0 0.0
    %1008 = vmatprep.subr.mxu0 0.0
    %1009 = vmatpush1.xpose.msra.mxu0 0.0
    %1010 = vmatprep.subr.mxu0 0.0
    %1011 = vmatpush1.xpose.msra.mxu0 0.0
    %1012 = vmatprep.subr.mxu0 0.0
    %1013 = vmatpush1.xpose.msra.mxu0 0.0
    %1014 = vmatprep.subr.mxu0 0.0
    %1015 = vmatpush1.xpose.msra.mxu0 0.0
    %1016 = vmatprep.subr.mxu0 0.0
    %1017 = vmatpush1.xpose.msra.mxu0 0.0
    %1018 = vmatprep.subr.mxu0 0.0
    %1019 = vmatpush1.xpose.msra.mxu0 0.0
    %1020 = vmatprep.subr.mxu0 0.0
    %1021 = vmatpush1.xpose.msra.mxu0 0.0
    %1022 = vmatprep.subr.mxu0 0.0
    %1023 = vmatpush1.xpose.msra.mxu0 0.0
    %1024 = vmatprep.subr.mxu0 0.0
    %1025 = vmatpush1.xpose.msra.mxu0 0.0
    %1026 = vmatprep.subr.mxu0 0.0
    %1027 = vmatpush1.xpose.msra.mxu0 0.0
    %1028 = vmatprep.subr.mxu0 0.0
    %1029 = vmatpush1.xpose.msra.mxu0 0.0
    %1030 = vmatprep.subr.mxu0 0.0
    %1031 = vmatpush1.xpose.msra.mxu0 0.0
    %1032 = vmatprep.subr.mxu0 0.0
    %1033 = vmatpush1.xpose.msra.mxu0 0.0
    %1034 = vmatprep.subr.mxu0 0.0
    %1035 = vmatpush1.xpose.msra.mxu0 0.0
    %1036 = vmatprep.subr.mxu0 0.0
    %1037 = vmatpush1.xpose.msra.mxu0 0.0
    %1038 = vmatprep.subr.mxu0 0.0
    %1039 = vmatpush1.xpose.msra.mxu0 0.0
    %1040 = vmatprep.subr.mxu0 0.0
    %1041 = vmatpush1.xpose.msra.mxu0 0.0
    %1042 = vmatprep.subr.mxu0 0.0
    %1043 = vmatpush1.xpose.msra.mxu0 0.0
    %1044 = vmatprep.subr.mxu0 0.0
    %1045 = vmatpush1.xpose.msra.mxu0 0.0
    %1046 = vmatprep.subr.mxu0 0.0
    %1047 = vmatpush1.xpose.msra.mxu0 0.0
    %1048 = vmatprep.subr.mxu0 0.0
    %1049 = vmatpush1.xpose.msra.mxu0 0.0
    %1050 = vmatprep.subr.mxu0 0.0
    %1051 = vmatpush1.xpose.msra.mxu0 0.0
    %1052 = vmatprep.subr.mxu0 0.0
    %1053 = vmatpush1.xpose.msra.mxu0 0.0
    %1054 = vmatprep.subr.mxu0 0.0
    %1055 = vmatpush1.xpose.msra.mxu0 0.0
    %1056 = vmatprep.subr.mxu0 0.0
    %1057 = vmatpush1.xpose.msra.mxu0 0.0
    %1058 = vmatprep.subr.mxu0 0.0
    %1059 = vmatpush1.xpose.msra.mxu0 0.0
    %1060 = vmatprep.subr.mxu0 0.0
    %1061 = vmatpush1.xpose.msra.mxu0 0.0
    %1062 = vmatprep.subr.mxu0 0.0
    %1063 = vmatpush1.xpose.msra.mxu0 0.0
    %1064 = vmatprep.subr.mxu0 0.0
    %1065 = vmatpush1.xpose.msra.mxu0 0.0
    %1066 = vmatprep.subr.mxu0 0.0
    %1067 = vmatpush1.xpose.msra.mxu0 0.0
    %1068 = vmatprep.mubr.f32.mxu0 0.0
    %1069 = vmatmul.mubr.f32.gmra.mrb[0].mxu0 %v999
    %v1070 = vpop.f32.mrb[0].mxu0
    %v1071 = vadd.f32 0.0, %v1070
    %v1072 = vpop.f32.mrb[0].mxu0
    %1073 = vdwg.mxu0
    %v1075 = vsel %vm420, %v827, 0
    %v1078 = vsel %vm420, %v911, 0
    %1080 = vmatprep.subr.mxu0 0.0
    %1081 = vmatpush1.xpose.msra.mxu0 %v1078
    %1082 = vmatprep.subr.mxu0 0.0
    %1083 = vmatpush1.xpose.msra.mxu0 0.0
    %1084 = vmatprep.subr.mxu0 0.0
    %1085 = vmatpush1.xpose.msra.mxu0 0.0
    %1086 = vmatprep.subr.mxu0 0.0
    %1087 = vmatpush1.xpose.msra.mxu0 0.0
    %1088 = vmatprep.subr.mxu0 0.0
    %1089 = vmatpush1.xpose.msra.mxu0 0.0
    %1090 = vmatprep.subr.mxu0 0.0
    %1091 = vmatpush1.xpose.msra.mxu0 0.0
    %1092 = vmatprep.subr.mxu0 0.0
    %1093 = vmatpush1.xpose.msra.mxu0 0.0
    %1094 = vmatprep.subr.mxu0 0.0
    %1095 = vmatpush1.xpose.msra.mxu0 0.0
    %1096 = vmatprep.subr.mxu0 0.0
    %1097 = vmatpush1.xpose.msra.mxu0 0.0
    %1098 = vmatprep.subr.mxu0 0.0
    %1099 = vmatpush1.xpose.msra.mxu0 0.0
    %1100 = vmatprep.subr.mxu0 0.0
    %1101 = vmatpush1.xpose.msra.mxu0 0.0
    %1102 = vmatprep.subr.mxu0 0.0
    %1103 = vmatpush1.xpose.msra.mxu0 0.0
    %1104 = vmatprep.subr.mxu0 0.0
    %1105 = vmatpush1.xpose.msra.mxu0 0.0
    %1106 = vmatprep.subr.mxu0 0.0
    %1107 = vmatpush1.xpose.msra.mxu0 0.0
    %1108 = vmatprep.subr.mxu0 0.0
    %1109 = vmatpush1.xpose.msra.mxu0 0.0
    %1110 = vmatprep.subr.mxu0 0.0
    %1111 = vmatpush1.xpose.msra.mxu0 0.0
    %1112 = vmatprep.subr.mxu0 0.0
    %1113 = vmatpush1.xpose.msra.mxu0 0.0
    %1114 = vmatprep.subr.mxu0 0.0
    %1115 = vmatpush1.xpose.msra.mxu0 0.0
    %1116 = vmatprep.subr.mxu0 0.0
    %1117 = vmatpush1.xpose.msra.mxu0 0.0
    %1118 = vmatprep.subr.mxu0 0.0
    %1119 = vmatpush1.xpose.msra.mxu0 0.0
    %1120 = vmatprep.subr.mxu0 0.0
    %1121 = vmatpush1.xpose.msra.mxu0 0.0
    %1122 = vmatprep.subr.mxu0 0.0
    %1123 = vmatpush1.xpose.msra.mxu0 0.0
    %1124 = vmatprep.subr.mxu0 0.0
    %1125 = vmatpush1.xpose.msra.mxu0 0.0
    %1126 = vmatprep.subr.mxu0 0.0
    %1127 = vmatpush1.xpose.msra.mxu0 0.0
    %1128 = vmatprep.subr.mxu0 0.0
    %1129 = vmatpush1.xpose.msra.mxu0 0.0
    %1130 = vmatprep.subr.mxu0 0.0
    %1131 = vmatpush1.xpose.msra.mxu0 0.0
    %1132 = vmatprep.subr.mxu0 0.0
    %1133 = vmatpush1.xpose.msra.mxu0 0.0
    %1134 = vmatprep.subr.mxu0 0.0
    %1135 = vmatpush1.xpose.msra.mxu0 0.0
    %1136 = vmatprep.subr.mxu0 0.0
    %1137 = vmatpush1.xpose.msra.mxu0 0.0
    %1138 = vmatprep.subr.mxu0 0.0
    %1139 = vmatpush1.xpose.msra.mxu0 0.0
    %1140 = vmatprep.subr.mxu0 0.0
    %1141 = vmatpush1.xpose.msra.mxu0 0.0
    %1142 = vmatprep.subr.mxu0 0.0
    %1143 = vmatpush1.xpose.msra.mxu0 0.0
    %1144 = vmatprep.mubr.f32.mxu0 0.0
    %1145 = vmatmul.mubr.f32.gmra.mrb[0].mxu0 %v1075
    %v1146 = vpop.f32.mrb[0].mxu0
    %v1147 = vadd.f32 0.0, %v1146
    %v1148 = vpop.f32.mrb[0].mxu0
    %1149 = vdwg.mxu0
    %v1150 = vmul.f32 %v1071, 0.25
    %v1151 = vmul.f32 %v1147, 0.25
    %v1152 = vsel %vm575, %v1150, -inf
    %1153 = vmax.xlane.f32.xlu0 %v1152
    %v1154 = vpop.xlane.xlu0 %1153
    %v1155 = vsel %vm575, %v1151, -inf
    %1156 = vmax.xlane.f32.xlu0 %v1155
    %v1157 = vpop.xlane.xlu0 %1156
    %v1158 = vsub.f32 %v1150, %v1154
    %v1159 = vsub.f32 %v1151, %v1157
    %v1160 = vmul.f32 %v1158, 1.442695
    %v1161 = vpow.pop %v1160
    %v1162 = vmul.f32 %v1159, 1.442695
    %v1163 = vpow.pop %v1162
    %v1164 = vsel %vm575, %v1161, 0.0
    %1165 = vadd.xlane.f32.xlu0 %v1164
    %v1166 = vpop.xlane.xlu0 %1165
    %v1167 = vsel %vm575, %v1163, 0.0
    %1168 = vadd.xlane.f32.xlu0 %v1167
    %v1169 = vpop.xlane.xlu0 %1168
    %v1170 = vrcp.pop %v1166
    %v1171 = vrcp.pop %v1169
    %v1172 = vmul.f32 %v1161, %v1170
    %v1173 = vmul.f32 %v1163, %v1171
    %v1175 = vsel %vm575, %v1172, 0
    %1177 = vmatprep.subr.mxu0 0.0
    %1178 = vmatpush1.msra.mxu0 %v990
    %1179 = vmatprep.subr.mxu0 0.0
    %1180 = vmatpush1.msra.mxu0 0.0
    %1181 = vmatprep.subr.mxu0 0.0
    %1182 = vmatpush1.msra.mxu0 0.0
    %1183 = vmatprep.subr.mxu0 0.0
    %1184 = vmatpush1.msra.mxu0 0.0
    %1185 = vmatprep.subr.mxu0 0.0
    %1186 = vmatpush1.msra.mxu0 0.0
    %1187 = vmatprep.subr.mxu0 0.0
    %1188 = vmatpush1.msra.mxu0 0.0
    %1189 = vmatprep.subr.mxu0 0.0
    %1190 = vmatpush1.msra.mxu0 0.0
    %1191 = vmatprep.subr.mxu0 0.0
    %1192 = vmatpush1.msra.mxu0 0.0
    %1193 = vmatprep.subr.mxu0 0.0
    %1194 = vmatpush1.msra.mxu0 0.0
    %1195 = vmatprep.subr.mxu0 0.0
    %1196 = vmatpush1.msra.mxu0 0.0
    %1197 = vmatprep.subr.mxu0 0.0
    %1198 = vmatpush1.msra.mxu0 0.0
    %1199 = vmatprep.subr.mxu0 0.0
    %1200 = vmatpush1.msra.mxu0 0.0
    %1201 = vmatprep.subr.mxu0 0.0
    %1202 = vmatpush1.msra.mxu0 0.0
    %1203 = vmatprep.subr.mxu0 0.0
    %1204 = vmatpush1.msra.mxu0 0.0
    %1205 = vmatprep.subr.mxu0 0.0
    %1206 = vmatpush1.msra.mxu0 0.0
    %1207 = vmatprep.subr.mxu0 0.0
    %1208 = vmatpush1.msra.mxu0 0.0
    %1209 = vmatprep.subr.mxu0 0.0
    %1210 = vmatpush1.msra.mxu0 0.0
    %1211 = vmatprep.subr.mxu0 0.0
    %1212 = vmatpush1.msra.mxu0 0.0
    %1213 = vmatprep.subr.mxu0 0.0
    %1214 = vmatpush1.msra.mxu0 0.0
    %1215 = vmatprep.subr.mxu0 0.0
    %1216 = vmatpush1.msra.mxu0 0.0
    %1217 = vmatprep.subr.mxu0 0.0
    %1218 = vmatpush1.msra.mxu0 0.0
    %1219 = vmatprep.subr.mxu0 0.0
    %1220 = vmatpush1.msra.mxu0 0.0
    %1221 = vmatprep.subr.mxu0 0.0
    %1222 = vmatpush1.msra.mxu0 0.0
    %1223 = vmatprep.subr.mxu0 0.0
    %1224 = vmatpush1.msra.mxu0 0.0
    %1225 = vmatprep.subr.mxu0 0.0
    %1226 = vmatpush1.msra.mxu0 0.0
    %1227 = vmatprep.subr.mxu0 0.0
    %1228 = vmatpush1.msra.mxu0 0.0
    %1229 = vmatprep.subr.mxu0 0.0
    %1230 = vmatpush1.msra.mxu0 0.0
    %1231 = vmatprep.subr.mxu0 0.0
    %1232 = vmatpush1.msra.mxu0 0.0
    %1233 = vmatprep.subr.mxu0 0.0
    %1234 = vmatpush1.msra.mxu0 0.0
    %1235 = vmatprep.subr.mxu0 0.0
    %1236 = vmatpush1.msra.mxu0 0.0
    %1237 = vmatprep.subr.mxu0 0.0
    %1238 = vmatpush1.msra.mxu0 0.0
    %1239 = vmatprep.subr.mxu0 0.0
    %1240 = vmatpush1.msra.mxu0 0.0
    %1241 = vmatprep.mubr.f32.mxu0 0.0
    %1242 = vmatmul.mubr.f32.gmra.mrb[0].mxu0 %v1175
    %v1243 = vpop.f32.mrb[0].mxu0
    %v1244 = vadd.f32 0.0, %v1243
    %v1245 = vpop.f32.mrb[0].mxu0
    %1246 = vdwg.mxu0
    %v1248 = vsel %vm575, %v1173, 0
    %1250 = vmatprep.subr.mxu0 0.0
    %1251 = vmatpush1.msra.mxu0 %v995
    %1252 = vmatprep.subr.mxu0 0.0
    %1253 = vmatpush1.msra.mxu0 0.0
    %1254 = vmatprep.subr.mxu0 0.0
    %1255 = vmatpush1.msra.mxu0 0.0
    %1256 = vmatprep.subr.mxu0 0.0
    %1257 = vmatpush1.msra.mxu0 0.0
    %1258 = vmatprep.subr.mxu0 0.0
    %1259 = vmatpush1.msra.mxu0 0.0
    %1260 = vmatprep.subr.mxu0 0.0
    %1261 = vmatpush1.msra.mxu0 0.0
    %1262 = vmatprep.subr.mxu0 0.0
    %1263 = vmatpush1.msra.mxu0 0.0
    %1264 = vmatprep.subr.mxu0 0.0
    %1265 = vmatpush1.msra.mxu0 0.0
    %1266 = vmatprep.subr.mxu0 0.0
    %1267 = vmatpush1.msra.mxu0 0.0
    %1268 = vmatprep.subr.mxu0 0.0
    %1269 = vmatpush1.msra.mxu0 0.0
    %1270 = vmatprep.subr.mxu0 0.0
    %1271 = vmatpush1.msra.mxu0 0.0
    %1272 = vmatprep.subr.mxu0 0.0
    %1273 = vmatpush1.msra.mxu0 0.0
    %1274 = vmatprep.subr.mxu0 0.0
    %1275 = vmatpush1.msra.mxu0 0.0
    %1276 = vmatprep.subr.mxu0 0.0
    %1277 = vmatpush1.msra.mxu0 0.0
    %1278 = vmatprep.subr.mxu0 0.0
    %1279 = vmatpush1.msra.mxu0 0.0
    %1280 = vmatprep.subr.mxu0 0.0
    %1281 = vmatpush1.msra.mxu0 0.0
    %1282 = vmatprep.subr.mxu0 0.0
    %1283 = vmatpush1.msra.mxu0 0.0
    %1284 = vmatprep.subr.mxu0 0.0
    %1285 = vmatpush1.msra.mxu0 0.0
    %1286 = vmatprep.subr.mxu0 0.0
    %1287 = vmatpush1.msra.mxu0 0.0
    %1288 = vmatprep.subr.mxu0 0.0
    %1289 = vmatpush1.msra.mxu0 0.0
    %1290 = vmatprep.subr.mxu0 0.0
    %1291 = vmatpush1.msra.mxu0 0.0
    %1292 = vmatprep.subr.mxu0 0.0
    %1293 = vmatpush1.msra.mxu0 0.0
    %1294 = vmatprep.subr.mxu0 0.0
    %1295 = vmatpush1.msra.mxu0 0.0
    %1296 = vmatprep.subr.mxu0 0.0
    %1297 = vmatpush1.msra.mxu0 0.0
    %1298 = vmatprep.subr.mxu0 0.0
    %1299 = vmatpush1.msra.mxu0 0.0
    %1300 = vmatprep.subr.mxu0 0.0
    %1301 = vmatpush1.msra.mxu0 0.0
    %1302 = vmatprep.subr.mxu0 0.0
    %1303 = vmatpush1.msra.mxu0 0.0
    %1304 = vmatprep.subr.mxu0 0.0
    %1305 = vmatpush1.msra.mxu0 0.0
    %1306 = vmatprep.subr.mxu0 0.0
    %1307 = vmatpush1.msra.mxu0 0.0
    %1308 = vmatprep.subr.mxu0 0.0
    %1309 = vmatpush1.msra.mxu0 0.0
    %1310 = vmatprep.subr.mxu0 0.0
    %1311 = vmatpush1.msra.mxu0 0.0
    %1312 = vmatprep.subr.mxu0 0.0
    %1313 = vmatpush1.msra.mxu0 0.0
    %1314 = vmatprep.mubr.f32.mxu0 0.0
    %1315 = vmatmul.mubr.f32.gmra.mrb[0].mxu0 %v1248
    %v1316 = vpop.f32.mrb[0].mxu0
    %v1317 = vadd.f32 0.0, %v1316
    %v1318 = vpop.f32.mrb[0].mxu0
    %1319 = vdwg.mxu0
    %s1320 = scalar_lea.vmem [#allocation7], 16
    %v1321 = vld [vmem:[%s1320] sm:$0xff]
    %v1322 = vld [vmem:[%s1320 + $0x8] sm:$0xff]
    %v1324 = vsel %vm420, %v1244, 0
    %v1327 = vsel %vm420, %v1317, 0
    %1329 = vmatprep.subr.mxu0 0.0
    %1330 = vmatpush1.msra.mxu0 %v1321
    %1331 = vmatprep.subr.mxu0 0.0
    %1332 = vmatpush1.msra.mxu0 %v1322
    %1333 = vmatprep.subr.mxu0 0.0
    %1334 = vmatpush1.msra.mxu0 0.0
    %1335 = vmatprep.subr.mxu0 0.0
    %1336 = vmatpush1.msra.mxu0 0.0
    %1337 = vmatprep.subr.mxu0 0.0
    %1338 = vmatpush1.msra.mxu0 0.0
    %1339 = vmatprep.subr.mxu0 0.0
    %1340 = vmatpush1.msra.mxu0 0.0
    %1341 = vmatprep.subr.mxu0 0.0
    %1342 = vmatpush1.msra.mxu0 0.0
    %1343 = vmatprep.subr.mxu0 0.0
    %1344 = vmatpush1.msra.mxu0 0.0
    %1345 = vmatprep.subr.mxu0 0.0
    %1346 = vmatpush1.msra.mxu0 0.0
    %1347 = vmatprep.subr.mxu0 0.0
    %1348 = vmatpush1.msra.mxu0 0.0
    %1349 = vmatprep.subr.mxu0 0.0
    %1350 = vmatpush1.msra.mxu0 0.0
    %1351 = vmatprep.subr.mxu0 0.0
    %1352 = vmatpush1.msra.mxu0 0.0
    %1353 = vmatprep.subr.mxu0 0.0
    %1354 = vmatpush1.msra.mxu0 0.0
    %1355 = vmatprep.subr.mxu0 0.0
    %1356 = vmatpush1.msra.mxu0 0.0
    %1357 = vmatprep.subr.mxu0 0.0
    %1358 = vmatpush1.msra.mxu0 0.0
    %1359 = vmatprep.subr.mxu0 0.0
    %1360 = vmatpush1.msra.mxu0 0.0
    %1361 = vmatprep.subr.mxu0 0.0
    %1362 = vmatpush1.msra.mxu0 0.0
    %1363 = vmatprep.subr.mxu0 0.0
    %1364 = vmatpush1.msra.mxu0 0.0
    %1365 = vmatprep.subr.mxu0 0.0
    %1366 = vmatpush1.msra.mxu0 0.0
    %1367 = vmatprep.subr.mxu0 0.0
    %1368 = vmatpush1.msra.mxu0 0.0
    %1369 = vmatprep.subr.mxu0 0.0
    %1370 = vmatpush1.msra.mxu0 0.0
    %1371 = vmatprep.subr.mxu0 0.0
    %1372 = vmatpush1.msra.mxu0 0.0
    %1373 = vmatprep.subr.mxu0 0.0
    %1374 = vmatpush1.msra.mxu0 0.0
    %1375 = vmatprep.subr.mxu0 0.0
    %1376 = vmatpush1.msra.mxu0 0.0
    %1377 = vmatprep.subr.mxu0 0.0
    %1378 = vmatpush1.msra.mxu0 0.0
    %1379 = vmatprep.subr.mxu0 0.0
    %1380 = vmatpush1.msra.mxu0 0.0
    %1381 = vmatprep.subr.mxu0 0.0
    %1382 = vmatpush1.msra.mxu0 0.0
    %1383 = vmatprep.subr.mxu0 0.0
    %1384 = vmatpush1.msra.mxu0 0.0
    %1385 = vmatprep.subr.mxu0 0.0
    %1386 = vmatpush1.msra.mxu0 0.0
    %1387 = vmatprep.subr.mxu0 0.0
    %1388 = vmatpush1.msra.mxu0 0.0
    %1389 = vmatprep.subr.mxu0 0.0
    %1390 = vmatpush1.msra.mxu0 0.0
    %1391 = vmatprep.subr.mxu0 0.0
    %1392 = vmatpush1.msra.mxu0 0.0
    %1393 = vmatprep.mubr.f32.mxu0 0.0
    %1394 = vmatmul.mubr.f32.gmra.mrb[0].mxu0 %v1324
    %v1395 = vpop.f32.mrb[0].mxu0
    %v1396 = vadd.f32 0.0, %v1395
    %v1397 = vpop.f32.mrb[0].mxu0
    %1398 = vmatprep.mubr.f32.mxu0 0.0
    %1399 = vmatmul.mubr.f32.gmra.mrb[0].mxu0 %v1327
    %v1400 = vpop.f32.mrb[0].mxu0
    %v1401 = vadd.f32 0.0, %v1400
    %v1402 = vpop.f32.mrb[0].mxu0
    %1403 = vdwg.mxu0
    %v1405 = vsel %vm420, %v668, 0
    %v1408 = vsel %vm420, %v741, 0
    %1410 = vmatprep.subr.mxu0 0.0
    %1411 = vmatpush1.msra.mxu0 %v744
    %1412 = vmatprep.subr.mxu0 0.0
    %1413 = vmatpush1.msra.mxu0 %v745
    %1414 = vmatprep.subr.mxu0 0.0
    %1415 = vmatpush1.msra.mxu0 0.0
    %1416 = vmatprep.subr.mxu0 0.0
    %1417 = vmatpush1.msra.mxu0 0.0
    %1418 = vmatprep.subr.mxu0 0.0
    %1419 = vmatpush1.msra.mxu0 0.0
    %1420 = vmatprep.subr.mxu0 0.0
    %1421 = vmatpush1.msra.mxu0 0.0
    %1422 = vmatprep.subr.mxu0 0.0
    %1423 = vmatpush1.msra.mxu0 0.0
    %1424 = vmatprep.subr.mxu0 0.0
    %1425 = vmatpush1.msra.mxu0 0.0
    %1426 = vmatprep.subr.mxu0 0.0
    %1427 = vmatpush1.msra.mxu0 0.0
    %1428 = vmatprep.subr.mxu0 0.0
    %1429 = vmatpush1.msra.mxu0 0.0
    %1430 = vmatprep.subr.mxu0 0.0
    %1431 = vmatpush1.msra.mxu0 0.0
    %1432 = vmatprep.subr.mxu0 0.0
    %1433 = vmatpush1.msra.mxu0 0.0
    %1434 = vmatprep.subr.mxu0 0.0
    %1435 = vmatpush1.msra.mxu0 0.0
    %1436 = vmatprep.subr.mxu0 0.0
    %1437 = vmatpush1.msra.mxu0 0.0
    %1438 = vmatprep.subr.mxu0 0.0
    %1439 = vmatpush1.msra.mxu0 0.0
    %1440 = vmatprep.subr.mxu0 0.0
    %1441 = vmatpush1.msra.mxu0 0.0
    %1442 = vmatprep.subr.mxu0 0.0
    %1443 = vmatpush1.msra.mxu0 0.0
    %1444 = vmatprep.subr.mxu0 0.0
    %1445 = vmatpush1.msra.mxu0 0.0
    %1446 = vmatprep.subr.mxu0 0.0
    %1447 = vmatpush1.msra.mxu0 0.0
    %1448 = vmatprep.subr.mxu0 0.0
    %1449 = vmatpush1.msra.mxu0 0.0
    %1450 = vmatprep.subr.mxu0 0.0
    %1451 = vmatpush1.msra.mxu0 0.0
    %1452 = vmatprep.subr.mxu0 0.0
    %1453 = vmatpush1.msra.mxu0 0.0
    %1454 = vmatprep.subr.mxu0 0.0
    %1455 = vmatpush1.msra.mxu0 0.0
    %1456 = vmatprep.subr.mxu0 0.0
    %1457 = vmatpush1.msra.mxu0 0.0
    %1458 = vmatprep.subr.mxu0 0.0
    %1459 = vmatpush1.msra.mxu0 0.0
    %1460 = vmatprep.subr.mxu0 0.0
    %1461 = vmatpush1.msra.mxu0 0.0
    %1462 = vmatprep.subr.mxu0 0.0
    %1463 = vmatpush1.msra.mxu0 0.0
    %1464 = vmatprep.subr.mxu0 0.0
    %1465 = vmatpush1.msra.mxu0 0.0
    %1466 = vmatprep.subr.mxu0 0.0
    %1467 = vmatpush1.msra.mxu0 0.0
    %1468 = vmatprep.subr.mxu0 0.0
    %1469 = vmatpush1.msra.mxu0 0.0
    %1470 = vmatprep.subr.mxu0 0.0
    %1471 = vmatpush1.msra.mxu0 0.0
    %1472 = vmatprep.subr.mxu0 0.0
    %1473 = vmatpush1.msra.mxu0 0.0
    %1474 = vmatprep.mubr.f32.mxu0 0.0
    %1475 = vmatmul.mubr.f32.gmra.mrb[0].mxu0 %v1405
    %v1476 = vpop.f32.mrb[0].mxu0
    %v1477 = vadd.f32 %v1396, %v1476
    %v1478 = vpop.f32.mrb[0].mxu0
    %1479 = vmatprep.mubr.f32.mxu0 0.0
    %1480 = vmatmul.mubr.f32.gmra.mrb[0].mxu0 %v1408
    %v1481 = vpop.f32.mrb[0].mxu0
    %v1482 = vadd.f32 %v1401, %v1481
    %v1483 = vpop.f32.mrb[0].mxu0
    %1484 = vdwg.mxu0
    %v1485 = vlaneseq
    %v1486 = vshrl.u32 %v1485, 7
    %v1487 = vsub.s32 0, %v1486
    %v1488 = vrot.slane %v118, %v1487
    %v1489 = vadd.f32 %v1477, %v1488
    %v1490 = vadd.f32 %v1482, %v1488
    %v1491 = vadd.f32 %v161, %v1489
    %v1492 = vadd.f32 %v162, %v1490
    %v1493 = vsel %vm123, %v1491, 0.0
    %1494 = vadd.xlane.f32.xlu0 %v1493
    %v1495 = vpop.xlane.xlu0 %1494
    %v1496 = vsel %vm123, %v1492, 0.0
    %1497 = vadd.xlane.f32.xlu0 %v1496
    %v1498 = vpop.xlane.xlu0 %1497
    %v1499 = vmul.f32 %v1495, %v130
    %v1500 = vmul.f32 %v1498, %v130
    %v1501 = vsub.f32 %v1491, %v1499
    %v1502 = vsub.f32 %v1492, %v1500
    %v1503 = vmul.f32 %v1501, %v1501
    %v1504 = vmul.f32 %v1502, %v1502
    %v1505 = vsel %vm123, %v1503, 0.0
    %1506 = vadd.xlane.f32.xlu0 %v1505
    %v1507 = vpop.xlane.xlu0 %1506
    %v1508 = vsel %vm123, %v1504, 0.0
    %1509 = vadd.xlane.f32.xlu0 %v1508
    %v1510 = vpop.xlane.xlu0 %1509
    %v1511 = vmul.f32 %v1507, %v130
    %v1512 = vmul.f32 %v1510, %v130
    %v1513 = vadd.f32 %v1511, 1e-12
    %v1514 = vadd.f32 %v1512, 1e-12
    %v1515 = vrsqrt.pop %v1513
    %v1516 = vrsqrt.pop %v1514
    %v1517 = vmul.f32 %v1501, %v1515
    %v1518 = vmul.f32 %v1502, %v1516
    %v1519 = vlaneseq
    %v1520 = vshrl.u32 %v1519, 7
    %v1521 = vsub.s32 1, %v1520
    %v1522 = vrot.slane %v118, %v1521
    %v1523 = vmul.f32 %v1517, %v1522
    %v1524 = vmul.f32 %v1518, %v1522
    %v1525 = vlaneseq
    %v1526 = vshrl.u32 %v1525, 7
    %v1527 = vsub.s32 2, %v1526
    %v1528 = vrot.slane %v118, %v1527
    %v1529 = vadd.f32 %v1523, %v1528
    %v1530 = vadd.f32 %v1524, %v1528
    %v1531 = vld [vmem:[%s7] sm:$0xff]
    %v1532 = vld [vmem:[%s7 + $0x8] sm:$0xff]
    %v1533 = vld [vmem:[%s7 + $0x10] sm:$0xff]
    %v1534 = vld [vmem:[%s7 + $0x18] sm:$0xff]
    %v1535 = vlaneseq
    %v1536 = vshrl.u32 %v1535, 7
    %v1537 = vsub.s32 0, %v1536
    %v1538 = vrot.slane %v120, %v1537
    %v1540 = vsel %vm123, %v1529, 0
    %v1543 = vsel %vm123, %v1530, 0
    %1545 = vmatprep.subr.mxu0 0.0
    %1546 = vmatpush1.msra.mxu0 %v1531
    %1547 = vmatprep.subr.mxu0 0.0
    %1548 = vmatpush1.msra.mxu0 %v1532
    %1549 = vmatprep.subr.mxu0 0.0
    %1550 = vmatpush1.msra.mxu0 %v1533
    %1551 = vmatprep.subr.mxu0 0.0
    %1552 = vmatpush1.msra.mxu0 %v1534
    %1553 = vmatprep.subr.mxu0 0.0
    %1554 = vmatpush1.msra.mxu0 0.0
    %1555 = vmatprep.subr.mxu0 0.0
    %1556 = vmatpush1.msra.mxu0 0.0
    %1557 = vmatprep.subr.mxu0 0.0
    %1558 = vmatpush1.msra.mxu0 0.0
    %1559 = vmatprep.subr.mxu0 0.0
    %1560 = vmatpush1.msra.mxu0 0.0
    %1561 = vmatprep.subr.mxu0 0.0
    %1562 = vmatpush1.msra.mxu0 0.0
    %1563 = vmatprep.subr.mxu0 0.0
    %1564 = vmatpush1.msra.mxu0 0.0
    %1565 = vmatprep.subr.mxu0 0.0
    %1566 = vmatpush1.msra.mxu0 0.0
    %1567 = vmatprep.subr.mxu0 0.0
    %1568 = vmatpush1.msra.mxu0 0.0
    %1569 = vmatprep.subr.mxu0 0.0
    %1570 = vmatpush1.msra.mxu0 0.0
    %1571 = vmatprep.subr.mxu0 0.0
    %1572 = vmatpush1.msra.mxu0 0.0
    %1573 = vmatprep.subr.mxu0 0.0
    %1574 = vmatpush1.msra.mxu0 0.0
    %1575 = vmatprep.subr.mxu0 0.0
    %1576 = vmatpush1.msra.mxu0 0.0
    %1577 = vmatprep.subr.mxu0 0.0
    %1578 = vmatpush1.msra.mxu0 0.0
    %1579 = vmatprep.subr.mxu0 0.0
    %1580 = vmatpush1.msra.mxu0 0.0
    %1581 = vmatprep.subr.mxu0 0.0
    %1582 = vmatpush1.msra.mxu0 0.0
    %1583 = vmatprep.subr.mxu0 0.0
    %1584 = vmatpush1.msra.mxu0 0.0
    %1585 = vmatprep.subr.mxu0 0.0
    %1586 = vmatpush1.msra.mxu0 0.0
    %1587 = vmatprep.subr.mxu0 0.0
    %1588 = vmatpush1.msra.mxu0 0.0
    %1589 = vmatprep.subr.mxu0 0.0
    %1590 = vmatpush1.msra.mxu0 0.0
    %1591 = vmatprep.subr.mxu0 0.0
    %1592 = vmatpush1.msra.mxu0 0.0
    %1593 = vmatprep.subr.mxu0 0.0
    %1594 = vmatpush1.msra.mxu0 0.0
    %1595 = vmatprep.subr.mxu0 0.0
    %1596 = vmatpush1.msra.mxu0 0.0
    %1597 = vmatprep.subr.mxu0 0.0
    %1598 = vmatpush1.msra.mxu0 0.0
    %1599 = vmatprep.subr.mxu0 0.0
    %1600 = vmatpush1.msra.mxu0 0.0
    %1601 = vmatprep.subr.mxu0 0.0
    %1602 = vmatpush1.msra.mxu0 0.0
    %1603 = vmatprep.subr.mxu0 0.0
    %1604 = vmatpush1.msra.mxu0 0.0
    %1605 = vmatprep.subr.mxu0 0.0
    %1606 = vmatpush1.msra.mxu0 0.0
    %1607 = vmatprep.subr.mxu0 0.0
    %1608 = vmatpush1.msra.mxu0 0.0
    %1609 = vmatprep.mubr.f32.mxu0 0.0
    %1610 = vmatmul.mubr.f32.gmra.mrb[0].mxu0 %v1540
    %v1611 = vpop.f32.mrb[0].mxu0
    %v1612 = vadd.f32 %v1538, %v1611
    %v1613 = vpop.f32.mrb[0].mxu0
    %1614 = vmatprep.mubr.f32.mxu0 0.0
    %1615 = vmatmul.mubr.f32.gmra.mrb[0].mxu0 %v1543
    %v1616 = vpop.f32.mrb[0].mxu0
    %v1617 = vadd.f32 %v1538, %v1616
    %v1618 = vpop.f32.mrb[0].mxu0
    %1619 = vdwg.mxu0
    %v1620 = vmul.f32 %v1612, %v1612
    %v1621 = vmul.f32 %v1617, %v1617
    %v1622 = vmul.f32 %v1612, %v1620
    %v1623 = vmul.f32 %v1617, %v1621
    %v1624 = vmul.f32 %v1622, 0.044715
    %v1625 = vmul.f32 %v1623, 0.044715
    %v1626 = vadd.f32 %v1612, %v1624
    %v1627 = vadd.f32 %v1617, %v1625
    %v1628 = vmul.f32 %v1626, 0.7978846
    %v1629 = vmul.f32 %v1627, 0.7978846
    %v1630 = vtanh.pop %v1628
    %v1631 = vtanh.pop %v1629
    %v1632 = vadd.f32 %v1630, 1.0
    %v1633 = vadd.f32 %v1631, 1.0
    %v1634 = vmul.f32 %v1632, 0.5
    %v1635 = vmul.f32 %v1633, 0.5
    %v1636 = vmul.f32 %v1612, %v1634
    %v1637 = vmul.f32 %v1617, %v1635
    %v1638 = vld [vmem:[%s9] sm:$0xff]
    %v1639 = vld [vmem:[%s9 + $0x8] sm:$0xff]
    %v1640 = vld [vmem:[%s9 + $0x10] sm:$0xff]
    %v1641 = vld [vmem:[%s9 + $0x18] sm:$0xff]
    %v1642 = vld [vmem:[%s9 + $0x20] sm:$0xff]
    %v1643 = vld [vmem:[%s9 + $0x28] sm:$0xff]
    %v1644 = vld [vmem:[%s9 + $0x30] sm:$0xff]
    %v1645 = vld [vmem:[%s9 + $0x38] sm:$0xff]
    %v1646 = vlaneseq
    %v1647 = vshrl.u32 %v1646, 7
    %v1648 = vsub.s32 3, %v1647
    %v1649 = vrot.slane %v118, %v1648
    %vm1650 = vcmask 523264
    %v1652 = vsel %vm1650, %v1636, 0
    %v1655 = vsel %vm1650, %v1637, 0
    %1657 = vmatprep.subr.mxu0 0.0
    %1658 = vmatpush1.msra.mxu0 %v1638
    %1659 = vmatprep.subr.mxu0 0.0
    %1660 = vmatpush1.msra.mxu0 %v1639
    %1661 = vmatprep.subr.mxu0 0.0
    %1662 = vmatpush1.msra.mxu0 %v1640
    %1663 = vmatprep.subr.mxu0 0.0
    %1664 = vmatpush1.msra.mxu0 %v1641
    %1665 = vmatprep.subr.mxu0 0.0
    %1666 = vmatpush1.msra.mxu0 %v1642
    %1667 = vmatprep.subr.mxu0 0.0
    %1668 = vmatpush1.msra.mxu0 %v1643
    %1669 = vmatprep.subr.mxu0 0.0
    %1670 = vmatpush1.msra.mxu0 %v1644
    %1671 = vmatprep.subr.mxu0 0.0
    %1672 = vmatpush1.msra.mxu0 %v1645
    %1673 = vmatprep.subr.mxu0 0.0
    %1674 = vmatpush1.msra.mxu0 0.0
    %1675 = vmatprep.subr.mxu0 0.0
    %1676 = vmatpush1.msra.mxu0 0.0
    %1677 = vmatprep.subr.mxu0 0.0
    %1678 = vmatpush1.msra.mxu0 0.0
    %1679 = vmatprep.subr.mxu0 0.0
    %1680 = vmatpush1.msra.mxu0 0.0
    %1681 = vmatprep.subr.mxu0 0.0
    %1682 = vmatpush1.msra.mxu0 0.0
    %1683 = vmatprep.subr.mxu0 0.0
    %1684 = vmatpush1.msra.mxu0 0.0
    %1685 = vmatprep.subr.mxu0 0.0
    %1686 = vmatpush1.msra.mxu0 0.0
    %1687 = vmatprep.subr.mxu0 0.0
    %1688 = vmatpush1.msra.mxu0 0.0
    %1689 = vmatprep.subr.mxu0 0.0
    %1690 = vmatpush1.msra.mxu0 0.0
    %1691 = vmatprep.subr.mxu0 0.0
    %1692 = vmatpush1.msra.mxu0 0.0
    %1693 = vmatprep.subr.mxu0 0.0
    %1694 = vmatpush1.msra.mxu0 0.0
    %1695 = vmatprep.subr.mxu0 0.0
    %1696 = vmatpush1.msra.mxu0 0.0
    %1697 = vmatprep.subr.mxu0 0.0
    %1698 = vmatpush1.msra.mxu0 0.0
    %1699 = vmatprep.subr.mxu0 0.0
    %1700 = vmatpush1.msra.mxu0 0.0
    %1701 = vmatprep.subr.mxu0 0.0
    %1702 = vmatpush1.msra.mxu0 0.0
    %1703 = vmatprep.subr.mxu0 0.0
    %1704 = vmatpush1.msra.mxu0 0.0
    %1705 = vmatprep.subr.mxu0 0.0
    %1706 = vmatpush1.msra.mxu0 0.0
    %1707 = vmatprep.subr.mxu0 0.0
    %1708 = vmatpush1.msra.mxu0 0.0
    %1709 = vmatprep.subr.mxu0 0.0
    %1710 = vmatpush1.msra.mxu0 0.0
    %1711 = vmatprep.subr.mxu0 0.0
    %1712 = vmatpush1.msra.mxu0 0.0
    %1713 = vmatprep.subr.mxu0 0.0
    %1714 = vmatpush1.msra.mxu0 0.0
    %1715 = vmatprep.subr.mxu0 0.0
    %1716 = vmatpush1.msra.mxu0 0.0
    %1717 = vmatprep.subr.mxu0 0.0
    %1718 = vmatpush1.msra.mxu0 0.0
    %1719 = vmatprep.subr.mxu0 0.0
    %1720 = vmatpush1.msra.mxu0 0.0
    %1721 = vmatprep.mubr.f32.mxu0 0.0
    %1722 = vmatmul.mubr.f32.gmra.mrb[0].mxu0 %v1652
    %v1723 = vpop.f32.mrb[0].mxu0
    %v1724 = vadd.f32 %v1649, %v1723
    %v1725 = vpop.f32.mrb[0].mxu0
    %1726 = vmatprep.mubr.f32.mxu0 0.0
    %1727 = vmatmul.mubr.f32.gmra.mrb[0].mxu0 %v1655
    %v1728 = vpop.f32.mrb[0].mxu0
    %v1729 = vadd.f32 %v1649, %v1728
    %v1730 = vpop.f32.mrb[0].mxu0
    %1731 = vdwg.mxu0
    %v1732 = vadd.f32 %v1529, %v1724
    %v1733 = vadd.f32 %v1530, %v1729
    %v1734 = vsel %vm123, %v1732, 0.0
    %1735 = vadd.xlane.f32.xlu0 %v1734
    %v1736 = vpop.xlane.xlu0 %1735
    %v1737 = vsel %vm123, %v1733, 0.0
    %1738 = vadd.xlane.f32.xlu0 %v1737
    %v1739 = vpop.xlane.xlu0 %1738
    %v1740 = vmul.f32 %v1736, %v130
    %v1741 = vmul.f32 %v1739, %v130
    %v1742 = vsub.f32 %v1732, %v1740
    %v1743 = vsub.f32 %v1733, %v1741
    %v1744 = vmul.f32 %v1742, %v1742
    %v1745 = vmul.f32 %v1743, %v1743
    %v1746 = vsel %vm123, %v1744, 0.0
    %1747 = vadd.xlane.f32.xlu0 %v1746
    %v1748 = vpop.xlane.xlu0 %1747
    %v1749 = vsel %vm123, %v1745, 0.0
    %1750 = vadd.xlane.f32.xlu0 %v1749
    %v1751 = vpop.xlane.xlu0 %1750
    %v1752 = vmul.f32 %v1748, %v130
    %v1753 = vmul.f32 %v1751, %v130
    %v1754 = vadd.f32 %v1752, 1e-12
    %v1755 = vadd.f32 %v1753, 1e-12
    %v1756 = vrsqrt.pop %v1754
    %v1757 = vrsqrt.pop %v1755
    %v1758 = vmul.f32 %v1742, %v1756
    %v1759 = vmul.f32 %v1743, %v1757
    %v1760 = vlaneseq
    %v1761 = vshrl.u32 %v1760, 7
    %v1762 = vsub.s32 4, %v1761
    %v1763 = vrot.slane %v118, %v1762
    %v1764 = vmul.f32 %v1758, %v1763
    %v1765 = vmul.f32 %v1759, %v1763
    %v1766 = vlaneseq
    %v1767 = vshrl.u32 %v1766, 7
    %v1768 = vsub.s32 5, %v1767
    %v1769 = vrot.slane %v118, %v1768
    %v1770 = vadd.f32 %v1764, %v1769
    %v1771 = vadd.f32 %v1765, %v1769
    %s1772 = scalar_lea.vmem [#allocation5], 192
    %v1773 = vld [vmem:[%s1772] sm:$0xff]
    %v1774 = vld [vmem:[%s1772 + $0x8] sm:$0xff]
    %v1775 = vld [vmem:[%s1772 + $0x10] sm:$0xff]
    %v1776 = vld [vmem:[%s1772 + $0x18] sm:$0xff]
    %v1777 = vlaneseq
    %v1778 = vshrl.u32 %v1777, 7
    %v1779 = vsub.s32 6, %v1778
    %v1780 = vrot.slane %v116, %v1779
    %v1782 = vsel %vm123, %v1770, 0
    %v1785 = vsel %vm123, %v1771, 0
    %1787 = vmatprep.subr.mxu0 0.0
    %1788 = vmatpush1.msra.mxu0 %v1773
    %1789 = vmatprep.subr.mxu0 0.0
    %1790 = vmatpush1.msra.mxu0 %v1774
    %1791 = vmatprep.subr.mxu0 0.0
    %1792 = vmatpush1.msra.mxu0 %v1775
    %1793 = vmatprep.subr.mxu0 0.0
    %1794 = vmatpush1.msra.mxu0 %v1776
    %1795 = vmatprep.subr.mxu0 0.0
    %1796 = vmatpush1.msra.mxu0 0.0
    %1797 = vmatprep.subr.mxu0 0.0
    %1798 = vmatpush1.msra.mxu0 0.0
    %1799 = vmatprep.subr.mxu0 0.0
    %1800 = vmatpush1.msra.mxu0 0.0
    %1801 = vmatprep.subr.mxu0 0.0
    %1802 = vmatpush1.msra.mxu0 0.0
    %1803 = vmatprep.subr.mxu0 0.0
    %1804 = vmatpush1.msra.mxu0 0.0
    %1805 = vmatprep.subr.mxu0 0.0
    %1806 = vmatpush1.msra.mxu0 0.0
    %1807 = vmatprep.subr.mxu0 0.0
    %1808 = vmatpush1.msra.mxu0 0.0
    %1809 = vmatprep.subr.mxu0 0.0
    %1810 = vmatpush1.msra.mxu0 0.0
    %1811 = vmatprep.subr.mxu0 0.0
    %1812 = vmatpush1.msra.mxu0 0.0
    %1813 = vmatprep.subr.mxu0 0.0
    %1814 = vmatpush1.msra.mxu0 0.0
    %1815 = vmatprep.subr.mxu0 0.0
    %1816 = vmatpush1.msra.mxu0 0.0
    %1817 = vmatprep.subr.mxu0 0.0
    %1818 = vmatpush1.msra.mxu0 0.0
    %1819 = vmatprep.subr.mxu0 0.0
    %1820 = vmatpush1.msra.mxu0 0.0
    %1821 = vmatprep.subr.mxu0 0.0
    %1822 = vmatpush1.msra.mxu0 0.0
    %1823 = vmatprep.subr.mxu0 0.0
    %1824 = vmatpush1.msra.mxu0 0.0
    %1825 = vmatprep.subr.mxu0 0.0
    %1826 = vmatpush1.msra.mxu0 0.0
    %1827 = vmatprep.subr.mxu0 0.0
    %1828 = vmatpush1.msra.mxu0 0.0
    %1829 = vmatprep.subr.mxu0 0.0
    %1830 = vmatpush1.msra.mxu0 0.0
    %1831 = vmatprep.subr.mxu0 0.0
    %1832 = vmatpush1.msra.mxu0 0.0
    %1833 = vmatprep.subr.mxu0 0.0
    %1834 = vmatpush1.msra.mxu0 0.0
    %1835 = vmatprep.subr.mxu0 0.0
    %1836 = vmatpush1.msra.mxu0 0.0
    %1837 = vmatprep.subr.mxu0 0.0
    %1838 = vmatpush1.msra.mxu0 0.0
    %1839 = vmatprep.subr.mxu0 0.0
    %1840 = vmatpush1.msra.mxu0 0.0
    %1841 = vmatprep.subr.mxu0 0.0
    %1842 = vmatpush1.msra.mxu0 0.0
    %1843 = vmatprep.subr.mxu0 0.0
    %1844 = vmatpush1.msra.mxu0 0.0
    %1845 = vmatprep.subr.mxu0 0.0
    %1846 = vmatpush1.msra.mxu0 0.0
    %1847 = vmatprep.subr.mxu0 0.0
    %1848 = vmatpush1.msra.mxu0 0.0
    %1849 = vmatprep.subr.mxu0 0.0
    %1850 = vmatpush1.msra.mxu0 0.0
    %1851 = vmatprep.mubr.f32.mxu0 0.0
    %1852 = vmatmul.mubr.f32.gmra.mrb[0].mxu0 %v1782
    %v1853 = vpop.f32.mrb[0].mxu0
    %v1854 = vadd.f32 %v1780, %v1853
    %v1855 = vpop.f32.mrb[0].mxu0
    %1856 = vmatprep.mubr.f32.mxu0 0.0
    %1857 = vmatmul.mubr.f32.gmra.mrb[0].mxu0 %v1785
    %v1858 = vpop.f32.mrb[0].mxu0
    %v1859 = vadd.f32 %v1780, %v1858
    %v1860 = vpop.f32.mrb[0].mxu0
    %1861 = vdwg.mxu0
    %s1862 = scalar_lea.vmem [#allocation5], 256
    %v1863 = vld [vmem:[%s1862] sm:$0xff]
    %v1864 = vld [vmem:[%s1862 + $0x8] sm:$0xff]
    %v1865 = vld [vmem:[%s1862 + $0x10] sm:$0xff]
    %v1866 = vld [vmem:[%s1862 + $0x18] sm:$0xff]
    %v1867 = vlaneseq
    %v1868 = vshrl.u32 %v1867, 7
    %v1869 = vsub.s32 0, %v1868
    %v1870 = vrot.slane %v117, %v1869
    %1871 = vmatprep.subr.mxu0 0.0
    %1872 = vmatpush1.msra.mxu0 %v1863
    %1873 = vmatprep.subr.mxu0 0.0
    %1874 = vmatpush1.msra.mxu0 %v1864
    %1875 = vmatprep.subr.mxu0 0.0
    %1876 = vmatpush1.msra.mxu0 %v1865
    %1877 = vmatprep.subr.mxu0 0.0
    %1878 = vmatpush1.msra.mxu0 %v1866
    %1879 = vmatprep.subr.mxu0 0.0
    %1880 = vmatpush1.msra.mxu0 0.0
    %1881 = vmatprep.subr.mxu0 0.0
    %1882 = vmatpush1.msra.mxu0 0.0
    %1883 = vmatprep.subr.mxu0 0.0
    %1884 = vmatpush1.msra.mxu0 0.0
    %1885 = vmatprep.subr.mxu0 0.0
    %1886 = vmatpush1.msra.mxu0 0.0
    %1887 = vmatprep.subr.mxu0 0.0
    %1888 = vmatpush1.msra.mxu0 0.0
    %1889 = vmatprep.subr.mxu0 0.0
    %1890 = vmatpush1.msra.mxu0 0.0
    %1891 = vmatprep.subr.mxu0 0.0
    %1892 = vmatpush1.msra.mxu0 0.0
    %1893 = vmatprep.subr.mxu0 0.0
    %1894 = vmatpush1.msra.mxu0 0.0
    %1895 = vmatprep.subr.mxu0 0.0
    %1896 = vmatpush1.msra.mxu0 0.0
    %1897 = vmatprep.subr.mxu0 0.0
    %1898 = vmatpush1.msra.mxu0 0.0
    %1899 = vmatprep.subr.mxu0 0.0
    %1900 = vmatpush1.msra.mxu0 0.0
    %1901 = vmatprep.subr.mxu0 0.0
    %1902 = vmatpush1.msra.mxu0 0.0
    %1903 = vmatprep.subr.mxu0 0.0
    %1904 = vmatpush1.msra.mxu0 0.0
    %1905 = vmatprep.subr.mxu0 0.0
    %1906 = vmatpush1.msra.mxu0 0.0
    %1907 = vmatprep.subr.mxu0 0.0
    %1908 = vmatpush1.msra.mxu0 0.0
    %1909 = vmatprep.subr.mxu0 0.0
    %1910 = vmatpush1.msra.mxu0 0.0
    %1911 = vmatprep.subr.mxu0 0.0
    %1912 = vmatpush1.msra.mxu0 0.0
    %1913 = vmatprep.subr.mxu0 0.0
    %1914 = vmatpush1.msra.mxu0 0.0
    %1915 = vmatprep.subr.mxu0 0.0
    %1916 = vmatpush1.msra.mxu0 0.0
    %1917 = vmatprep.subr.mxu0 0.0
    %1918 = vmatpush1.msra.mxu0 0.0
    %1919 = vmatprep.subr.mxu0 0.0
    %1920 = vmatpush1.msra.mxu0 0.0
    %1921 = vmatprep.subr.mxu0 0.0
    %1922 = vmatpush1.msra.mxu0 0.0
    %1923 = vmatprep.subr.mxu0 0.0
    %1924 = vmatpush1.msra.mxu0 0.0
    %1925 = vmatprep.subr.mxu0 0.0
    %1926 = vmatpush1.msra.mxu0 0.0
    %1927 = vmatprep.subr.mxu0 0.0
    %1928 = vmatpush1.msra.mxu0 0.0
    %1929 = vmatprep.subr.mxu0 0.0
    %1930 = vmatpush1.msra.mxu0 0.0
    %1931 = vmatprep.subr.mxu0 0.0
    %1932 = vmatpush1.msra.mxu0 0.0
    %1933 = vmatprep.subr.mxu0 0.0
    %1934 = vmatpush1.msra.mxu0 0.0
    %1935 = vmatprep.mubr.f32.mxu0 0.0
    %1936 = vmatmul.mubr.f32.gmra.mrb[0].mxu0 %v1782
    %v1937 = vpop.f32.mrb[0].mxu0
    %v1938 = vadd.f32 %v1870, %v1937
    %v1939 = vpop.f32.mrb[0].mxu0
    %1940 = vmatprep.mubr.f32.mxu0 0.0
    %1941 = vmatmul.mubr.f32.gmra.mrb[0].mxu0 %v1785
    %v1942 = vpop.f32.mrb[0].mxu0
    %v1943 = vadd.f32 %v1870, %v1942
    %v1944 = vpop.f32.mrb[0].mxu0
    %1945 = vdwg.mxu0
    %s1946 = scalar_lea.vmem [#allocation5], 320
    %v1947 = vld [vmem:[%s1946] sm:$0xff]
    %v1948 = vld [vmem:[%s1946 + $0x8] sm:$0xff]
    %v1949 = vld [vmem:[%s1946 + $0x10] sm:$0xff]
    %v1950 = vld [vmem:[%s1946 + $0x18] sm:$0xff]
    %v1951 = vlaneseq
    %v1952 = vshrl.u32 %v1951, 7
    %v1953 = vsub.s32 2, %v1952
    %v1954 = vrot.slane %v117, %v1953
    %1955 = vmatprep.subr.mxu0 0.0
    %1956 = vmatpush1.msra.mxu0 %v1947
    %1957 = vmatprep.subr.mxu0 0.0
    %1958 = vmatpush1.msra.mxu0 %v1948
    %1959 = vmatprep.subr.mxu0 0.0
    %1960 = vmatpush1.msra.mxu0 %v1949
    %1961 = vmatprep.subr.mxu0 0.0
    %1962 = vmatpush1.msra.mxu0 %v1950
    %1963 = vmatprep.subr.mxu0 0.0
    %1964 = vmatpush1.msra.mxu0 0.0
    %1965 = vmatprep.subr.mxu0 0.0
    %1966 = vmatpush1.msra.mxu0 0.0
    %1967 = vmatprep.subr.mxu0 0.0
    %1968 = vmatpush1.msra.mxu0 0.0
    %1969 = vmatprep.subr.mxu0 0.0
    %1970 = vmatpush1.msra.mxu0 0.0
    %1971 = vmatprep.subr.mxu0 0.0
    %1972 = vmatpush1.msra.mxu0 0.0
    %1973 = vmatprep.subr.mxu0 0.0
    %1974 = vmatpush1.msra.mxu0 0.0
    %1975 = vmatprep.subr.mxu0 0.0
    %1976 = vmatpush1.msra.mxu0 0.0
    %1977 = vmatprep.subr.mxu0 0.0
    %1978 = vmatpush1.msra.mxu0 0.0
    %1979 = vmatprep.subr.mxu0 0.0
    %1980 = vmatpush1.msra.mxu0 0.0
    %1981 = vmatprep.subr.mxu0 0.0
    %1982 = vmatpush1.msra.mxu0 0.0
    %1983 = vmatprep.subr.mxu0 0.0
    %1984 = vmatpush1.msra.mxu0 0.0
    %1985 = vmatprep.subr.mxu0 0.0
    %1986 = vmatpush1.msra.mxu0 0.0
    %1987 = vmatprep.subr.mxu0 0.0
    %1988 = vmatpush1.msra.mxu0 0.0
    %1989 = vmatprep.subr.mxu0 0.0
    %1990 = vmatpush1.msra.mxu0 0.0
    %1991 = vmatprep.subr.mxu0 0.0
    %1992 = vmatpush1.msra.mxu0 0.0
    %1993 = vmatprep.subr.mxu0 0.0
    %1994 = vmatpush1.msra.mxu0 0.0
    %1995 = vmatprep.subr.mxu0 0.0
    %1996 = vmatpush1.msra.mxu0 0.0
    %1997 = vmatprep.subr.mxu0 0.0
    %1998 = vmatpush1.msra.mxu0 0.0
    %1999 = vmatprep.subr.mxu0 0.0
    %2000 = vmatpush1.msra.mxu0 0.0
    %2001 = vmatprep.subr.mxu0 0.0
    %2002 = vmatpush1.msra.mxu0 0.0
    %2003 = vmatprep.subr.mxu0 0.0
    %2004 = vmatpush1.msra.mxu0 0.0
    %2005 = vmatprep.subr.mxu0 0.0
    %2006 = vmatpush1.msra.mxu0 0.0
    %2007 = vmatprep.subr.mxu0 0.0
    %2008 = vmatpush1.msra.mxu0 0.0
    %2009 = vmatprep.subr.mxu0 0.0
    %2010 = vmatpush1.msra.mxu0 0.0
    %2011 = vmatprep.subr.mxu0 0.0
    %2012 = vmatpush1.msra.mxu0 0.0
    %2013 = vmatprep.subr.mxu0 0.0
    %2014 = vmatpush1.msra.mxu0 0.0
    %2015 = vmatprep.subr.mxu0 0.0
    %2016 = vmatpush1.msra.mxu0 0.0
    %2017 = vmatprep.subr.mxu0 0.0
    %2018 = vmatpush1.msra.mxu0 0.0
    %2019 = vmatprep.mubr.f32.mxu0 0.0
    %2020 = vmatmul.mubr.f32.gmra.mrb[0].mxu0 %v1782
    %v2021 = vpop.f32.mrb[0].mxu0
    %v2022 = vadd.f32 %v1954, %v2021
    %v2023 = vpop.f32.mrb[0].mxu0
    %2024 = vmatprep.mubr.f32.mxu0 0.0
    %2025 = vmatmul.mubr.f32.gmra.mrb[0].mxu0 %v1785
    %v2026 = vpop.f32.mrb[0].mxu0
    %v2027 = vadd.f32 %v1954, %v2026
    %v2028 = vpop.f32.mrb[0].mxu0
    %2029 = vdwg.mxu0
    %v2031 = vsel %vm420, %v1854, 0
    %v2034 = vsel %vm420, %v1938, 0
    %2036 = vmatprep.subr.mxu0 0.0
    %2037 = vmatpush1.xpose.msra.mxu0 %v2034
    %2038 = vmatprep.subr.mxu0 0.0
    %2039 = vmatpush1.xpose.msra.mxu0 0.0
    %2040 = vmatprep.subr.mxu0 0.0
    %2041 = vmatpush1.xpose.msra.mxu0 0.0
    %2042 = vmatprep.subr.mxu0 0.0
    %2043 = vmatpush1.xpose.msra.mxu0 0.0
    %2044 = vmatprep.subr.mxu0 0.0
    %2045 = vmatpush1.xpose.msra.mxu0 0.0
    %2046 = vmatprep.subr.mxu0 0.0
    %2047 = vmatpush1.xpose.msra.mxu0 0.0
    %2048 = vmatprep.subr.mxu0 0.0
    %2049 = vmatpush1.xpose.msra.mxu0 0.0
    %2050 = vmatprep.subr.mxu0 0.0
    %2051 = vmatpush1.xpose.msra.mxu0 0.0
    %2052 = vmatprep.subr.mxu0 0.0
    %2053 = vmatpush1.xpose.msra.mxu0 0.0
    %2054 = vmatprep.subr.mxu0 0.0
    %2055 = vmatpush1.xpose.msra.mxu0 0.0
    %2056 = vmatprep.subr.mxu0 0.0
    %2057 = vmatpush1.xpose.msra.mxu0 0.0
    %2058 = vmatprep.subr.mxu0 0.0
    %2059 = vmatpush1.xpose.msra.mxu0 0.0
    %2060 = vmatprep.subr.mxu0 0.0
    %2061 = vmatpush1.xpose.msra.mxu0 0.0
    %2062 = vmatprep.subr.mxu0 0.0
    %2063 = vmatpush1.xpose.msra.mxu0 0.0
    %2064 = vmatprep.subr.mxu0 0.0
    %2065 = vmatpush1.xpose.msra.mxu0 0.0
    %2066 = vmatprep.subr.mxu0 0.0
    %2067 = vmatpush1.xpose.msra.mxu0 0.0
    %2068 = vmatprep.subr.mxu0 0.0
    %2069 = vmatpush1.xpose.msra.mxu0 0.0
    %2070 = vmatprep.subr.mxu0 0.0
    %2071 = vmatpush1.xpose.msra.mxu0 0.0
    %2072 = vmatprep.subr.mxu0 0.0
    %2073 = vmatpush1.xpose.msra.mxu0 0.0
    %2074 = vmatprep.subr.mxu0 0.0
    %2075 = vmatpush1.xpose.msra.mxu0 0.0
    %2076 = vmatprep.subr.mxu0 0.0
    %2077 = vmatpush1.xpose.msra.mxu0 0.0
    %2078 = vmatprep.subr.mxu0 0.0
    %2079 = vmatpush1.xpose.msra.mxu0 0.0
    %2080 = vmatprep.subr.mxu0 0.0
    %2081 = vmatpush1.xpose.msra.mxu0 0.0
    %2082 = vmatprep.subr.mxu0 0.0
    %2083 = vmatpush1.xpose.msra.mxu0 0.0
    %2084 = vmatprep.subr.mxu0 0.0
    %2085 = vmatpush1.xpose.msra.mxu0 0.0
    %2086 = vmatprep.subr.mxu0 0.0
    %2087 = vmatpush1.xpose.msra.mxu0 0.0
    %2088 = vmatprep.subr.mxu0 0.0
    %2089 = vmatpush1.xpose.msra.mxu0 0.0
    %2090 = vmatprep.subr.mxu0 0.0
    %2091 = vmatpush1.xpose.msra.mxu0 0.0
    %2092 = vmatprep.subr.mxu0 0.0
    %2093 = vmatpush1.xpose.msra.mxu0 0.0
    %2094 = vmatprep.subr.mxu0 0.0
    %2095 = vmatpush1.xpose.msra.mxu0 0.0
    %2096 = vmatprep.subr.mxu0 0.0
    %2097 = vmatpush1.xpose.msra.mxu0 0.0
    %2098 = vmatprep.subr.mxu0 0.0
    %2099 = vmatpush1.xpose.msra.mxu0 0.0
    %2100 = vmatprep.mubr.f32.mxu0 0.0
    %2101 = vmatmul.mubr.f32.gmra.mrb[0].mxu0 %v2031
    %v2102 = vpop.f32.mrb[0].mxu0
    %v2103 = vadd.f32 0.0, %v2102
    %v2104 = vpop.f32.mrb[0].mxu0
    %2105 = vdwg.mxu0
    %v2107 = vsel %vm420, %v1859, 0
    %v2110 = vsel %vm420, %v1943, 0
    %2112 = vmatprep.subr.mxu0 0.0
    %2113 = vmatpush1.xpose.msra.mxu0 %v2110
    %2114 = vmatprep.subr.mxu0 0.0
    %2115 = vmatpush1.xpose.msra.mxu0 0.0
    %2116 = vmatprep.subr.mxu0 0.0
    %2117 = vmatpush1.xpose.msra.mxu0 0.0
    %2118 = vmatprep.subr.mxu0 0.0
    %2119 = vmatpush1.xpose.msra.mxu0 0.0
    %2120 = vmatprep.subr.mxu0 0.0
    %2121 = vmatpush1.xpose.msra.mxu0 0.0
    %2122 = vmatprep.subr.mxu0 0.0
    %2123 = vmatpush1.xpose.msra.mxu0 0.0
    %2124 = vmatprep.subr.mxu0 0.0
    %2125 = vmatpush1.xpose.msra.mxu0 0.0
    %2126 = vmatprep.subr.mxu0 0.0
    %2127 = vmatpush1.xpose.msra.mxu0 0.0
    %2128 = vmatprep.subr.mxu0 0.0
    %2129 = vmatpush1.xpose.msra.mxu0 0.0
    %2130 = vmatprep.subr.mxu0 0.0
    %2131 = vmatpush1.xpose.msra.mxu0 0.0
    %2132 = vmatprep.subr.mxu0 0.0
    %2133 = vmatpush1.xpose.msra.mxu0 0.0
    %2134 = vmatprep.subr.mxu0 0.0
    %2135 = vmatpush1.xpose.msra.mxu0 0.0
    %2136 = vmatprep.subr.mxu0 0.0
    %2137 = vmatpush1.xpose.msra.mxu0 0.0
    %2138 = vmatprep.subr.mxu0 0.0
    %2139 = vmatpush1.xpose.msra.mxu0 0.0
    %2140 = vmatprep.subr.mxu0 0.0
    %2141 = vmatpush1.xpose.msra.mxu0 0.0
    %2142 = vmatprep.subr.mxu0 0.0
    %2143 = vmatpush1.xpose.msra.mxu0 0.0
    %2144 = vmatprep.subr.mxu0 0.0
    %2145 = vmatpush1.xpose.msra.mxu0 0.0
    %2146 = vmatprep.subr.mxu0 0.0
    %2147 = vmatpush1.xpose.msra.mxu0 0.0
    %2148 = vmatprep.subr.mxu0 0.0
    %2149 = vmatpush1.xpose.msra.mxu0 0.0
    %2150 = vmatprep.subr.mxu0 0.0
    %2151 = vmatpush1.xpose.msra.mxu0 0.0
    %2152 = vmatprep.subr.mxu0 0.0
    %2153 = vmatpush1.xpose.msra.mxu0 0.0
    %2154 = vmatprep.subr.mxu0 0.0
    %2155 = vmatpush1.xpose.msra.mxu0 0.0
    %2156 = vmatprep.subr.mxu0 0.0
    %2157 = vmatpush1.xpose.msra.mxu0 0.0
    %2158 = vmatprep.subr.mxu0 0.0
    %2159 = vmatpush1.xpose.msra.mxu0 0.0
    %2160 = vmatprep.subr.mxu0 0.0
    %2161 = vmatpush1.xpose.msra.mxu0 0.0
    %2162 = vmatprep.subr.mxu0 0.0
    %2163 = vmatpush1.xpose.msra.mxu0 0.0
    %2164 = vmatprep.subr.mxu0 0.0
    %2165 = vmatpush1.xpose.msra.mxu0 0.0
    %2166 = vmatprep.subr.mxu0 0.0
    %2167 = vmatpush1.xpose.msra.mxu0 0.0
    %2168 = vmatprep.subr.mxu0 0.0
    %2169 = vmatpush1.xpose.msra.mxu0 0.0
    %2170 = vmatprep.subr.mxu0 0.0
    %2171 = vmatpush1.xpose.msra.mxu0 0.0
    %2172 = vmatprep.subr.mxu0 0.0
    %2173 = vmatpush1.xpose.msra.mxu0 0.0
    %2174 = vmatprep.subr.mxu0 0.0
    %2175 = vmatpush1.xpose.msra.mxu0 0.0
    %2176 = vmatprep.mubr.f32.mxu0 0.0
    %2177 = vmatmul.mubr.f32.gmra.mrb[0].mxu0 %v2107
    %v2178 = vpop.f32.mrb[0].mxu0
    %v2179 = vadd.f32 0.0, %v2178
    %v2180 = vpop.f32.mrb[0].mxu0
    %2181 = vdwg.mxu0
    %v2182 = vmul.f32 %v2103, 0.25
    %v2183 = vmul.f32 %v2179, 0.25
    %v2184 = vsel %vm575, %v2182, -inf
    %2185 = vmax.xlane.f32.xlu0 %v2184
    %v2186 = vpop.xlane.xlu0 %2185
    %v2187 = vsel %vm575, %v2183, -inf
    %2188 = vmax.xlane.f32.xlu0 %v2187
    %v2189 = vpop.xlane.xlu0 %2188
    %v2190 = vsub.f32 %v2182, %v2186
    %v2191 = vsub.f32 %v2183, %v2189
    %v2192 = vmul.f32 %v2190, 1.442695
    %v2193 = vpow.pop %v2192
    %v2194 = vmul.f32 %v2191, 1.442695
    %v2195 = vpow.pop %v2194
    %v2196 = vsel %vm575, %v2193, 0.0
    %2197 = vadd.xlane.f32.xlu0 %v2196
    %v2198 = vpop.xlane.xlu0 %2197
    %v2199 = vsel %vm575, %v2195, 0.0
    %2200 = vadd.xlane.f32.xlu0 %v2199
    %v2201 = vpop.xlane.xlu0 %2200
    %v2202 = vrcp.pop %v2198
    %v2203 = vrcp.pop %v2201
    %v2204 = vmul.f32 %v2193, %v2202
    %v2205 = vmul.f32 %v2195, %v2203
    %v2207 = vsel %vm575, %v2204, 0
    %2209 = vmatprep.subr.mxu0 0.0
    %2210 = vmatpush1.msra.mxu0 %v2022
    %2211 = vmatprep.subr.mxu0 0.0
    %2212 = vmatpush1.msra.mxu0 0.0
    %2213 = vmatprep.subr.mxu0 0.0
    %2214 = vmatpush1.msra.mxu0 0.0
    %2215 = vmatprep.subr.mxu0 0.0
    %2216 = vmatpush1.msra.mxu0 0.0
    %2217 = vmatprep.subr.mxu0 0.0
    %2218 = vmatpush1.msra.mxu0 0.0
    %2219 = vmatprep.subr.mxu0 0.0
    %2220 = vmatpush1.msra.mxu0 0.0
    %2221 = vmatprep.subr.mxu0 0.0
    %2222 = vmatpush1.msra.mxu0 0.0
    %2223 = vmatprep.subr.mxu0 0.0
    %2224 = vmatpush1.msra.mxu0 0.0
    %2225 = vmatprep.subr.mxu0 0.0
    %2226 = vmatpush1.msra.mxu0 0.0
    %2227 = vmatprep.subr.mxu0 0.0
    %2228 = vmatpush1.msra.mxu0 0.0
    %2229 = vmatprep.subr.mxu0 0.0
    %2230 = vmatpush1.msra.mxu0 0.0
    %2231 = vmatprep.subr.mxu0 0.0
    %2232 = vmatpush1.msra.mxu0 0.0
    %2233 = vmatprep.subr.mxu0 0.0
    %2234 = vmatpush1.msra.mxu0 0.0
    %2235 = vmatprep.subr.mxu0 0.0
    %2236 = vmatpush1.msra.mxu0 0.0
    %2237 = vmatprep.subr.mxu0 0.0
    %2238 = vmatpush1.msra.mxu0 0.0
    %2239 = vmatprep.subr.mxu0 0.0
    %2240 = vmatpush1.msra.mxu0 0.0
    %2241 = vmatprep.subr.mxu0 0.0
    %2242 = vmatpush1.msra.mxu0 0.0
    %2243 = vmatprep.subr.mxu0 0.0
    %2244 = vmatpush1.msra.mxu0 0.0
    %2245 = vmatprep.subr.mxu0 0.0
    %2246 = vmatpush1.msra.mxu0 0.0
    %2247 = vmatprep.subr.mxu0 0.0
    %2248 = vmatpush1.msra.mxu0 0.0
    %2249 = vmatprep.subr.mxu0 0.0
    %2250 = vmatpush1.msra.mxu0 0.0
    %2251 = vmatprep.subr.mxu0 0.0
    %2252 = vmatpush1.msra.mxu0 0.0
    %2253 = vmatprep.subr.mxu0 0.0
    %2254 = vmatpush1.msra.mxu0 0.0
    %2255 = vmatprep.subr.mxu0 0.0
    %2256 = vmatpush1.msra.mxu0 0.0
    %2257 = vmatprep.subr.mxu0 0.0
    %2258 = vmatpush1.msra.mxu0 0.0
    %2259 = vmatprep.subr.mxu0 0.0
    %2260 = vmatpush1.msra.mxu0 0.0
    %2261 = vmatprep.subr.mxu0 0.0
    %2262 = vmatpush1.msra.mxu0 0.0
    %2263 = vmatprep.subr.mxu0 0.0
    %2264 = vmatpush1.msra.mxu0 0.0
    %2265 = vmatprep.subr.mxu0 0.0
    %2266 = vmatpush1.msra.mxu0 0.0
    %2267 = vmatprep.subr.mxu0 0.0
    %2268 = vmatpush1.msra.mxu0 0.0
    %2269 = vmatprep.subr.mxu0 0.0
    %2270 = vmatpush1.msra.mxu0 0.0
    %2271 = vmatprep.subr.mxu0 0.0
    %2272 = vmatpush1.msra.mxu0 0.0
    %2273 = vmatprep.mubr.f32.mxu0 0.0
    %2274 = vmatmul.mubr.f32.gmra.mrb[0].mxu0 %v2207
    %v2275 = vpop.f32.mrb[0].mxu0
    %v2276 = vadd.f32 0.0, %v2275
    %v2277 = vpop.f32.mrb[0].mxu0
    %2278 = vdwg.mxu0
    %v2280 = vsel %vm575, %v2205, 0
    %2282 = vmatprep.subr.mxu0 0.0
    %2283 = vmatpush1.msra.mxu0 %v2027
    %2284 = vmatprep.subr.mxu0 0.0
    %2285 = vmatpush1.msra.mxu0 0.0
    %2286 = vmatprep.subr.mxu0 0.0
    %2287 = vmatpush1.msra.mxu0 0.0
    %2288 = vmatprep.subr.mxu0 0.0
    %2289 = vmatpush1.msra.mxu0 0.0
    %2290 = vmatprep.subr.mxu0 0.0
    %2291 = vmatpush1.msra.mxu0 0.0
    %2292 = vmatprep.subr.mxu0 0.0
    %2293 = vmatpush1.msra.mxu0 0.0
    %2294 = vmatprep.subr.mxu0 0.0
    %2295 = vmatpush1.msra.mxu0 0.0
    %2296 = vmatprep.subr.mxu0 0.0
    %2297 = vmatpush1.msra.mxu0 0.0
    %2298 = vmatprep.subr.mxu0 0.0
    %2299 = vmatpush1.msra.mxu0 0.0
    %2300 = vmatprep.subr.mxu0 0.0
    %2301 = vmatpush1.msra.mxu0 0.0
    %2302 = vmatprep.subr.mxu0 0.0
    %2303 = vmatpush1.msra.mxu0 0.0
    %2304 = vmatprep.subr.mxu0 0.0
    %2305 = vmatpush1.msra.mxu0 0.0
    %2306 = vmatprep.subr.mxu0 0.0
    %2307 = vmatpush1.msra.mxu0 0.0
    %2308 = vmatprep.subr.mxu0 0.0
    %2309 = vmatpush1.msra.mxu0 0.0
    %2310 = vmatprep.subr.mxu0 0.0
    %2311 = vmatpush1.msra.mxu0 0.0
    %2312 = vmatprep.subr.mxu0 0.0
    %2313 = vmatpush1.msra.mxu0 0.0
    %2314 = vmatprep.subr.mxu0 0.0
    %2315 = vmatpush1.msra.mxu0 0.0
    %2316 = vmatprep.subr.mxu0 0.0
    %2317 = vmatpush1.msra.mxu0 0.0
    %2318 = vmatprep.subr.mxu0 0.0
    %2319 = vmatpush1.msra.mxu0 0.0
    %2320 = vmatprep.subr.mxu0 0.0
    %2321 = vmatpush1.msra.mxu0 0.0
    %2322 = vmatprep.subr.mxu0 0.0
    %2323 = vmatpush1.msra.mxu0 0.0
    %2324 = vmatprep.subr.mxu0 0.0
    %2325 = vmatpush1.msra.mxu0 0.0
    %2326 = vmatprep.subr.mxu0 0.0
    %2327 = vmatpush1.msra.mxu0 0.0
    %2328 = vmatprep.subr.mxu0 0.0
    %2329 = vmatpush1.msra.mxu0 0.0
    %2330 = vmatprep.subr.mxu0 0.0
    %2331 = vmatpush1.msra.mxu0 0.0
    %2332 = vmatprep.subr.mxu0 0.0
    %2333 = vmatpush1.msra.mxu0 0.0
    %2334 = vmatprep.subr.mxu0 0.0
    %2335 = vmatpush1.msra.mxu0 0.0
    %2336 = vmatprep.subr.mxu0 0.0
    %2337 = vmatpush1.msra.mxu0 0.0
    %2338 = vmatprep.subr.mxu0 0.0
    %2339 = vmatpush1.msra.mxu0 0.0
    %2340 = vmatprep.subr.mxu0 0.0
    %2341 = vmatpush1.msra.mxu0 0.0
    %2342 = vmatprep.subr.mxu0 0.0
    %2343 = vmatpush1.msra.mxu0 0.0
    %2344 = vmatprep.subr.mxu0 0.0
    %2345 = vmatpush1.msra.mxu0 0.0
    %2346 = vmatprep.mubr.f32.mxu0 0.0
    %2347 = vmatmul.mubr.f32.gmra.mrb[0].mxu0 %v2280
    %v2348 = vpop.f32.mrb[0].mxu0
    %v2349 = vadd.f32 0.0, %v2348
    %v2350 = vpop.f32.mrb[0].mxu0
    %2351 = vdwg.mxu0
    %s2352 = scalar_lea.vmem [#allocation7], 32
    %v2353 = vld [vmem:[%s2352] sm:$0xff]
    %v2354 = vld [vmem:[%s2352 + $0x8] sm:$0xff]
    %s2355 = scalar_lea.vmem [#allocation5], 224
    %v2356 = vld [vmem:[%s2355] sm:$0xff]
    %v2357 = vld [vmem:[%s2355 + $0x8] sm:$0xff]
    %v2358 = vld [vmem:[%s2355 + $0x10] sm:$0xff]
    %v2359 = vld [vmem:[%s2355 + $0x18] sm:$0xff]
    %v2360 = vlaneseq
    %v2361 = vshrl.u32 %v2360, 7
    %v2362 = vsub.s32 7, %v2361
    %v2363 = vrot.slane %v116, %v2362
    %2364 = vmatprep.subr.mxu0 0.0
    %2365 = vmatpush1.msra.mxu0 %v2356
    %2366 = vmatprep.subr.mxu0 0.0
    %2367 = vmatpush1.msra.mxu0 %v2357
    %2368 = vmatprep.subr.mxu0 0.0
    %2369 = vmatpush1.msra.mxu0 %v2358
    %2370 = vmatprep.subr.mxu0 0.0
    %2371 = vmatpush1.msra.mxu0 %v2359
    %2372 = vmatprep.subr.mxu0 0.0
    %2373 = vmatpush1.msra.mxu0 0.0
    %2374 = vmatprep.subr.mxu0 0.0
    %2375 = vmatpush1.msra.mxu0 0.0
    %2376 = vmatprep.subr.mxu0 0.0
    %2377 = vmatpush1.msra.mxu0 0.0
    %2378 = vmatprep.subr.mxu0 0.0
    %2379 = vmatpush1.msra.mxu0 0.0
    %2380 = vmatprep.subr.mxu0 0.0
    %2381 = vmatpush1.msra.mxu0 0.0
    %2382 = vmatprep.subr.mxu0 0.0
    %2383 = vmatpush1.msra.mxu0 0.0
    %2384 = vmatprep.subr.mxu0 0.0
    %2385 = vmatpush1.msra.mxu0 0.0
    %2386 = vmatprep.subr.mxu0 0.0
    %2387 = vmatpush1.msra.mxu0 0.0
    %2388 = vmatprep.subr.mxu0 0.0
    %2389 = vmatpush1.msra.mxu0 0.0
    %2390 = vmatprep.subr.mxu0 0.0
    %2391 = vmatpush1.msra.mxu0 0.0
    %2392 = vmatprep.subr.mxu0 0.0
    %2393 = vmatpush1.msra.mxu0 0.0
    %2394 = vmatprep.subr.mxu0 0.0
    %2395 = vmatpush1.msra.mxu0 0.0
    %2396 = vmatprep.subr.mxu0 0.0
    %2397 = vmatpush1.msra.mxu0 0.0
    %2398 = vmatprep.subr.mxu0 0.0
    %2399 = vmatpush1.msra.mxu0 0.0
    %2400 = vmatprep.subr.mxu0 0.0
    %2401 = vmatpush1.msra.mxu0 0.0
    %2402 = vmatprep.subr.mxu0 0.0
    %2403 = vmatpush1.msra.mxu0 0.0
    %2404 = vmatprep.subr.mxu0 0.0
    %2405 = vmatpush1.msra.mxu0 0.0
    %2406 = vmatprep.subr.mxu0 0.0
    %2407 = vmatpush1.msra.mxu0 0.0
    %2408 = vmatprep.subr.mxu0 0.0
    %2409 = vmatpush1.msra.mxu0 0.0
    %2410 = vmatprep.subr.mxu0 0.0
    %2411 = vmatpush1.msra.mxu0 0.0
    %2412 = vmatprep.subr.mxu0 0.0
    %2413 = vmatpush1.msra.mxu0 0.0
    %2414 = vmatprep.subr.mxu0 0.0
    %2415 = vmatpush1.msra.mxu0 0.0
    %2416 = vmatprep.subr.mxu0 0.0
    %2417 = vmatpush1.msra.mxu0 0.0
    %2418 = vmatprep.subr.mxu0 0.0
    %2419 = vmatpush1.msra.mxu0 0.0
    %2420 = vmatprep.subr.mxu0 0.0
    %2421 = vmatpush1.msra.mxu0 0.0
    %2422 = vmatprep.subr.mxu0 0.0
    %2423 = vmatpush1.msra.mxu0 0.0
    %2424 = vmatprep.subr.mxu0 0.0
    %2425 = vmatpush1.msra.mxu0 0.0
    %2426 = vmatprep.subr.mxu0 0.0
    %2427 = vmatpush1.msra.mxu0 0.0
    %2428 = vmatprep.mubr.f32.mxu0 0.0
    %2429 = vmatmul.mubr.f32.gmra.mrb[0].mxu0 %v1782
    %v2430 = vpop.f32.mrb[0].mxu0
    %v2431 = vadd.f32 %v2363, %v2430
    %v2432 = vpop.f32.mrb[0].mxu0
    %2433 = vmatprep.mubr.f32.mxu0 0.0
    %2434 = vmatmul.mubr.f32.gmra.mrb[0].mxu0 %v1785
    %v2435 = vpop.f32.mrb[0].mxu0
    %v2436 = vadd.f32 %v2363, %v2435
    %v2437 = vpop.f32.mrb[0].mxu0
    %2438 = vdwg.mxu0
    %s2439 = scalar_lea.vmem [#allocation5], 288
    %v2440 = vld [vmem:[%s2439] sm:$0xff]
    %v2441 = vld [vmem:[%s2439 + $0x8] sm:$0xff]
    %v2442 = vld [vmem:[%s2439 + $0x10] sm:$0xff]
    %v2443 = vld [vmem:[%s2439 + $0x18] sm:$0xff]
    %v2444 = vlaneseq
    %v2445 = vshrl.u32 %v2444, 7
    %v2446 = vsub.s32 1, %v2445
    %v2447 = vrot.slane %v117, %v2446
    %2448 = vmatprep.subr.mxu0 0.0
    %2449 = vmatpush1.msra.mxu0 %v2440
    %2450 = vmatprep.subr.mxu0 0.0
    %2451 = vmatpush1.msra.mxu0 %v2441
    %2452 = vmatprep.subr.mxu0 0.0
    %2453 = vmatpush1.msra.mxu0 %v2442
    %2454 = vmatprep.subr.mxu0 0.0
    %2455 = vmatpush1.msra.mxu0 %v2443
    %2456 = vmatprep.subr.mxu0 0.0
    %2457 = vmatpush1.msra.mxu0 0.0
    %2458 = vmatprep.subr.mxu0 0.0
    %2459 = vmatpush1.msra.mxu0 0.0
    %2460 = vmatprep.subr.mxu0 0.0
    %2461 = vmatpush1.msra.mxu0 0.0
    %2462 = vmatprep.subr.mxu0 0.0
    %2463 = vmatpush1.msra.mxu0 0.0
    %2464 = vmatprep.subr.mxu0 0.0
    %2465 = vmatpush1.msra.mxu0 0.0
    %2466 = vmatprep.subr.mxu0 0.0
    %2467 = vmatpush1.msra.mxu0 0.0
    %2468 = vmatprep.subr.mxu0 0.0
    %2469 = vmatpush1.msra.mxu0 0.0
    %2470 = vmatprep.subr.mxu0 0.0
    %2471 = vmatpush1.msra.mxu0 0.0
    %2472 = vmatprep.subr.mxu0 0.0
    %2473 = vmatpush1.msra.mxu0 0.0
    %2474 = vmatprep.subr.mxu0 0.0
    %2475 = vmatpush1.msra.mxu0 0.0
    %2476 = vmatprep.subr.mxu0 0.0
    %2477 = vmatpush1.msra.mxu0 0.0
    %2478 = vmatprep.subr.mxu0 0.0
    %2479 = vmatpush1.msra.mxu0 0.0
    %2480 = vmatprep.subr.mxu0 0.0
    %2481 = vmatpush1.msra.mxu0 0.0
    %2482 = vmatprep.subr.mxu0 0.0
    %2483 = vmatpush1.msra.mxu0 0.0
    %2484 = vmatprep.subr.mxu0 0.0
    %2485 = vmatpush1.msra.mxu0 0.0
    %2486 = vmatprep.subr.mxu0 0.0
    %2487 = vmatpush1.msra.mxu0 0.0
    %2488 = vmatprep.subr.mxu0 0.0
    %2489 = vmatpush1.msra.mxu0 0.0
    %2490 = vmatprep.subr.mxu0 0.0
    %2491 = vmatpush1.msra.mxu0 0.0
    %2492 = vmatprep.subr.mxu0 0.0
    %2493 = vmatpush1.msra.mxu0 0.0
    %2494 = vmatprep.subr.mxu0 0.0
    %2495 = vmatpush1.msra.mxu0 0.0
    %2496 = vmatprep.subr.mxu0 0.0
    %2497 = vmatpush1.msra.mxu0 0.0
    %2498 = vmatprep.subr.mxu0 0.0
    %2499 = vmatpush1.msra.mxu0 0.0
    %2500 = vmatprep.subr.mxu0 0.0
    %2501 = vmatpush1.msra.mxu0 0.0
    %2502 = vmatprep.subr.mxu0 0.0
    %2503 = vmatpush1.msra.mxu0 0.0
    %2504 = vmatprep.subr.mxu0 0.0
    %2505 = vmatpush1.msra.mxu0 0.0
    %2506 = vmatprep.subr.mxu0 0.0
    %2507 = vmatpush1.msra.mxu0 0.0
    %2508 = vmatprep.subr.mxu0 0.0
    %2509 = vmatpush1.msra.mxu0 0.0
    %2510 = vmatprep.subr.mxu0 0.0
    %2511 = vmatpush1.msra.mxu0 0.0
    %2512 = vmatprep.mubr.f32.mxu0 0.0
    %2513 = vmatmul.mubr.f32.gmra.mrb[0].mxu0 %v1782
    %v2514 = vpop.f32.mrb[0].mxu0
    %v2515 = vadd.f32 %v2447, %v2514
    %v2516 = vpop.f32.mrb[0].mxu0
    %2517 = vmatprep.mubr.f32.mxu0 0.0
    %2518 = vmatmul.mubr.f32.gmra.mrb[0].mxu0 %v1785
    %v2519 = vpop.f32.mrb[0].mxu0
    %v2520 = vadd.f32 %v2447, %v2519
    %v2521 = vpop.f32.mrb[0].mxu0
    %2522 = vdwg.mxu0
    %s2523 = scalar_lea.vmem [#allocation5], 352
    %v2524 = vld [vmem:[%s2523] sm:$0xff]
    %v2525 = vld [vmem:[%s2523 + $0x8] sm:$0xff]
    %v2526 = vld [vmem:[%s2523 + $0x10] sm:$0xff]
    %v2527 = vld [vmem:[%s2523 + $0x18] sm:$0xff]
    %v2528 = vlaneseq
    %v2529 = vshrl.u32 %v2528, 7
    %v2530 = vsub.s32 3, %v2529
    %v2531 = vrot.slane %v117, %v2530
    %2532 = vmatprep.subr.mxu0 0.0
    %2533 = vmatpush1.msra.mxu0 %v2524
    %2534 = vmatprep.subr.mxu0 0.0
    %2535 = vmatpush1.msra.mxu0 %v2525
    %2536 = vmatprep.subr.mxu0 0.0
    %2537 = vmatpush1.msra.mxu0 %v2526
    %2538 = vmatprep.subr.mxu0 0.0
    %2539 = vmatpush1.msra.mxu0 %v2527
    %2540 = vmatprep.subr.mxu0 0.0
    %2541 = vmatpush1.msra.mxu0 0.0
    %2542 = vmatprep.subr.mxu0 0.0
    %2543 = vmatpush1.msra.mxu0 0.0
    %2544 = vmatprep.subr.mxu0 0.0
    %2545 = vmatpush1.msra.mxu0 0.0
    %2546 = vmatprep.subr.mxu0 0.0
    %2547 = vmatpush1.msra.mxu0 0.0
    %2548 = vmatprep.subr.mxu0 0.0
    %2549 = vmatpush1.msra.mxu0 0.0
    %2550 = vmatprep.subr.mxu0 0.0
    %2551 = vmatpush1.msra.mxu0 0.0
    %2552 = vmatprep.subr.mxu0 0.0
    %2553 = vmatpush1.msra.mxu0 0.0
    %2554 = vmatprep.subr.mxu0 0.0
    %2555 = vmatpush1.msra.mxu0 0.0
    %2556 = vmatprep.subr.mxu0 0.0
    %2557 = vmatpush1.msra.mxu0 0.0
    %2558 = vmatprep.subr.mxu0 0.0
    %2559 = vmatpush1.msra.mxu0 0.0
    %2560 = vmatprep.subr.mxu0 0.0
    %2561 = vmatpush1.msra.mxu0 0.0
    %2562 = vmatprep.subr.mxu0 0.0
    %2563 = vmatpush1.msra.mxu0 0.0
    %2564 = vmatprep.subr.mxu0 0.0
    %2565 = vmatpush1.msra.mxu0 0.0
    %2566 = vmatprep.subr.mxu0 0.0
    %2567 = vmatpush1.msra.mxu0 0.0
    %2568 = vmatprep.subr.mxu0 0.0
    %2569 = vmatpush1.msra.mxu0 0.0
    %2570 = vmatprep.subr.mxu0 0.0
    %2571 = vmatpush1.msra.mxu0 0.0
    %2572 = vmatprep.subr.mxu0 0.0
    %2573 = vmatpush1.msra.mxu0 0.0
    %2574 = vmatprep.subr.mxu0 0.0
    %2575 = vmatpush1.msra.mxu0 0.0
    %2576 = vmatprep.subr.mxu0 0.0
    %2577 = vmatpush1.msra.mxu0 0.0
    %2578 = vmatprep.subr.mxu0 0.0
    %2579 = vmatpush1.msra.mxu0 0.0
    %2580 = vmatprep.subr.mxu0 0.0
    %2581 = vmatpush1.msra.mxu0 0.0
    %2582 = vmatprep.subr.mxu0 0.0
    %2583 = vmatpush1.msra.mxu0 0.0
    %2584 = vmatprep.subr.mxu0 0.0
    %2585 = vmatpush1.msra.mxu0 0.0
    %2586 = vmatprep.subr.mxu0 0.0
    %2587 = vmatpush1.msra.mxu0 0.0
    %2588 = vmatprep.subr.mxu0 0.0
    %2589 = vmatpush1.msra.mxu0 0.0
    %2590 = vmatprep.subr.mxu0 0.0
    %2591 = vmatpush1.msra.mxu0 0.0
    %2592 = vmatprep.subr.mxu0 0.0
    %2593 = vmatpush1.msra.mxu0 0.0
    %2594 = vmatprep.subr.mxu0 0.0
    %2595 = vmatpush1.msra.mxu0 0.0
    %2596 = vmatprep.mubr.f32.mxu0 0.0
    %2597 = vmatmul.mubr.f32.gmra.mrb[0].mxu0 %v1782
    %v2598 = vpop.f32.mrb[0].mxu0
    %v2599 = vadd.f32 %v2531, %v2598
    %v2600 = vpop.f32.mrb[0].mxu0
    %2601 = vmatprep.mubr.f32.mxu0 0.0
    %2602 = vmatmul.mubr.f32.gmra.mrb[0].mxu0 %v1785
    %v2603 = vpop.f32.mrb[0].mxu0
    %v2604 = vadd.f32 %v2531, %v2603
    %v2605 = vpop.f32.mrb[0].mxu0
    %2606 = vdwg.mxu0
    %v2608 = vsel %vm420, %v2431, 0
    %v2611 = vsel %vm420, %v2515, 0
    %2613 = vmatprep.subr.mxu0 0.0
    %2614 = vmatpush1.xpose.msra.mxu0 %v2611
    %2615 = vmatprep.subr.mxu0 0.0
    %2616 = vmatpush1.xpose.msra.mxu0 0.0
    %2617 = vmatprep.subr.mxu0 0.0
    %2618 = vmatpush1.xpose.msra.mxu0 0.0
    %2619 = vmatprep.subr.mxu0 0.0
    %2620 = vmatpush1.xpose.msra.mxu0 0.0
    %2621 = vmatprep.subr.mxu0 0.0
    %2622 = vmatpush1.xpose.msra.mxu0 0.0
    %2623 = vmatprep.subr.mxu0 0.0
    %2624 = vmatpush1.xpose.msra.mxu0 0.0
    %2625 = vmatprep.subr.mxu0 0.0
    %2626 = vmatpush1.xpose.msra.mxu0 0.0
    %2627 = vmatprep.subr.mxu0 0.0
    %2628 = vmatpush1.xpose.msra.mxu0 0.0
    %2629 = vmatprep.subr.mxu0 0.0
    %2630 = vmatpush1.xpose.msra.mxu0 0.0
    %2631 = vmatprep.subr.mxu0 0.0
    %2632 = vmatpush1.xpose.msra.mxu0 0.0
    %2633 = vmatprep.subr.mxu0 0.0
    %2634 = vmatpush1.xpose.msra.mxu0 0.0
    %2635 = vmatprep.subr.mxu0 0.0
    %2636 = vmatpush1.xpose.msra.mxu0 0.0
    %2637 = vmatprep.subr.mxu0 0.0
    %2638 = vmatpush1.xpose.msra.mxu0 0.0
    %2639 = vmatprep.subr.mxu0 0.0
    %2640 = vmatpush1.xpose.msra.mxu0 0.0
    %2641 = vmatprep.subr.mxu0 0.0
    %2642 = vmatpush1.xpose.msra.mxu0 0.0
    %2643 = vmatprep.subr.mxu0 0.0
    %2644 = vmatpush1.xpose.msra.mxu0 0.0
    %2645 = vmatprep.subr.mxu0 0.0
    %2646 = vmatpush1.xpose.msra.mxu0 0.0
    %2647 = vmatprep.subr.mxu0 0.0
    %2648 = vmatpush1.xpose.msra.mxu0 0.0
    %2649 = vmatprep.subr.mxu0 0.0
    %2650 = vmatpush1.xpose.msra.mxu0 0.0
    %2651 = vmatprep.subr.mxu0 0.0
    %2652 = vmatpush1.xpose.msra.mxu0 0.0
    %2653 = vmatprep.subr.mxu0 0.0
    %2654 = vmatpush1.xpose.msra.mxu0 0.0
    %2655 = vmatprep.subr.mxu0 0.0
    %2656 = vmatpush1.xpose.msra.mxu0 0.0
    %2657 = vmatprep.subr.mxu0 0.0
    %2658 = vmatpush1.xpose.msra.mxu0 0.0
    %2659 = vmatprep.subr.mxu0 0.0
    %2660 = vmatpush1.xpose.msra.mxu0 0.0
    %2661 = vmatprep.subr.mxu0 0.0
    %2662 = vmatpush1.xpose.msra.mxu0 0.0
    %2663 = vmatprep.subr.mxu0 0.0
    %2664 = vmatpush1.xpose.msra.mxu0 0.0
    %2665 = vmatprep.subr.mxu0 0.0
    %2666 = vmatpush1.xpose.msra.mxu0 0.0
    %2667 = vmatprep.subr.mxu0 0.0
    %2668 = vmatpush1.xpose.msra.mxu0 0.0
    %2669 = vmatprep.subr.mxu0 0.0
    %2670 = vmatpush1.xpose.msra.mxu0 0.0
    %2671 = vmatprep.subr.mxu0 0.0
    %2672 = vmatpush1.xpose.msra.mxu0 0.0
    %2673 = vmatprep.subr.mxu0 0.0
    %2674 = vmatpush1.xpose.msra.mxu0 0.0
    %2675 = vmatprep.subr.mxu0 0.0
    %2676 = vmatpush1.xpose.msra.mxu0 0.0
    %2677 = vmatprep.mubr.f32.mxu0 0.0
    %2678 = vmatmul.mubr.f32.gmra.mrb[0].mxu0 %v2608
    %v2679 = vpop.f32.mrb[0].mxu0
    %v2680 = vadd.f32 0.0, %v2679
    %v2681 = vpop.f32.mrb[0].mxu0
    %2682 = vdwg.mxu0
    %v2684 = vsel %vm420, %v2436, 0
    %v2687 = vsel %vm420, %v2520, 0
    %2689 = vmatprep.subr.mxu0 0.0
    %2690 = vmatpush1.xpose.msra.mxu0 %v2687
    %2691 = vmatprep.subr.mxu0 0.0
    %2692 = vmatpush1.xpose.msra.mxu0 0.0
    %2693 = vmatprep.subr.mxu0 0.0
    %2694 = vmatpush1.xpose.msra.mxu0 0.0
    %2695 = vmatprep.subr.mxu0 0.0
    %2696 = vmatpush1.xpose.msra.mxu0 0.0
    %2697 = vmatprep.subr.mxu0 0.0
    %2698 = vmatpush1.xpose.msra.mxu0 0.0
    %2699 = vmatprep.subr.mxu0 0.0
    %2700 = vmatpush1.xpose.msra.mxu0 0.0
    %2701 = vmatprep.subr.mxu0 0.0
    %2702 = vmatpush1.xpose.msra.mxu0 0.0
    %2703 = vmatprep.subr.mxu0 0.0
    %2704 = vmatpush1.xpose.msra.mxu0 0.0
    %2705 = vmatprep.subr.mxu0 0.0
    %2706 = vmatpush1.xpose.msra.mxu0 0.0
    %2707 = vmatprep.subr.mxu0 0.0
    %2708 = vmatpush1.xpose.msra.mxu0 0.0
    %2709 = vmatprep.subr.mxu0 0.0
    %2710 = vmatpush1.xpose.msra.mxu0 0.0
    %2711 = vmatprep.subr.mxu0 0.0
    %2712 = vmatpush1.xpose.msra.mxu0 0.0
    %2713 = vmatprep.subr.mxu0 0.0
    %2714 = vmatpush1.xpose.msra.mxu0 0.0
    %2715 = vmatprep.subr.mxu0 0.0
    %2716 = vmatpush1.xpose.msra.mxu0 0.0
    %2717 = vmatprep.subr.mxu0 0.0
    %2718 = vmatpush1.xpose.msra.mxu0 0.0
    %2719 = vmatprep.subr.mxu0 0.0
    %2720 = vmatpush1.xpose.msra.mxu0 0.0
    %2721 = vmatprep.subr.mxu0 0.0
    %2722 = vmatpush1.xpose.msra.mxu0 0.0
    %2723 = vmatprep.subr.mxu0 0.0
    %2724 = vmatpush1.xpose.msra.mxu0 0.0
    %2725 = vmatprep.subr.mxu0 0.0
    %2726 = vmatpush1.xpose.msra.mxu0 0.0
    %2727 = vmatprep.subr.mxu0 0.0
    %2728 = vmatpush1.xpose.msra.mxu0 0.0
    %2729 = vmatprep.subr.mxu0 0.0
    %2730 = vmatpush1.xpose.msra.mxu0 0.0
    %2731 = vmatprep.subr.mxu0 0.0
    %2732 = vmatpush1.xpose.msra.mxu0 0.0
    %2733 = vmatprep.subr.mxu0 0.0
    %2734 = vmatpush1.xpose.msra.mxu0 0.0
    %2735 = vmatprep.subr.mxu0 0.0
    %2736 = vmatpush1.xpose.msra.mxu0 0.0
    %2737 = vmatprep.subr.mxu0 0.0
    %2738 = vmatpush1.xpose.msra.mxu0 0.0
    %2739 = vmatprep.subr.mxu0 0.0
    %2740 = vmatpush1.xpose.msra.mxu0 0.0
    %2741 = vmatprep.subr.mxu0 0.0
    %2742 = vmatpush1.xpose.msra.mxu0 0.0
    %2743 = vmatprep.subr.mxu0 0.0
    %2744 = vmatpush1.xpose.msra.mxu0 0.0
    %2745 = vmatprep.subr.mxu0 0.0
    %2746 = vmatpush1.xpose.msra.mxu0 0.0
    %2747 = vmatprep.subr.mxu0 0.0
    %2748 = vmatpush1.xpose.msra.mxu0 0.0
    %2749 = vmatprep.subr.mxu0 0.0
    %2750 = vmatpush1.xpose.msra.mxu0 0.0
    %2751 = vmatprep.subr.mxu0 0.0
    %2752 = vmatpush1.xpose.msra.mxu0 0.0
    %2753 = vmatprep.mubr.f32.mxu0 0.0
    %2754 = vmatmul.mubr.f32.gmra.mrb[0].mxu0 %v2684
    %v2755 = vpop.f32.mrb[0].mxu0
    %v2756 = vadd.f32 0.0, %v2755
    %v2757 = vpop.f32.mrb[0].mxu0
    %2758 = vdwg.mxu0
    %v2759 = vmul.f32 %v2680, 0.25
    %v2760 = vmul.f32 %v2756, 0.25
    %v2761 = vsel %vm575, %v2759, -inf
    %2762 = vmax.xlane.f32.xlu0 %v2761
    %v2763 = vpop.xlane.xlu0 %2762
    %v2764 = vsel %vm575, %v2760, -inf
    %2765 = vmax.xlane.f32.xlu0 %v2764
    %v2766 = vpop.xlane.xlu0 %2765
    %v2767 = vsub.f32 %v2759, %v2763
    %v2768 = vsub.f32 %v2760, %v2766
    %v2769 = vmul.f32 %v2767, 1.442695
    %v2770 = vpow.pop %v2769
    %v2771 = vmul.f32 %v2768, 1.442695
    %v2772 = vpow.pop %v2771
    %v2773 = vsel %vm575, %v2770, 0.0
    %2774 = vadd.xlane.f32.xlu0 %v2773
    %v2775 = vpop.xlane.xlu0 %2774
    %v2776 = vsel %vm575, %v2772, 0.0
    %2777 = vadd.xlane.f32.xlu0 %v2776
    %v2778 = vpop.xlane.xlu0 %2777
    %v2779 = vrcp.pop %v2775
    %v2780 = vrcp.pop %v2778
    %v2781 = vmul.f32 %v2770, %v2779
    %v2782 = vmul.f32 %v2772, %v2780
    %v2784 = vsel %vm575, %v2781, 0
    %2786 = vmatprep.subr.mxu0 0.0
    %2787 = vmatpush1.msra.mxu0 %v2599
    %2788 = vmatprep.subr.mxu0 0.0
    %2789 = vmatpush1.msra.mxu0 0.0
    %2790 = vmatprep.subr.mxu0 0.0
    %2791 = vmatpush1.msra.mxu0 0.0
    %2792 = vmatprep.subr.mxu0 0.0
    %2793 = vmatpush1.msra.mxu0 0.0
    %2794 = vmatprep.subr.mxu0 0.0
    %2795 = vmatpush1.msra.mxu0 0.0
    %2796 = vmatprep.subr.mxu0 0.0
    %2797 = vmatpush1.msra.mxu0 0.0
    %2798 = vmatprep.subr.mxu0 0.0
    %2799 = vmatpush1.msra.mxu0 0.0
    %2800 = vmatprep.subr.mxu0 0.0
    %2801 = vmatpush1.msra.mxu0 0.0
    %2802 = vmatprep.subr.mxu0 0.0
    %2803 = vmatpush1.msra.mxu0 0.0
    %2804 = vmatprep.subr.mxu0 0.0
    %2805 = vmatpush1.msra.mxu0 0.0
    %2806 = vmatprep.subr.mxu0 0.0
    %2807 = vmatpush1.msra.mxu0 0.0
    %2808 = vmatprep.subr.mxu0 0.0
    %2809 = vmatpush1.msra.mxu0 0.0
    %2810 = vmatprep.subr.mxu0 0.0
    %2811 = vmatpush1.msra.mxu0 0.0
    %2812 = vmatprep.subr.mxu0 0.0
    %2813 = vmatpush1.msra.mxu0 0.0
    %2814 = vmatprep.subr.mxu0 0.0
    %2815 = vmatpush1.msra.mxu0 0.0
    %2816 = vmatprep.subr.mxu0 0.0
    %2817 = vmatpush1.msra.mxu0 0.0
    %2818 = vmatprep.subr.mxu0 0.0
    %2819 = vmatpush1.msra.mxu0 0.0
    %2820 = vmatprep.subr.mxu0 0.0
    %2821 = vmatpush1.msra.mxu0 0.0
    %2822 = vmatprep.subr.mxu0 0.0
    %2823 = vmatpush1.msra.mxu0 0.0
    %2824 = vmatprep.subr.mxu0 0.0
    %2825 = vmatpush1.msra.mxu0 0.0
    %2826 = vmatprep.subr.mxu0 0.0
    %2827 = vmatpush1.msra.mxu0 0.0
    %2828 = vmatprep.subr.mxu0 0.0
    %2829 = vmatpush1.msra.mxu0 0.0
    %2830 = vmatprep.subr.mxu0 0.0
    %2831 = vmatpush1.msra.mxu0 0.0
    %2832 = vmatprep.subr.mxu0 0.0
    %2833 = vmatpush1.msra.mxu0 0.0
    %2834 = vmatprep.subr.mxu0 0.0
    %2835 = vmatpush1.msra.mxu0 0.0
    %2836 = vmatprep.subr.mxu0 0.0
    %2837 = vmatpush1.msra.mxu0 0.0
    %2838 = vmatprep.subr.mxu0 0.0
    %2839 = vmatpush1.msra.mxu0 0.0
    %2840 = vmatprep.subr.mxu0 0.0
    %2841 = vmatpush1.msra.mxu0 0.0
    %2842 = vmatprep.subr.mxu0 0.0
    %2843 = vmatpush1.msra.mxu0 0.0
    %2844 = vmatprep.subr.mxu0 0.0
    %2845 = vmatpush1.msra.mxu0 0.0
    %2846 = vmatprep.subr.mxu0 0.0
    %2847 = vmatpush1.msra.mxu0 0.0
    %2848 = vmatprep.subr.mxu0 0.0
    %2849 = vmatpush1.msra.mxu0 0.0
    %2850 = vmatprep.mubr.f32.mxu0 0.0
    %2851 = vmatmul.mubr.f32.gmra.mrb[0].mxu0 %v2784
    %v2852 = vpop.f32.mrb[0].mxu0
    %v2853 = vadd.f32 0.0, %v2852
    %v2854 = vpop.f32.mrb[0].mxu0
    %2855 = vdwg.mxu0
    %v2857 = vsel %vm575, %v2782, 0
    %2859 = vmatprep.subr.mxu0 0.0
    %2860 = vmatpush1.msra.mxu0 %v2604
    %2861 = vmatprep.subr.mxu0 0.0
    %2862 = vmatpush1.msra.mxu0 0.0
    %2863 = vmatprep.subr.mxu0 0.0
    %2864 = vmatpush1.msra.mxu0 0.0
    %2865 = vmatprep.subr.mxu0 0.0
    %2866 = vmatpush1.msra.mxu0 0.0
    %2867 = vmatprep.subr.mxu0 0.0
    %2868 = vmatpush1.msra.mxu0 0.0
    %2869 = vmatprep.subr.mxu0 0.0
    %2870 = vmatpush1.msra.mxu0 0.0
    %2871 = vmatprep.subr.mxu0 0.0
    %2872 = vmatpush1.msra.mxu0 0.0
    %2873 = vmatprep.subr.mxu0 0.0
    %2874 = vmatpush1.msra.mxu0 0.0
    %2875 = vmatprep.subr.mxu0 0.0
    %2876 = vmatpush1.msra.mxu0 0.0
    %2877 = vmatprep.subr.mxu0 0.0
    %2878 = vmatpush1.msra.mxu0 0.0
    %2879 = vmatprep.subr.mxu0 0.0
    %2880 = vmatpush1.msra.mxu0 0.0
    %2881 = vmatprep.subr.mxu0 0.0
    %2882 = vmatpush1.msra.mxu0 0.0
    %2883 = vmatprep.subr.mxu0 0.0
    %2884 = vmatpush1.msra.mxu0 0.0
    %2885 = vmatprep.subr.mxu0 0.0
    %2886 = vmatpush1.msra.mxu0 0.0
    %2887 = vmatprep.subr.mxu0 0.0
    %2888 = vmatpush1.msra.mxu0 0.0
    %2889 = vmatprep.subr.mxu0 0.0
    %2890 = vmatpush1.msra.mxu0 0.0
    %2891 = vmatprep.subr.mxu0 0.0
    %2892 = vmatpush1.msra.mxu0 0.0
    %2893 = vmatprep.subr.mxu0 0.0
    %2894 = vmatpush1.msra.mxu0 0.0
    %2895 = vmatprep.subr.mxu0 0.0
    %2896 = vmatpush1.msra.mxu0 0.0
    %2897 = vmatprep.subr.mxu0 0.0
    %2898 = vmatpush1.msra.mxu0 0.0
    %2899 = vmatprep.subr.mxu0 0.0
    %2900 = vmatpush1.msra.mxu0 0.0
    %2901 = vmatprep.subr.mxu0 0.0
    %2902 = vmatpush1.msra.mxu0 0.0
    %2903 = vmatprep.subr.mxu0 0.0
    %2904 = vmatpush1.msra.mxu0 0.0
    %2905 = vmatprep.subr.mxu0 0.0
    %2906 = vmatpush1.msra.mxu0 0.0
    %2907 = vmatprep.subr.mxu0 0.0
    %2908 = vmatpush1.msra.mxu0 0.0
    %2909 = vmatprep.subr.mxu0 0.0
    %2910 = vmatpush1.msra.mxu0 0.0
    %2911 = vmatprep.subr.mxu0 0.0
    %2912 = vmatpush1.msra.mxu0 0.0
    %2913 = vmatprep.subr.mxu0 0.0
    %2914 = vmatpush1.msra.mxu0 0.0
    %2915 = vmatprep.subr.mxu0 0.0
    %2916 = vmatpush1.msra.mxu0 0.0
    %2917 = vmatprep.subr.mxu0 0.0
    %2918 = vmatpush1.msra.mxu0 0.0
    %2919 = vmatprep.subr.mxu0 0.0
    %2920 = vmatpush1.msra.mxu0 0.0
    %2921 = vmatprep.subr.mxu0 0.0
    %2922 = vmatpush1.msra.mxu0 0.0
    %2923 = vmatprep.mubr.f32.mxu0 0.0
    %2924 = vmatmul.mubr.f32.gmra.mrb[0].mxu0 %v2857
    %v2925 = vpop.f32.mrb[0].mxu0
    %v2926 = vadd.f32 0.0, %v2925
    %v2927 = vpop.f32.mrb[0].mxu0
    %2928 = vdwg.mxu0
    %s2929 = scalar_lea.vmem [#allocation7], 48
    %v2930 = vld [vmem:[%s2929] sm:$0xff]
    %v2931 = vld [vmem:[%s2929 + $0x8] sm:$0xff]
    %v2933 = vsel %vm420, %v2853, 0
    %v2936 = vsel %vm420, %v2926, 0
    %2938 = vmatprep.subr.mxu0 0.0
    %2939 = vmatpush1.msra.mxu0 %v2930
    %2940 = vmatprep.subr.mxu0 0.0
    %2941 = vmatpush1.msra.mxu0 %v2931
    %2942 = vmatprep.subr.mxu0 0.0
    %2943 = vmatpush1.msra.mxu0 0.0
    %2944 = vmatprep.subr.mxu0 0.0
    %2945 = vmatpush1.msra.mxu0 0.0
    %2946 = vmatprep.subr.mxu0 0.0
    %2947 = vmatpush1.msra.mxu0 0.0
    %2948 = vmatprep.subr.mxu0 0.0
    %2949 = vmatpush1.msra.mxu0 0.0
    %2950 = vmatprep.subr.mxu0 0.0
    %2951 = vmatpush1.msra.mxu0 0.0
    %2952 = vmatprep.subr.mxu0 0.0
    %2953 = vmatpush1.msra.mxu0 0.0
    %2954 = vmatprep.subr.mxu0 0.0
    %2955 = vmatpush1.msra.mxu0 0.0
    %2956 = vmatprep.subr.mxu0 0.0
    %2957 = vmatpush1.msra.mxu0 0.0
    %2958 = vmatprep.subr.mxu0 0.0
    %2959 = vmatpush1.msra.mxu0 0.0
    %2960 = vmatprep.subr.mxu0 0.0
    %2961 = vmatpush1.msra.mxu0 0.0
    %2962 = vmatprep.subr.mxu0 0.0
    %2963 = vmatpush1.msra.mxu0 0.0
    %2964 = vmatprep.subr.mxu0 0.0
    %2965 = vmatpush1.msra.mxu0 0.0
    %2966 = vmatprep.subr.mxu0 0.0
    %2967 = vmatpush1.msra.mxu0 0.0
    %2968 = vmatprep.subr.mxu0 0.0
    %2969 = vmatpush1.msra.mxu0 0.0
    %2970 = vmatprep.subr.mxu0 0.0
    %2971 = vmatpush1.msra.mxu0 0.0
    %2972 = vmatprep.subr.mxu0 0.0
    %2973 = vmatpush1.msra.mxu0 0.0
    %2974 = vmatprep.subr.mxu0 0.0
    %2975 = vmatpush1.msra.mxu0 0.0
    %2976 = vmatprep.subr.mxu0 0.0
    %2977 = vmatpush1.msra.mxu0 0.0
    %2978 = vmatprep.subr.mxu0 0.0
    %2979 = vmatpush1.msra.mxu0 0.0
    %2980 = vmatprep.subr.mxu0 0.0
    %2981 = vmatpush1.msra.mxu0 0.0
    %2982 = vmatprep.subr.mxu0 0.0
    %2983 = vmatpush1.msra.mxu0 0.0
    %2984 = vmatprep.subr.mxu0 0.0
    %2985 = vmatpush1.msra.mxu0 0.0
    %2986 = vmatprep.subr.mxu0 0.0
    %2987 = vmatpush1.msra.mxu0 0.0
    %2988 = vmatprep.subr.mxu0 0.0
    %2989 = vmatpush1.msra.mxu0 0.0
    %2990 = vmatprep.subr.mxu0 0.0
    %2991 = vmatpush1.msra.mxu0 0.0
    %2992 = vmatprep.subr.mxu0 0.0
    %2993 = vmatpush1.msra.mxu0 0.0
    %2994 = vmatprep.subr.mxu0 0.0
    %2995 = vmatpush1.msra.mxu0 0.0
    %2996 = vmatprep.subr.mxu0 0.0
    %2997 = vmatpush1.msra.mxu0 0.0
    %2998 = vmatprep.subr.mxu0 0.0
    %2999 = vmatpush1.msra.mxu0 0.0
    %3000 = vmatprep.subr.mxu0 0.0
    %3001 = vmatpush1.msra.mxu0 0.0
    %3002 = vmatprep.mubr.f32.mxu0 0.0
    %3003 = vmatmul.mubr.f32.gmra.mrb[0].mxu0 %v2933
    %v3004 = vpop.f32.mrb[0].mxu0
    %v3005 = vadd.f32 0.0, %v3004
    %v3006 = vpop.f32.mrb[0].mxu0
    %3007 = vmatprep.mubr.f32.mxu0 0.0
    %3008 = vmatmul.mubr.f32.gmra.mrb[0].mxu0 %v2936
    %v3009 = vpop.f32.mrb[0].mxu0
    %v3010 = vadd.f32 0.0, %v3009
    %v3011 = vpop.f32.mrb[0].mxu0
    %3012 = vdwg.mxu0
    %v3014 = vsel %vm420, %v2276, 0
    %v3017 = vsel %vm420, %v2349, 0
    %3019 = vmatprep.subr.mxu0 0.0
    %3020 = vmatpush1.msra.mxu0 %v2353
    %3021 = vmatprep.subr.mxu0 0.0
    %3022 = vmatpush1.msra.mxu0 %v2354
    %3023 = vmatprep.subr.mxu0 0.0
    %3024 = vmatpush1.msra.mxu0 0.0
    %3025 = vmatprep.subr.mxu0 0.0
    %3026 = vmatpush1.msra.mxu0 0.0
    %3027 = vmatprep.subr.mxu0 0.0
    %3028 = vmatpush1.msra.mxu0 0.0
    %3029 = vmatprep.subr.mxu0 0.0
    %3030 = vmatpush1.msra.mxu0 0.0
    %3031 = vmatprep.subr.mxu0 0.0
    %3032 = vmatpush1.msra.mxu0 0.0
    %3033 = vmatprep.subr.mxu0 0.0
    %3034 = vmatpush1.msra.mxu0 0.0
    %3035 = vmatprep.subr.mxu0 0.0
    %3036 = vmatpush1.msra.mxu0 0.0
    %3037 = vmatprep.subr.mxu0 0.0
    %3038 = vmatpush1.msra.mxu0 0.0
    %3039 = vmatprep.subr.mxu0 0.0
    %3040 = vmatpush1.msra.mxu0 0.0
    %3041 = vmatprep.subr.mxu0 0.0
    %3042 = vmatpush1.msra.mxu0 0.0
    %3043 = vmatprep.subr.mxu0 0.0
    %3044 = vmatpush1.msra.mxu0 0.0
    %3045 = vmatprep.subr.mxu0 0.0
    %3046 = vmatpush1.msra.mxu0 0.0
    %3047 = vmatprep.subr.mxu0 0.0
    %3048 = vmatpush1.msra.mxu0 0.0
    %3049 = vmatprep.subr.mxu0 0.0
    %3050 = vmatpush1.msra.mxu0 0.0
    %3051 = vmatprep.subr.mxu0 0.0
    %3052 = vmatpush1.msra.mxu0 0.0
    %3053 = vmatprep.subr.mxu0 0.0
    %3054 = vmatpush1.msra.mxu0 0.0
    %3055 = vmatprep.subr.mxu0 0.0
    %3056 = vmatpush1.msra.mxu0 0.0
    %3057 = vmatprep.subr.mxu0 0.0
    %3058 = vmatpush1.msra.mxu0 0.0
    %3059 = vmatprep.subr.mxu0 0.0
    %3060 = vmatpush1.msra.mxu0 0.0
    %3061 = vmatprep.subr.mxu0 0.0
    %3062 = vmatpush1.msra.mxu0 0.0
    %3063 = vmatprep.subr.mxu0 0.0
    %3064 = vmatpush1.msra.mxu0 0.0
    %3065 = vmatprep.subr.mxu0 0.0
    %3066 = vmatpush1.msra.mxu0 0.0
    %3067 = vmatprep.subr.mxu0 0.0
    %3068 = vmatpush1.msra.mxu0 0.0
    %3069 = vmatprep.subr.mxu0 0.0
    %3070 = vmatpush1.msra.mxu0 0.0
    %3071 = vmatprep.subr.mxu0 0.0
    %3072 = vmatpush1.msra.mxu0 0.0
    %3073 = vmatprep.subr.mxu0 0.0
    %3074 = vmatpush1.msra.mxu0 0.0
    %3075 = vmatprep.subr.mxu0 0.0
    %3076 = vmatpush1.msra.mxu0 0.0
    %3077 = vmatprep.subr.mxu0 0.0
    %3078 = vmatpush1.msra.mxu0 0.0
    %3079 = vmatprep.subr.mxu0 0.0
    %3080 = vmatpush1.msra.mxu0 0.0
    %3081 = vmatprep.subr.mxu0 0.0
    %3082 = vmatpush1.msra.mxu0 0.0
    %3083 = vmatprep.mubr.f32.mxu0 0.0
    %3084 = vmatmul.mubr.f32.gmra.mrb[0].mxu0 %v3014
    %v3085 = vpop.f32.mrb[0].mxu0
    %v3086 = vadd.f32 %v3005, %v3085
    %v3087 = vpop.f32.mrb[0].mxu0
    %3088 = vmatprep.mubr.f32.mxu0 0.0
    %3089 = vmatmul.mubr.f32.gmra.mrb[0].mxu0 %v3017
    %v3090 = vpop.f32.mrb[0].mxu0
    %v3091 = vadd.f32 %v3010, %v3090
    %v3092 = vpop.f32.mrb[0].mxu0
    %3093 = vdwg.mxu0
    %v3094 = vlaneseq
    %v3095 = vshrl.u32 %v3094, 7
    %v3096 = vsub.s32 6, %v3095
    %v3097 = vrot.slane %v118, %v3096
    %v3098 = vadd.f32 %v3086, %v3097
    %v3099 = vadd.f32 %v3091, %v3097
    %v3100 = vadd.f32 %v1770, %v3098
    %v3101 = vadd.f32 %v1771, %v3099
    %v3102 = vsel %vm123, %v3100, 0.0
    %3103 = vadd.xlane.f32.xlu0 %v3102
    %v3104 = vpop.xlane.xlu0 %3103
    %v3105 = vsel %vm123, %v3101, 0.0
    %3106 = vadd.xlane.f32.xlu0 %v3105
    %v3107 = vpop.xlane.xlu0 %3106
    %v3108 = vmul.f32 %v3104, %v130
    %v3109 = vmul.f32 %v3107, %v130
    %v3110 = vsub.f32 %v3100, %v3108
    %v3111 = vsub.f32 %v3101, %v3109
    %v3112 = vmul.f32 %v3110, %v3110
    %v3113 = vmul.f32 %v3111, %v3111
    %v3114 = vsel %vm123, %v3112, 0.0
    %3115 = vadd.xlane.f32.xlu0 %v3114
    %v3116 = vpop.xlane.xlu0 %3115
    %v3117 = vsel %vm123, %v3113, 0.0
    %3118 = vadd.xlane.f32.xlu0 %v3117
    %v3119 = vpop.xlane.xlu0 %3118
    %v3120 = vmul.f32 %v3116, %v130
    %v3121 = vmul.f32 %v3119, %v130
    %v3122 = vadd.f32 %v3120, 1e-12
    %v3123 = vadd.f32 %v3121, 1e-12
    %v3124 = vrsqrt.pop %v3122
    %v3125 = vrsqrt.pop %v3123
    %v3126 = vmul.f32 %v3110, %v3124
    %v3127 = vmul.f32 %v3111, %v3125
    %v3128 = vlaneseq
    %v3129 = vshrl.u32 %v3128, 7
    %v3130 = vsub.s32 7, %v3129
    %v3131 = vrot.slane %v118, %v3130
    %v3132 = vmul.f32 %v3126, %v3131
    %v3133 = vmul.f32 %v3127, %v3131
    %v3134 = vlaneseq
    %v3135 = vshrl.u32 %v3134, 7
    %v3136 = vsub.s32 0, %v3135
    %v3137 = vrot.slane %v119, %v3136
    %v3138 = vadd.f32 %v3132, %v3137
    %v3139 = vadd.f32 %v3133, %v3137
    %s3140 = scalar_lea.vmem %s7, 32
    %v3141 = vld [vmem:[%s3140] sm:$0xff]
    %v3142 = vld [vmem:[%s3140 + $0x8] sm:$0xff]
    %v3143 = vld [vmem:[%s3140 + $0x10] sm:$0xff]
    %v3144 = vld [vmem:[%s3140 + $0x18] sm:$0xff]
    %v3145 = vlaneseq
    %v3146 = vshrl.u32 %v3145, 7
    %v3147 = vsub.s32 1, %v3146
    %v3148 = vrot.slane %v120, %v3147
    %v3150 = vsel %vm123, %v3138, 0
    %v3153 = vsel %vm123, %v3139, 0
    %3155 = vmatprep.subr.mxu0 0.0
    %3156 = vmatpush1.msra.mxu0 %v3141
    %3157 = vmatprep.subr.mxu0 0.0
    %3158 = vmatpush1.msra.mxu0 %v3142
    %3159 = vmatprep.subr.mxu0 0.0
    %3160 = vmatpush1.msra.mxu0 %v3143
    %3161 = vmatprep.subr.mxu0 0.0
    %3162 = vmatpush1.msra.mxu0 %v3144
    %3163 = vmatprep.subr.mxu0 0.0
    %3164 = vmatpush1.msra.mxu0 0.0
    %3165 = vmatprep.subr.mxu0 0.0
    %3166 = vmatpush1.msra.mxu0 0.0
    %3167 = vmatprep.subr.mxu0 0.0
    %3168 = vmatpush1.msra.mxu0 0.0
    %3169 = vmatprep.subr.mxu0 0.0
    %3170 = vmatpush1.msra.mxu0 0.0
    %3171 = vmatprep.subr.mxu0 0.0
    %3172 = vmatpush1.msra.mxu0 0.0
    %3173 = vmatprep.subr.mxu0 0.0
    %3174 = vmatpush1.msra.mxu0 0.0
    %3175 = vmatprep.subr.mxu0 0.0
    %3176 = vmatpush1.msra.mxu0 0.0
    %3177 = vmatprep.subr.mxu0 0.0
    %3178 = vmatpush1.msra.mxu0 0.0
    %3179 = vmatprep.subr.mxu0 0.0
    %3180 = vmatpush1.msra.mxu0 0.0
    %3181 = vmatprep.subr.mxu0 0.0
    %3182 = vmatpush1.msra.mxu0 0.0
    %3183 = vmatprep.subr.mxu0 0.0
    %3184 = vmatpush1.msra.mxu0 0.0
    %3185 = vmatprep.subr.mxu0 0.0
    %3186 = vmatpush1.msra.mxu0 0.0
    %3187 = vmatprep.subr.mxu0 0.0
    %3188 = vmatpush1.msra.mxu0 0.0
    %3189 = vmatprep.subr.mxu0 0.0
    %3190 = vmatpush1.msra.mxu0 0.0
    %3191 = vmatprep.subr.mxu0 0.0
    %3192 = vmatpush1.msra.mxu0 0.0
    %3193 = vmatprep.subr.mxu0 0.0
    %3194 = vmatpush1.msra.mxu0 0.0
    %3195 = vmatprep.subr.mxu0 0.0
    %3196 = vmatpush1.msra.mxu0 0.0
    %3197 = vmatprep.subr.mxu0 0.0
    %3198 = vmatpush1.msra.mxu0 0.0
    %3199 = vmatprep.subr.mxu0 0.0
    %3200 = vmatpush1.msra.mxu0 0.0
    %3201 = vmatprep.subr.mxu0 0.0
    %3202 = vmatpush1.msra.mxu0 0.0
    %3203 = vmatprep.subr.mxu0 0.0
    %3204 = vmatpush1.msra.mxu0 0.0
    %3205 = vmatprep.subr.mxu0 0.0
    %3206 = vmatpush1.msra.mxu0 0.0
    %3207 = vmatprep.subr.mxu0 0.0
    %3208 = vmatpush1.msra.mxu0 0.0
    %3209 = vmatprep.subr.mxu0 0.0
    %3210 = vmatpush1.msra.mxu0 0.0
    %3211 = vmatprep.subr.mxu0 0.0
    %3212 = vmatpush1.msra.mxu0 0.0
    %3213 = vmatprep.subr.mxu0 0.0
    %3214 = vmatpush1.msra.mxu0 0.0
    %3215 = vmatprep.subr.mxu0 0.0
    %3216 = vmatpush1.msra.mxu0 0.0
    %3217 = vmatprep.subr.mxu0 0.0
    %3218 = vmatpush1.msra.mxu0 0.0
    %3219 = vmatprep.mubr.f32.mxu0 0.0
    %3220 = vmatmul.mubr.f32.gmra.mrb[0].mxu0 %v3150
    %v3221 = vpop.f32.mrb[0].mxu0
    %v3222 = vadd.f32 %v3148, %v3221
    %v3223 = vpop.f32.mrb[0].mxu0
    %3224 = vmatprep.mubr.f32.mxu0 0.0
    %3225 = vmatmul.mubr.f32.gmra.mrb[0].mxu0 %v3153
    %v3226 = vpop.f32.mrb[0].mxu0
    %v3227 = vadd.f32 %v3148, %v3226
    %v3228 = vpop.f32.mrb[0].mxu0
    %3229 = vdwg.mxu0
    %v3230 = vmul.f32 %v3222, %v3222
    %v3231 = vmul.f32 %v3227, %v3227
    %v3232 = vmul.f32 %v3222, %v3230
    %v3233 = vmul.f32 %v3227, %v3231
    %v3234 = vmul.f32 %v3232, 0.044715
    %v3235 = vmul.f32 %v3233, 0.044715
    %v3236 = vadd.f32 %v3222, %v3234
    %v3237 = vadd.f32 %v3227, %v3235
    %v3238 = vmul.f32 %v3236, 0.7978846
    %v3239 = vmul.f32 %v3237, 0.7978846
    %v3240 = vtanh.pop %v3238
    %v3241 = vtanh.pop %v3239
    %v3242 = vadd.f32 %v3240, 1.0
    %v3243 = vadd.f32 %v3241, 1.0
    %v3244 = vmul.f32 %v3242, 0.5
    %v3245 = vmul.f32 %v3243, 0.5
    %v3246 = vmul.f32 %v3222, %v3244
    %v3247 = vmul.f32 %v3227, %v3245
    %s3248 = scalar_lea.vmem %s9, 64
    %v3249 = vld [vmem:[%s3248] sm:$0xff]
    %v3250 = vld [vmem:[%s3248 + $0x8] sm:$0xff]
    %v3251 = vld [vmem:[%s3248 + $0x10] sm:$0xff]
    %v3252 = vld [vmem:[%s3248 + $0x18] sm:$0xff]
    %v3253 = vld [vmem:[%s3248 + $0x20] sm:$0xff]
    %v3254 = vld [vmem:[%s3248 + $0x28] sm:$0xff]
    %v3255 = vld [vmem:[%s3248 + $0x30] sm:$0xff]
    %v3256 = vld [vmem:[%s3248 + $0x38] sm:$0xff]
    %v3257 = vlaneseq
    %v3258 = vshrl.u32 %v3257, 7
    %v3259 = vsub.s32 1, %v3258
    %v3260 = vrot.slane %v119, %v3259
    %v3262 = vsel %vm1650, %v3246, 0
    %v3265 = vsel %vm1650, %v3247, 0
    %3267 = vmatprep.subr.mxu0 0.0
    %3268 = vmatpush1.msra.mxu0 %v3249
    %3269 = vmatprep.subr.mxu0 0.0
    %3270 = vmatpush1.msra.mxu0 %v3250
    %3271 = vmatprep.subr.mxu0 0.0
    %3272 = vmatpush1.msra.mxu0 %v3251
    %3273 = vmatprep.subr.mxu0 0.0
    %3274 = vmatpush1.msra.mxu0 %v3252
    %3275 = vmatprep.subr.mxu0 0.0
    %3276 = vmatpush1.msra.mxu0 %v3253
    %3277 = vmatprep.subr.mxu0 0.0
    %3278 = vmatpush1.msra.mxu0 %v3254
    %3279 = vmatprep.subr.mxu0 0.0
    %3280 = vmatpush1.msra.mxu0 %v3255
    %3281 = vmatprep.subr.mxu0 0.0
    %3282 = vmatpush1.msra.mxu0 %v3256
    %3283 = vmatprep.subr.mxu0 0.0
    %3284 = vmatpush1.msra.mxu0 0.0
    %3285 = vmatprep.subr.mxu0 0.0
    %3286 = vmatpush1.msra.mxu0 0.0
    %3287 = vmatprep.subr.mxu0 0.0
    %3288 = vmatpush1.msra.mxu0 0.0
    %3289 = vmatprep.subr.mxu0 0.0
    %3290 = vmatpush1.msra.mxu0 0.0
    %3291 = vmatprep.subr.mxu0 0.0
    %3292 = vmatpush1.msra.mxu0 0.0
    %3293 = vmatprep.subr.mxu0 0.0
    %3294 = vmatpush1.msra.mxu0 0.0
    %3295 = vmatprep.subr.mxu0 0.0
    %3296 = vmatpush1.msra.mxu0 0.0
    %3297 = vmatprep.subr.mxu0 0.0
    %3298 = vmatpush1.msra.mxu0 0.0
    %3299 = vmatprep.subr.mxu0 0.0
    %3300 = vmatpush1.msra.mxu0 0.0
    %3301 = vmatprep.subr.mxu0 0.0
    %3302 = vmatpush1.msra.mxu0 0.0
    %3303 = vmatprep.subr.mxu0 0.0
    %3304 = vmatpush1.msra.mxu0 0.0
    %3305 = vmatprep.subr.mxu0 0.0
    %3306 = vmatpush1.msra.mxu0 0.0
    %3307 = vmatprep.subr.mxu0 0.0
    %3308 = vmatpush1.msra.mxu0 0.0
    %3309 = vmatprep.subr.mxu0 0.0
    %3310 = vmatpush1.msra.mxu0 0.0
    %3311 = vmatprep.subr.mxu0 0.0
    %3312 = vmatpush1.msra.mxu0 0.0
    %3313 = vmatprep.subr.mxu0 0.0
    %3314 = vmatpush1.msra.mxu0 0.0
    %3315 = vmatprep.subr.mxu0 0.0
    %3316 = vmatpush1.msra.mxu0 0.0
    %3317 = vmatprep.subr.mxu0 0.0
    %3318 = vmatpush1.msra.mxu0 0.0
    %3319 = vmatprep.subr.mxu0 0.0
    %3320 = vmatpush1.msra.mxu0 0.0
    %3321 = vmatprep.subr.mxu0 0.0
    %3322 = vmatpush1.msra.mxu0 0.0
    %3323 = vmatprep.subr.mxu0 0.0
    %3324 = vmatpush1.msra.mxu0 0.0
    %3325 = vmatprep.subr.mxu0 0.0
    %3326 = vmatpush1.msra.mxu0 0.0
    %3327 = vmatprep.subr.mxu0 0.0
    %3328 = vmatpush1.msra.mxu0 0.0
    %3329 = vmatprep.subr.mxu0 0.0
    %3330 = vmatpush1.msra.mxu0 0.0
    %3331 = vmatprep.mubr.f32.mxu0 0.0
    %3332 = vmatmul.mubr.f32.gmra.mrb[0].mxu0 %v3262
    %v3333 = vpop.f32.mrb[0].mxu0
    %v3334 = vadd.f32 %v3260, %v3333
    %v3335 = vpop.f32.mrb[0].mxu0
    %3336 = vmatprep.mubr.f32.mxu0 0.0
    %3337 = vmatmul.mubr.f32.gmra.mrb[0].mxu0 %v3265
    %v3338 = vpop.f32.mrb[0].mxu0
    %v3339 = vadd.f32 %v3260, %v3338
    %v3340 = vpop.f32.mrb[0].mxu0
    %3341 = vdwg.mxu0
    %v3342 = vadd.f32 %v3138, %v3334
    %v3343 = vadd.f32 %v3139, %v3339
    %v3344 = vsel %vm123, %v3342, 0.0
    %3345 = vadd.xlane.f32.xlu0 %v3344
    %v3346 = vpop.xlane.xlu0 %3345
    %v3347 = vsel %vm123, %v3343, 0.0
    %3348 = vadd.xlane.f32.xlu0 %v3347
    %v3349 = vpop.xlane.xlu0 %3348
    %v3350 = vmul.f32 %v3346, %v130
    %v3351 = vmul.f32 %v3349, %v130
    %v3352 = vsub.f32 %v3342, %v3350
    %v3353 = vsub.f32 %v3343, %v3351
    %v3354 = vmul.f32 %v3352, %v3352
    %v3355 = vmul.f32 %v3353, %v3353
    %v3356 = vsel %vm123, %v3354, 0.0
    %3357 = vadd.xlane.f32.xlu0 %v3356
    %v3358 = vpop.xlane.xlu0 %3357
    %v3359 = vsel %vm123, %v3355, 0.0
    %3360 = vadd.xlane.f32.xlu0 %v3359
    %v3361 = vpop.xlane.xlu0 %3360
    %v3362 = vmul.f32 %v3358, %v130
    %v3363 = vmul.f32 %v3361, %v130
    %v3364 = vadd.f32 %v3362, 1e-12
    %v3365 = vadd.f32 %v3363, 1e-12
    %v3366 = vrsqrt.pop %v3364
    %v3367 = vrsqrt.pop %v3365
    %v3368 = vmul.f32 %v3352, %v3366
    %v3369 = vmul.f32 %v3353, %v3367
    %v3370 = vlaneseq
    %v3371 = vshrl.u32 %v3370, 7
    %v3372 = vsub.s32 2, %v3371
    %v3373 = vrot.slane %v119, %v3372
    %v3374 = vmul.f32 %v3368, %v3373
    %v3375 = vmul.f32 %v3369, %v3373
    %v3376 = vlaneseq
    %v3377 = vshrl.u32 %v3376, 7
    %v3378 = vsub.s32 3, %v3377
    %v3379 = vrot.slane %v119, %v3378
    %v3380 = vadd.f32 %v3374, %v3379
    %v3381 = vadd.f32 %v3375, %v3379
    %v3382 = vld [vmem:[%s11] sm:$0xff]
    %v3383 = vld [vmem:[%s11 + $0x8] sm:$0xff]
    %v3384 = vld [vmem:[%s11 + $0x10] sm:$0xff]
    %v3385 = vld [vmem:[%s11 + $0x18] sm:$0xff]
    %v3386 = vlaneseq
    %v3387 = vshrl.u32 %v3386, 7
    %v3388 = vsub.s32 2, %v3387
    %v3389 = vrot.slane %v115, %v3388
    %v3392 = vrot.slane %v3381, 7
    %vm3393 = vcmask 1041409
    %v3394 = vsel %vm3393, %v3392, %v3380
    %v3395 = vsel %vm123, %v3394, 0
    %3397 = vmatprep.subr.mxu0 0.0
    %3398 = vmatpush1.msra.mxu0 %v3382
    %3399 = vmatprep.subr.mxu0 0.0
    %3400 = vmatpush1.msra.mxu0 %v3383
    %3401 = vmatprep.subr.mxu0 0.0
    %3402 = vmatpush1.msra.mxu0 %v3384
    %3403 = vmatprep.subr.mxu0 0.0
    %3404 = vmatpush1.msra.mxu0 %v3385
    %3405 = vmatprep.subr.mxu0 0.0
    %3406 = vmatpush1.msra.mxu0 0.0
    %3407 = vmatprep.subr.mxu0 0.0
    %3408 = vmatpush1.msra.mxu0 0.0
    %3409 = vmatprep.subr.mxu0 0.0
    %3410 = vmatpush1.msra.mxu0 0.0
    %3411 = vmatprep.subr.mxu0 0.0
    %3412 = vmatpush1.msra.mxu0 0.0
    %3413 = vmatprep.subr.mxu0 0.0
    %3414 = vmatpush1.msra.mxu0 0.0
    %3415 = vmatprep.subr.mxu0 0.0
    %3416 = vmatpush1.msra.mxu0 0.0
    %3417 = vmatprep.subr.mxu0 0.0
    %3418 = vmatpush1.msra.mxu0 0.0
    %3419 = vmatprep.subr.mxu0 0.0
    %3420 = vmatpush1.msra.mxu0 0.0
    %3421 = vmatprep.subr.mxu0 0.0
    %3422 = vmatpush1.msra.mxu0 0.0
    %3423 = vmatprep.subr.mxu0 0.0
    %3424 = vmatpush1.msra.mxu0 0.0
    %3425 = vmatprep.subr.mxu0 0.0
    %3426 = vmatpush1.msra.mxu0 0.0
    %3427 = vmatprep.subr.mxu0 0.0
    %3428 = vmatpush1.msra.mxu0 0.0
    %3429 = vmatprep.subr.mxu0 0.0
    %3430 = vmatpush1.msra.mxu0 0.0
    %3431 = vmatprep.subr.mxu0 0.0
    %3432 = vmatpush1.msra.mxu0 0.0
    %3433 = vmatprep.subr.mxu0 0.0
    %3434 = vmatpush1.msra.mxu0 0.0
    %3435 = vmatprep.subr.mxu0 0.0
    %3436 = vmatpush1.msra.mxu0 0.0
    %3437 = vmatprep.subr.mxu0 0.0
    %3438 = vmatpush1.msra.mxu0 0.0
    %3439 = vmatprep.subr.mxu0 0.0
    %3440 = vmatpush1.msra.mxu0 0.0
    %3441 = vmatprep.subr.mxu0 0.0
    %3442 = vmatpush1.msra.mxu0 0.0
    %3443 = vmatprep.subr.mxu0 0.0
    %3444 = vmatpush1.msra.mxu0 0.0
    %3445 = vmatprep.subr.mxu0 0.0
    %3446 = vmatpush1.msra.mxu0 0.0
    %3447 = vmatprep.subr.mxu0 0.0
    %3448 = vmatpush1.msra.mxu0 0.0
    %3449 = vmatprep.subr.mxu0 0.0
    %3450 = vmatpush1.msra.mxu0 0.0
    %3451 = vmatprep.subr.mxu0 0.0
    %3452 = vmatpush1.msra.mxu0 0.0
    %3453 = vmatprep.subr.mxu0 0.0
    %3454 = vmatpush1.msra.mxu0 0.0
    %3455 = vmatprep.subr.mxu0 0.0
    %3456 = vmatpush1.msra.mxu0 0.0
    %3457 = vmatprep.subr.mxu0 0.0
    %3458 = vmatpush1.msra.mxu0 0.0
    %3459 = vmatprep.subr.mxu0 0.0
    %3460 = vmatpush1.msra.mxu0 0.0
    %3461 = vmatprep.mubr.f32.mxu0 0.0
    %3462 = vmatmul.mubr.f32.gmra.mrb[0].mxu0 %v3395
    %v3463 = vpop.f32.mrb[0].mxu0
    %v3464 = vadd.f32 %v3389, %v3463
    %v3465 = vpop.f32.mrb[0].mxu0
    %3466 = vdwg.mxu0
    %v3467 = vtanh.pop %v3464
    %v3468 = vld [vmem:[%s12] sm:$0xff]
    %v3469 = vld [vmem:[%s12 + $0x8] sm:$0xff]
    %v3470 = vld [vmem:[%s12 + $0x10] sm:$0xff]
    %v3471 = vld [vmem:[%s12 + $0x18] sm:$0xff]
    %v3472 = vld [vmem:[#allocation2] sm:$0x1]
    %v3474 = vlaneseq
    %v3475 = vshrl.u32 %v3474, 7
    %v3476 = vsub.s32 0, %v3475
    %v3477 = vrot.slane %v3472, %v3476
    %v3480 = vsel %vm123, %v3467, 0
    %3482 = vmatprep.subr.mxu0 0.0
    %3483 = vmatpush1.msra.mxu0 %v3468
    %3484 = vmatprep.subr.mxu0 0.0
    %3485 = vmatpush1.msra.mxu0 %v3469
    %3486 = vmatprep.subr.mxu0 0.0
    %3487 = vmatpush1.msra.mxu0 %v3470
    %3488 = vmatprep.subr.mxu0 0.0
    %3489 = vmatpush1.msra.mxu0 %v3471
    %3490 = vmatprep.subr.mxu0 0.0
    %3491 = vmatpush1.msra.mxu0 0.0
    %3492 = vmatprep.subr.mxu0 0.0
    %3493 = vmatpush1.msra.mxu0 0.0
    %3494 = vmatprep.subr.mxu0 0.0
    %3495 = vmatpush1.msra.mxu0 0.0
    %3496 = vmatprep.subr.mxu0 0.0
    %3497 = vmatpush1.msra.mxu0 0.0
    %3498 = vmatprep.subr.mxu0 0.0
    %3499 = vmatpush1.msra.mxu0 0.0
    %3500 = vmatprep.subr.mxu0 0.0
    %3501 = vmatpush1.msra.mxu0 0.0
    %3502 = vmatprep.subr.mxu0 0.0
    %3503 = vmatpush1.msra.mxu0 0.0
    %3504 = vmatprep.subr.mxu0 0.0
    %3505 = vmatpush1.msra.mxu0 0.0
    %3506 = vmatprep.subr.mxu0 0.0
    %3507 = vmatpush1.msra.mxu0 0.0
    %3508 = vmatprep.subr.mxu0 0.0
    %3509 = vmatpush1.msra.mxu0 0.0
    %3510 = vmatprep.subr.mxu0 0.0
    %3511 = vmatpush1.msra.mxu0 0.0
    %3512 = vmatprep.subr.mxu0 0.0
    %3513 = vmatpush1.msra.mxu0 0.0
    %3514 = vmatprep.subr.mxu0 0.0
    %3515 = vmatpush1.msra.mxu0 0.0
    %3516 = vmatprep.subr.mxu0 0.0
    %3517 = vmatpush1.msra.mxu0 0.0
    %3518 = vmatprep.subr.mxu0 0.0
    %3519 = vmatpush1.msra.mxu0 0.0
    %3520 = vmatprep.subr.mxu0 0.0
    %3521 = vmatpush1.msra.mxu0 0.0
    %3522 = vmatprep.subr.mxu0 0.0
    %3523 = vmatpush1.msra.mxu0 0.0
    %3524 = vmatprep.subr.mxu0 0.0
    %3525 = vmatpush1.msra.mxu0 0.0
    %3526 = vmatprep.subr.mxu0 0.0
    %3527 = vmatpush1.msra.mxu0 0.0
    %3528 = vmatprep.subr.mxu0 0.0
    %3529 = vmatpush1.msra.mxu0 0.0
    %3530 = vmatprep.subr.mxu0 0.0
    %3531 = vmatpush1.msra.mxu0 0.0
    %3532 = vmatprep.subr.mxu0 0.0
    %3533 = vmatpush1.msra.mxu0 0.0
    %3534 = vmatprep.subr.mxu0 0.0
    %3535 = vmatpush1.msra.mxu0 0.0
    %3536 = vmatprep.subr.mxu0 0.0
    %3537 = vmatpush1.msra.mxu0 0.0
    %3538 = vmatprep.subr.mxu0 0.0
    %3539 = vmatpush1.msra.mxu0 0.0
    %3540 = vmatprep.subr.mxu0 0.0
    %3541 = vmatpush1.msra.mxu0 0.0
    %3542 = vmatprep.subr.mxu0 0.0
    %3543 = vmatpush1.msra.mxu0 0.0
    %3544 = vmatprep.subr.mxu0 0.0
    %3545 = vmatpush1.msra.mxu0 0.0
    %3546 = vmatprep.mubr.f32.mxu0 0.0
    %3547 = vmatmul.mubr.f32.gmra.mrb[0].mxu0 %v3480
    %v3548 = vpop.f32.mrb[0].mxu0
    %v3549 = vadd.f32 %v3477, %v3548
    %v3550 = vpop.f32.mrb[0].mxu0
    %3551 = vdwg.mxu0
    %vm3552 = vcmask 1024
    %3553 = vst.msk [vmem:[%s14] sm:$0x3] %vm3552, %v3549
    %v3554 = vld [vmem:[%s1] sm:$0x3]
    %v3555 = vmax.f32 %v3549, 0.0
    %v3556 = vmul.f32 %v3549, %v3554
    %v3557 = vsub.f32 %v3555, %v3556
    %v3558 = vand.u32 2147483647, %v3549
    %v3559 = vsub.f32 0.0, %v3558
    %v3560 = vmul.f32 %v3559, 1.442695
    %v3561 = vpow.pop %v3560
    %v3562 = vadd.f32 %v3561, 1.0
    %v3563 = vlog2.pop %v3562
    %v3564 = vmul.f32 %v3563, 0.6931472
    %v3565 = vmul.f32 -0.5, %v3561
    %v3566 = vadd.f32 %v3565, 1.0
    %v3567 = vmul.f32 %v3566, %v3561
    %v3568 = vand.u32 2147483647, %v3561
    %vm3569 = vcmp.lt.f32.partialorder %v3568, 0.0004427343
    %v3570 = vsel %vm3569, %v3567, %v3564
    %v3571 = vadd.f32 %v3557, %v3570
    %v3572 = vsel %vm3552, %v3571, 0.0
    %3573 = vadd.xlane.f32.xlu0 %v3572
    %v3574 = vpop.xlane.xlu0 %3573
    %v3575 = vrot.slane %v3574, 4
    %v3576 = vadd.f32 %v3574, %v3575
    %v3577 = vrot.slane %v3576, 2
    %v3578 = vadd.f32 %v3576, %v3577
    %v3579 = vrot.slane %v3578, 1
    %v3580 = vadd.f32 %v3578, %v3579
    %s3581 = vtos %v3580
    %v3582 = vstv %s3581
    %v3583 = vrcp.pop 2.0
    %v3584 = vmul.f32 %v3582, %v3583
    %v3585 = vld [vmem:[#allocation3] sm:$0x3]
    %v3586 = vcvt.s32.f32 %v3585
    %vm3587 = vcmask 58368
    %v3588 = vsel %vm3587, %v3586, 0.0
    %3589 = vadd.xlane.f32.xlu0 %v3588
    %v3590 = vpop.xlane.xlu0 %3589
    %v3591 = vsub.f32 %v3549, %v3590
    %v3592 = vadd.f32 %v3591, %v3590
    %v3593 = vmax.f32 %v3592, 0.0
    %v3594 = vmul.f32 %v3592, %v3554
    %v3595 = vsub.f32 %v3593, %v3594
    %v3596 = vand.u32 2147483647, %v3592
    %v3597 = vsub.f32 0.0, %v3596
    %v3598 = vmul.f32 %v3597, 1.442695
    %v3599 = vpow.pop %v3598
    %v3600 = vadd.f32 %v3599, 1.0
    %v3601 = vlog2.pop %v3600
    %v3602 = vmul.f32 %v3601, 0.6931472
    %v3603 = vmul.f32 -0.5, %v3599
    %v3604 = vadd.f32 %v3603, 1.0
    %v3605 = vmul.f32 %v3604, %v3599
    %v3606 = vand.u32 2147483647, %v3599
    %vm3607 = vcmp.lt.f32.partialorder %v3606, 0.0004427343
    %v3608 = vsel %vm3607, %v3605, %v3602
    %v3609 = vadd.f32 %v3595, %v3608
    %v3610 = vsel %vm3552, %v3609, 0.0
    %3611 = vadd.xlane.f32.xlu0 %v3610
    %v3612 = vpop.xlane.xlu0 %3611
    %v3613 = vrot.slane %v3612, 4
    %v3614 = vadd.f32 %v3612, %v3613
    %v3615 = vrot.slane %v3614, 2
    %v3616 = vadd.f32 %v3614, %v3615
    %v3617 = vrot.slane %v3616, 1
    %v3618 = vadd.f32 %v3616, %v3617
    %s3619 = vtos %v3618
    %v3620 = vstv %s3619
    %v3621 = vmul.f32 %v3620, %v3583
    %v3622 = vsel %vm3552, %v3549, 0.0
    %3623 = vadd.xlane.f32.xlu0 %v3622
    %v3624 = vpop.xlane.xlu0 %3623
    %v3625 = vrot.slane %v3624, 4
    %v3626 = vadd.f32 %v3624, %v3625
    %v3627 = vrot.slane %v3626, 2
    %v3628 = vadd.f32 %v3626, %v3627
    %v3629 = vrot.slane %v3628, 1
    %v3630 = vadd.f32 %v3628, %v3629
    %s3631 = vtos %v3630
    %v3632 = vstv %s3631
    %v3633 = vmul.f32 %v3632, %v3583
    %v3634 = vlaneseq
    %v3635 = vand.u32 %v3634, 127
    %vm3636 = vcmp.eq.s32.totalorder %v3635, 0
    %vm3637 = vcmp.eq.s32.totalorder %v3635, 1
    %v3638 = vsel %vm3637, %v3621, %v3633
    %v3639 = vsel %vm3636, %v3584, %v3638
    %vm3640 = vcmask 16384
    %3641 = vst.msk [vmem:[%s15] sm:$0x1] %vm3640, %v3639
    // Predicated region
    $region78: #{_lambda_.1} parent=1 // pred_check
      _
    $region79: #{_lambda_.1} parent=1 // pred_check_branch
      %3643 = sbr.rel (0) target = $region81
    $region80: #{_lambda_.1} parent=1 // pred_region
      _
    $region81: #{_lambda_.1} parent=1 // pred_fallthru
      _
    // Predicated region
    $region82: #{_lambda_.1} parent=1 // pred_check
      _
    $region83: #{_lambda_.1} parent=1 // pred_check_branch
      %3645 = sbr.rel (0) target = $region85
    $region84: #{_lambda_.1} parent=1 // pred_region
      _
    $region85: #{_lambda_.1} parent=1 // pred_fallthru
      _
    // Predicated region
    $region86: #{_lambda_.1} parent=1 // pred_check
      _
    $region87: #{_lambda_.1} parent=1 // pred_check_branch
      %3647 = sbr.rel (0) target = $region89
    $region88: #{_lambda_.1} parent=1 // pred_region
      _
    $region89: #{_lambda_.1} parent=1 // pred_fallthru
      _
    // Predicated region
    $region90: #{_lambda_.1} parent=1 // pred_check
      _
    $region91: #{_lambda_.1} parent=1 // pred_check_branch
      %3649 = sbr.rel (0) target = $region93
    $region92: #{_lambda_.1} parent=1 // pred_region
      _
    $region93: #{_lambda_.1} parent=1 // pred_fallthru
      _
    %3650 = vsyncpa [#allocation4], 1
    %3651 = vsyncpa [#allocation6], 1
    %3652 = vsyncpa [#allocation9], 1

</llo_original>
